<compile_context>
chip_gen: v6e
topology: v6e:2x2x1
jax: 0.10.0
libtpu: 0.0.40
codegen_flags: <defaults>
</compile_context>

<pallas_src>
import functools

import jax
import jax.numpy as jnp
from jax.experimental import pallas as pl
from jax.experimental.pallas import tpu as pltpu


LANE = 128                      # lane-dense padding for HBM-resident outputs
VMEM_LIMIT = 48 * 1024 * 1024   # > default scoped limit on v5e/v6e/v7x, < v7x physical


# ----------------------------------------------------------------------------
# Kernel 1: utterance encoder
# ----------------------------------------------------------------------------

def _encoder_kernel(x_ref, mf_ref, mr_ref, h0_ref, c0_ref,
                    wenc_ref, benc_ref, wih_ref, bih_ref, whh_ref,
                    wdec_ref, bdec_ref, out_ref):
    l, bct, ed = x_ref.shape
    g8 = wih_ref.shape[1]                  # 8 * hh
    hh = g8 // 8
    hh2 = 2 * hh

    # (1) input_layer_encoder + tanh: one big MXU matmul (bf16 in, f32 acc).
    x = x_ref[...].reshape(l * bct, ed).astype(jnp.bfloat16)
    h1 = jnp.tanh(
        jnp.dot(x, wenc_ref[...], preferred_element_type=jnp.float32)
        + benc_ref[...])                                      # (l*bct, He)

    # (2) input->gate projection, BOTH directions, all timesteps, time-major.
    gx = (jnp.dot(h1.astype(jnp.bfloat16), wih_ref[...],
                  preferred_element_type=jnp.float32)
          + bih_ref[...]).reshape(l, bct, g8)                 # (l, bct, 8hh)

    # (3) token mask, broadcast ONCE outside the loop:
    #     mfull[t] = [ m(t) over fwd half | m(l-1-t) over rev half ]
    mfull = jnp.concatenate(
        [jnp.broadcast_to(mf_ref[...], (l, bct, hh)),
         jnp.broadcast_to(mr_ref[...], (l, bct, hh))], axis=-1)

    whh = whh_ref[...]                    # (2hh, 8hh) block-diagonal, f32
    h = h0_ref[...]                       # (bct, 2hh) = [h_f | h_r]
    cst = c0_ref[...]                     # (bct, 2hh) = [c_f | c_r]
    acc = jnp.zeros((bct, hh2), jnp.float32)

    # (4) recurrent loop: ONE matmul + one sigmoid + two tanh per step.
    # TODO(synk): for large l switch to lax.fori_loop carrying (h, cst, acc)
    # to bound vreg live ranges; full unroll is best for tiny l like the demo.
    for t in range(l):
        g = gx[t] + jnp.dot(h, whh, preferred_element_type=jnp.float32)
        sig = jax.nn.sigmoid(g[:, :6 * hh])       # [i_f i_r | f_f f_r | o_f o_r]
        tnh = jnp.tanh(g[:, 6 * hh:])             # [g_f g_r]
        cst = sig[:, hh2:2 * hh2] * cst + sig[:, :hh2] * tnh
        h = sig[:, 2 * hh2:3 * hh2] * jnp.tanh(cst)
        acc = acc + h * mfull[t]                  # fused (out * mask).sum(1)

    # (5) dropout(rate=0) == identity; input_layer + tanh, padded to LANE
    #     (padded columns are tanh(0) = 0) -> dense (8,128) store.
    z = jnp.tanh(
        jnp.dot(acc, wdec_ref[...], preferred_element_type=jnp.float32)
        + bdec_ref[...])
    out_ref[...] = z


def _const_spec(arr):
    nd = arr.ndim
    return pl.BlockSpec(arr.shape, lambda i, _nd=nd: (0,) * _nd)


def encoder_stage(params, x_tm, mf_tm, mr_tm, h0, c0, *, bc_block):
    """x_tm: (l, bc_pad, ed) time-major; masks (l, bc_pad, 1); h0/c0 (bc_pad, 2hh)."""
    l, bc_pad, ed = x_tm.shape
    hh2 = params["enc_lstm"]["w_hh"].shape[0]
    grid = (bc_pad // bc_block,)

    weights = (params["enc_in"]["w_t"], params["enc_in"]["b"],
               params["enc_lstm"]["w_ih"], params["enc_lstm"]["b"],
               params["enc_lstm"]["w_hh"],
               params["dec_in"]["w_t"], params["dec_in"]["b"])

    return pl.pallas_call(
        _encoder_kernel,
        out_shape=jax.ShapeDtypeStruct((bc_pad, LANE), jnp.float32),
        grid_spec=pltpu.PrefetchScalarGridSpec(
            num_scalar_prefetch=0,
            grid=grid,
            in_specs=[
                pl.BlockSpec((l, bc_block, ed), lambda i: (0, i, 0)),
                pl.BlockSpec((l, bc_block, 1), lambda i: (0, i, 0)),
                pl.BlockSpec((l, bc_block, 1), lambda i: (0, i, 0)),
                pl.BlockSpec((bc_block, hh2), lambda i: (i, 0)),
                pl.BlockSpec((bc_block, hh2), lambda i: (i, 0)),
            ] + [_const_spec(w) for w in weights],
            out_specs=pl.BlockSpec((bc_block, LANE), lambda i: (i, 0)),
        ),
        compiler_params=pltpu.CompilerParams(
            dimension_semantics=("parallel",),
            vmem_limit_bytes=VMEM_LIMIT),
    )(x_tm, mf_tm, mr_tm, h0, c0, *weights)


# ----------------------------------------------------------------------------
# Kernel 2: dialogue decoder + hidden2tag
# ----------------------------------------------------------------------------

def _decoder_kernel(z_ref, h0_ref, c0_ref, wih_ref, bih_ref, whh_ref,
                    wtf_ref, wtr_ref, btag_ref, out_ref):
    c, b8, lane = z_ref.shape
    g8 = wih_ref.shape[1]
    hh = g8 // 8
    hh2 = 2 * hh

    # input->gate projection for both directions, all positions, time-major.
    z = z_ref[...].reshape(c * b8, lane).astype(jnp.bfloat16)
    gx = (jnp.dot(z, wih_ref[...], preferred_element_type=jnp.float32)
          + bih_ref[...]).reshape(c, b8, g8)

    whh = whh_ref[...]
    wtf = wtf_ref[...]                    # hidden2tag, rev rows zeroed
    wtr = wtr_ref[...]                    # hidden2tag, fwd rows zeroed
    h = h0_ref[...]                       # (b8, 2hh)
    cst = c0_ref[...]

    # initialize output with the tag bias; per-step matmuls accumulate into it.
    out_ref[...] = jnp.broadcast_to(btag_ref[...].reshape(1, 1, lane),
                                    (c, b8, lane))

    for t in range(c):
        tr = c - 1 - t
        g = gx[t] + jnp.dot(h, whh, preferred_element_type=jnp.float32)
        sig = jax.nn.sigmoid(g[:, :6 * hh])
        tnh = jnp.tanh(g[:, 6 * hh:])
        cst = sig[:, hh2:2 * hh2] * cst + sig[:, :hh2] * tnh
        h = sig[:, 2 * hh2:3 * hh2] * jnp.tanh(cst)
        # dropout(rate=0) == identity; accumulate hidden2tag contributions
        # directly (no hs_f/hs_r lists, no concatenate tree).
        out_ref[t] = out_ref[t] + jnp.dot(h, wtf,
                                          preferred_element_type=jnp.float32)
        out_ref[tr] = out_ref[tr] + jnp.dot(h, wtr,
                                            preferred_element_type=jnp.float32)


def decoder_stage(params, z_tm, h0, c0):
    """z_tm: (c, b8, LANE) time-major; h0/c0: (b8, 2hh) -> (c, b8, LANE)."""
    c, b8, _ = z_tm.shape
    vmem_spec = pl.BlockSpec(memory_space=pltpu.MemorySpace.VMEM)
    return pl.pallas_call(
        _decoder_kernel,
        out_shape=jax.ShapeDtypeStruct((c, b8, LANE), jnp.float32),
        in_specs=[vmem_spec] * 9,
        out_specs=pl.BlockSpec(memory_space=pltpu.MemorySpace.VMEM),
        compiler_params=pltpu.CompilerParams(vmem_limit_bytes=VMEM_LIMIT),
    )(z_tm, h0, c0,
      params["dec_lstm"]["w_ih"], params["dec_lstm"]["b"],
      params["dec_lstm"]["w_hh"],
      params["hidden2tag"]["w_f"], params["hidden2tag"]["w_r"],
      params["hidden2tag"]["b"])


# ----------------------------------------------------------------------------
# Parameter initialization (PyTorch-compatible shapes, fused / reordered /
# padded layouts for the kernels)
# ----------------------------------------------------------------------------

def _uniform(key, shape, scale):
    return jax.random.uniform(key, shape, jnp.float32, -scale, scale)


def _init_linear(key, in_dim, out_dim, pad_out=None, dtype=jnp.float32):
    k1, k2 = jax.random.split(key)
    s = 1.0 / (in_dim ** 0.5)
    w = _uniform(k1, (out_dim, in_dim), s)        # torch layout (out, in)
    b = _uniform(k2, (out_dim,), s)
    w_t, b = w.T, b[None, :]
    if pad_out is not None and pad_out > out_dim:
        w_t = jnp.pad(w_t, ((0, 0), (0, pad_out - out_dim)))
        b = jnp.pad(b, ((0, 0), (0, pad_out - out_dim)))
    return {"w_t": w_t.astype(dtype), "b": b}


def _sig_tanh_order(w):
    """Reorder gate column blocks from torch [i,f,g,o] to [i,f,o,g]."""
    H = w.shape[1] // 4
    return jnp.concatenate([w[:, :H], w[:, H:2 * H],
                            w[:, 3 * H:4 * H], w[:, 2 * H:3 * H]], axis=1)


def _interleave_dirs(wf, wr, H):
    """Interleave fwd/rev per gate block: [i_f i_r | f_f f_r | o_f o_r | g_f g_r]."""
    blocks = []
    for j in range(4):
        blocks.append(wf[:, j * H:(j + 1) * H])
        blocks.append(wr[:, j * H:(j + 1) * H])
    return jnp.concatenate(blocks, axis=1)


def _init_bilstm(key, in_dim, hidden, pad_in=None):
    """Bidirectional LSTM params, fused for the Pallas kernels:
         w_ih : (pad_in or in_dim, 8*hidden) bf16, gate cols reordered+interleaved
         b    : (1, 8*hidden) f32, b_ih + b_hh per direction (same column order)
         w_hh : (2*hidden, 8*hidden) f32 block-diagonal recurrent weight
    """
    kf, kr = jax.random.split(key)
    s = 1.0 / (hidden ** 0.5)

    def one_dir(k):
        k0, k1, k2, k3 = jax.random.split(k, 4)
        w_ih = _uniform(k0, (4 * hidden, in_dim), s)     # torch (4H, In)
        w_hh = _uniform(k1, (4 * hidden, hidden), s)     # torch (4H, H)
        b_ih = _uniform(k2, (4 * hidden,), s)
        b_hh = _uniform(k3, (4 * hidden,), s)
        return (_sig_tanh_order(w_ih.T),                 # (In, 4H)
                _sig_tanh_order(w_hh.T),                 # (H, 4H)
                _sig_tanh_order((b_ih + b_hh)[None, :])) # (1, 4H)

    wif, whf, bf = one_dir(kf)
    wir, whr, br = one_dir(kr)
    H = hidden
    w_ih = _interleave_dirs(wif, wir, H)                 # (In, 8H)
    b = _interleave_dirs(bf, br, H)                      # (1, 8H)

    # block-diagonal recurrent weight: rows 0:H act on h_f, rows H:2H on h_r.
    whh = jnp.zeros((2 * H, 8 * H), jnp.float32)
    for j in range(4):
        whh = whh.at[0:H, (2 * j) * H:(2 * j + 1) * H].set(whf[:, j * H:(j + 1) * H])
        whh = whh.at[H:2 * H, (2 * j + 1) * H:(2 * j + 2) * H].set(whr[:, j * H:(j + 1) * H])

    if pad_in is not None and pad_in > in_dim:
        w_ih = jnp.pad(w_ih, ((0, pad_in - in_dim), (0, 0)))
    return {"w_ih": w_ih.astype(jnp.bfloat16), "b": b, "w_hh": whh}


def _init_tag_head(key, hidden_dec, num_tag, pad_out):
    k1, k2 = jax.random.split(key)
    s = 1.0 / (hidden_dec ** 0.5)
    w = _uniform(k1, (num_tag, hidden_dec), s)           # torch (out, in)
    b = _uniform(k2, (num_tag,), s)
    w_t = jnp.pad(w.T, ((0, 0), (0, pad_out - num_tag))) # (Hd, LANE)
    b = jnp.pad(b[None, :], ((0, 0), (0, pad_out - num_tag)))
    hh = hidden_dec // 2
    w_f = w_t.at[hh:, :].set(0.0)     # only fwd-half rows active
    w_r = w_t.at[:hh, :].set(0.0)     # only rev-half rows active
    return {"w_f": w_f, "w_r": w_r, "b": b}


def init_params(key, num_tag, embedding_dim, hidden_enc, hidden_dec):
    ks = jax.random.split(key, 5)
    return {
        "enc_in": _init_linear(ks[0], embedding_dim, hidden_enc,
                               dtype=jnp.bfloat16),
        "enc_lstm": _init_bilstm(ks[1], hidden_enc, hidden_enc // 2),
        "dec_in": _init_linear(ks[2], hidden_enc, hidden_dec, pad_out=LANE),
        "dec_lstm": _init_bilstm(ks[3], hidden_dec, hidden_dec // 2,
                                 pad_in=LANE),
        "hidden2tag": _init_tag_head(ks[4], hidden_dec, num_tag, LANE),
    }


# ----------------------------------------------------------------------------
# Forward pass (training-mode semantics of BiLSTM_CRF.forward)
# ----------------------------------------------------------------------------

def _round_up(n, m):
    return -(-n // m) * m


def bilstm_crf_forward(params, utterances, masks, utt_mask,
                       hidden_enc, hidden_dec, *, num_tag, bc_block=None):
    b, c, l, ed = utterances.shape
    bc = b * c
    hh2_e = params["enc_lstm"]["w_hh"].shape[0]          # 2 * hh_enc
    hh2_d = params["dec_lstm"]["w_hh"].shape[0]          # 2 * hh_dec

    # --- stage 1 inputs: pad bc to a multiple of 8, go time-major ------------
    bc_pad = _round_up(bc, 8)
    pad = bc_pad - bc

    x = utterances.reshape(bc, l, ed).astype(jnp.float32)
    m = masks.reshape(bc, l).astype(jnp.float32)
    h0e = jnp.transpose(hidden_enc[0], (1, 0, 2)).reshape(bc, hh2_e)
    c0e = jnp.transpose(hidden_enc[1], (1, 0, 2)).reshape(bc, hh2_e)
    if pad:
        x = jnp.pad(x, ((0, pad), (0, 0), (0, 0)))
        m = jnp.pad(m, ((0, pad), (0, 0)))
        h0e = jnp.pad(h0e, ((0, pad), (0, 0)))
        c0e = jnp.pad(c0e, ((0, pad), (0, 0)))

    x_tm = jnp.transpose(x, (1, 0, 2))                   # (l, bc_pad, ed)
    m_tm = jnp.transpose(m, (1, 0))[:, :, None]          # (l, bc_pad, 1)
    mr_tm = m_tm[::-1]                                   # time-reversed mask

    # tile size: multiple of 8 rows; prefer an even grid >= 2 so "parallel"
    # can split across both v7x TensorCores (no-op on single-TC v5e/v6e).
    if bc_block is None or bc_pad % bc_block or bc_block % 8:
        if bc_pad >= 16 and (bc_pad // 2) % 8 == 0:
            bc_block = bc_pad // 2
        else:
            bc_block = bc_pad

    z = encoder_stage(params, x_tm, m_tm, mr_tm, h0e, c0e, bc_block=bc_block)
    z = z[:bc].reshape(b, c, LANE)

    # --- stage 2 inputs: time-major over c, batch padded to >= 8 rows --------
    b8 = max(8, _round_up(b, 8))
    z_tm = jnp.transpose(z, (1, 0, 2))                   # (c, b, LANE)
    h0d = jnp.transpose(hidden_dec[0], (1, 0, 2)).reshape(b, hh2_d)
    c0d = jnp.transpose(hidden_dec[1], (1, 0, 2)).reshape(b, hh2_d)
    if b8 > b:
        z_tm = jnp.pad(z_tm, ((0, 0), (0, b8 - b), (0, 0)))
        h0d = jnp.pad(h0d, ((0, b8 - b), (0, 0)))
        c0d = jnp.pad(c0d, ((0, b8 - b), (0, 0)))

    y = decoder_stage(params, z_tm, h0d, c0d)            # (c, b8, LANE)
    utt_vecs = jnp.transpose(y[:, :b, :num_tag], (1, 0, 2))

    # training-mode return: (emissions, crf mask)
    # TODO(synk): CRF log-partition (loss) and Viterbi decode (eval path,
    # self.crf.decode) are sequential DPs with backtracking; not ported here.
    return utt_vecs, utt_mask


# ----------------------------------------------------------------------------
# Demo
# ----------------------------------------------------------------------------

if __name__ == "__main__":
    b, c, l = 2, 6, 8
    embedding_dim = 32
    hidden_dim_enc = 32
    hidden_dim_dec = 32
    num_tag = 5

    key = jax.random.PRNGKey(0)
    k_par, k_utt, k_msk, k_he, k_ce, k_hd, k_cd = jax.random.split(key, 7)

    params = init_params(k_par, num_tag, embedding_dim,
                         hidden_dim_enc, hidden_dim_dec)

    utterances = jax.random.normal(k_utt, (b, c, l, embedding_dim), jnp.float32)
    masks = (jax.random.uniform(k_msk, (b, c, l)) > 0.2).astype(jnp.float32)
    utt_mask = jnp.ones((b, c), dtype=jnp.uint8)

    # init_hidden: torch.randn(2 * num_layers, batch, hidden // 2)
    hidden_enc = (
        jax.random.normal(k_he, (2, b * c, hidden_dim_enc // 2), jnp.float32),
        jax.random.normal(k_ce, (2, b * c, hidden_dim_enc // 2), jnp.float32),
    )
    hidden_dec = (
        jax.random.normal(k_hd, (2, b, hidden_dim_dec // 2), jnp.float32),
        jax.random.normal(k_cd, (2, b, hidden_dim_dec // 2), jnp.float32),
    )

    fwd = jax.jit(functools.partial(bilstm_crf_forward, num_tag=num_tag))

    utt_vecs, out_mask = fwd(params, utterances, masks, utt_mask,
                             hidden_enc, hidden_dec)
    jax.block_until_ready(utt_vecs)

    assert utt_vecs.shape == (b, c, num_tag)
    assert out_mask.shape == (b, c)
    assert bool(jnp.all(jnp.isfinite(utt_vecs)))
    print("KERNEL_OK")
</pallas_src>

<mosaic_0001>
module attributes {stable_mosaic.version = 11 : i64} {
  func.func @_encoder_kernel(%arg0: i32, %arg1: memref<8x8x32xf32, #tpu.memory_space<vmem>>, %arg2: memref<8x8x1xf32, #tpu.memory_space<vmem>>, %arg3: memref<8x8x1xf32, #tpu.memory_space<vmem>>, %arg4: memref<8x32xf32, #tpu.memory_space<vmem>>, %arg5: memref<8x32xf32, #tpu.memory_space<vmem>>, %arg6: memref<32x32xbf16, #tpu.memory_space<vmem>>, %arg7: memref<1x32xf32, #tpu.memory_space<vmem>>, %arg8: memref<32x128xbf16, #tpu.memory_space<vmem>>, %arg9: memref<1x128xf32, #tpu.memory_space<vmem>>, %arg10: memref<32x128xf32, #tpu.memory_space<vmem>>, %arg11: memref<32x128xf32, #tpu.memory_space<vmem>>, %arg12: memref<1x128xf32, #tpu.memory_space<vmem>>, %arg13: memref<8x128xf32, #tpu.memory_space<vmem>>) attributes {dimension_semantics = [#tpu.dimension_semantics<parallel>], iteration_bounds = array<i64: 2>, scalar_prefetch = 0 : i64, scratch_operands = 0 : i64, tpu.core_type = #tpu.core_type<tc>, window_params = [{transform_indices = @transform_0, window_bounds = array<i64: 8, 8, 32>}, {transform_indices = @transform_1, window_bounds = array<i64: 8, 8, 1>}, {transform_indices = @transform_2, window_bounds = array<i64: 8, 8, 1>}, {transform_indices = @transform_3, window_bounds = array<i64: 8, 32>}, {transform_indices = @transform_4, window_bounds = array<i64: 8, 32>}, {pipeline_mode = #tpu.pipeline_mode<synchronous>, transform_indices = @transform_5, window_bounds = array<i64: 32, 32>}, {pipeline_mode = #tpu.pipeline_mode<synchronous>, transform_indices = @transform_6, window_bounds = array<i64: 1, 32>}, {pipeline_mode = #tpu.pipeline_mode<synchronous>, transform_indices = @transform_7, window_bounds = array<i64: 32, 128>}, {pipeline_mode = #tpu.pipeline_mode<synchronous>, transform_indices = @transform_8, window_bounds = array<i64: 1, 128>}, {pipeline_mode = #tpu.pipeline_mode<synchronous>, transform_indices = @transform_9, window_bounds = array<i64: 32, 128>}, {pipeline_mode = #tpu.pipeline_mode<synchronous>, transform_indices = @transform_10, window_bounds = array<i64: 32, 128>}, {pipeline_mode = #tpu.pipeline_mode<synchronous>, transform_indices = @transform_11, window_bounds = array<i64: 1, 128>}, {transform_indices = @transform_12, window_bounds = array<i64: 8, 128>}]} {
    %c0 = arith.constant 0 : index
    %c0_0 = arith.constant 0 : index
    %c0_1 = arith.constant 0 : index
    %0 = vector.load %arg1[%c0, %c0_0, %c0_1] : memref<8x8x32xf32, #tpu.memory_space<vmem>>, vector<8x8x32xf32>
    %1 = vector.shape_cast %0 : vector<8x8x32xf32> to vector<64x32xf32>
    %2 = arith.truncf %1 : vector<64x32xf32> to vector<64x32xbf16>
    %c0_2 = arith.constant 0 : index
    %c0_3 = arith.constant 0 : index
    %3 = vector.load %arg6[%c0_2, %c0_3] : memref<32x32xbf16, #tpu.memory_space<vmem>>, vector<32x32xbf16>
    %cst = arith.constant dense<0.000000e+00> : vector<64x32xf32>
    %4 = tpu.matmul %2, %3, %cst {dimension_numbers = #tpu.dot_dimension_numbers<[1], [0], [0], [1], [0, 0, 1, 1], [], []>} : vector<64x32xbf16>, vector<32x32xbf16>, vector<64x32xf32> -> vector<64x32xf32>
    %c0_4 = arith.constant 0 : index
    %c0_5 = arith.constant 0 : index
    %5 = vector.load %arg7[%c0_4, %c0_5] : memref<1x32xf32, #tpu.memory_space<vmem>>, vector<1x32xf32>
    %6 = vector.broadcast %5 : vector<1x32xf32> to vector<64x32xf32>
    %7 = arith.addf %4, %6 : vector<64x32xf32>
    %8 = math.tanh %7 : vector<64x32xf32>
    %9 = arith.truncf %8 : vector<64x32xf32> to vector<64x32xbf16>
    %c0_6 = arith.constant 0 : index
    %c0_7 = arith.constant 0 : index
    %10 = vector.load %arg8[%c0_6, %c0_7] : memref<32x128xbf16, #tpu.memory_space<vmem>>, vector<32x128xbf16>
    %cst_8 = arith.constant dense<0.000000e+00> : vector<64x128xf32>
    %11 = tpu.matmul %9, %10, %cst_8 {dimension_numbers = #tpu.dot_dimension_numbers<[1], [0], [0], [1], [0, 0, 1, 1], [], []>} : vector<64x32xbf16>, vector<32x128xbf16>, vector<64x128xf32> -> vector<64x128xf32>
    %c0_9 = arith.constant 0 : index
    %c0_10 = arith.constant 0 : index
    %12 = vector.load %arg9[%c0_9, %c0_10] : memref<1x128xf32, #tpu.memory_space<vmem>>, vector<1x128xf32>
    %13 = vector.broadcast %12 : vector<1x128xf32> to vector<64x128xf32>
    %14 = arith.addf %11, %13 : vector<64x128xf32>
    %15 = vector.shape_cast %14 : vector<64x128xf32> to vector<8x8x128xf32>
    %c0_11 = arith.constant 0 : index
    %c0_12 = arith.constant 0 : index
    %c0_13 = arith.constant 0 : index
    %16 = vector.load %arg2[%c0_11, %c0_12, %c0_13] : memref<8x8x1xf32, #tpu.memory_space<vmem>>, vector<8x8x1xf32>
    %17 = vector.shape_cast %16 : vector<8x8x1xf32> to vector<8x8x1xf32>
    %18 = vector.broadcast %17 : vector<8x8x1xf32> to vector<8x8x16xf32>
    %c0_14 = arith.constant 0 : index
    %c0_15 = arith.constant 0 : index
    %c0_16 = arith.constant 0 : index
    %19 = vector.load %arg3[%c0_14, %c0_15, %c0_16] : memref<8x8x1xf32, #tpu.memory_space<vmem>>, vector<8x8x1xf32>
    %20 = vector.shape_cast %19 : vector<8x8x1xf32> to vector<8x8x1xf32>
    %21 = vector.broadcast %20 : vector<8x8x1xf32> to vector<8x8x16xf32>
    %22 = tpu.concatenate %18, %21 in 2 : vector<8x8x16xf32>, vector<8x8x16xf32> -> vector<8x8x32xf32>
    %c0_17 = arith.constant 0 : index
    %c0_18 = arith.constant 0 : index
    %23 = vector.load %arg10[%c0_17, %c0_18] : memref<32x128xf32, #tpu.memory_space<vmem>>, vector<32x128xf32>
    %c0_19 = arith.constant 0 : index
    %c0_20 = arith.constant 0 : index
    %24 = vector.load %arg4[%c0_19, %c0_20] : memref<8x32xf32, #tpu.memory_space<vmem>>, vector<8x32xf32>
    %c0_21 = arith.constant 0 : index
    %c0_22 = arith.constant 0 : index
    %25 = vector.load %arg5[%c0_21, %c0_22] : memref<8x32xf32, #tpu.memory_space<vmem>>, vector<8x32xf32>
    %cst_23 = arith.constant 0.000000e+00 : f32
    %26 = vector.broadcast %cst_23 : f32 to vector<8x32xf32>
    %27 = vector.extract_strided_slice %15 {offsets = [0, 0, 0], sizes = [1, 8, 128], strides = [1, 1, 1]} : vector<8x8x128xf32> to vector<1x8x128xf32>
    %28 = vector.shape_cast %27 : vector<1x8x128xf32> to vector<8x128xf32>
    %cst_24 = arith.constant dense<0.000000e+00> : vector<8x128xf32>
    %29 = tpu.matmul %24, %23, %cst_24 {dimension_numbers = #tpu.dot_dimension_numbers<[1], [0], [0], [1], [0, 0, 1, 1], [], []>} : vector<8x32xf32>, vector<32x128xf32>, vector<8x128xf32> -> vector<8x128xf32>
    %30 = arith.addf %28, %29 : vector<8x128xf32>
    %31 = vector.extract_strided_slice %30 {offsets = [0, 0], sizes = [8, 96], strides = [1, 1]} : vector<8x128xf32> to vector<8x96xf32>
    %32 = arith.negf %31 : vector<8x96xf32>
    %33 = math.exp %32 : vector<8x96xf32>
    %cst_25 = arith.constant 1.000000e+00 : f32
    %34 = vector.broadcast %cst_25 : f32 to vector<8x96xf32>
    %35 = arith.addf %34, %33 : vector<8x96xf32>
    %36 = arith.divf %34, %35 : vector<8x96xf32>
    %37 = vector.extract_strided_slice %30 {offsets = [0, 96], sizes = [8, 32], strides = [1, 1]} : vector<8x128xf32> to vector<8x32xf32>
    %38 = math.tanh %37 : vector<8x32xf32>
    %39 = vector.extract_strided_slice %36 {offsets = [0, 32], sizes = [8, 32], strides = [1, 1]} : vector<8x96xf32> to vector<8x32xf32>
    %40 = arith.mulf %39, %25 : vector<8x32xf32>
    %41 = vector.extract_strided_slice %36 {offsets = [0, 0], sizes = [8, 32], strides = [1, 1]} : vector<8x96xf32> to vector<8x32xf32>
    %42 = arith.mulf %41, %38 : vector<8x32xf32>
    %43 = arith.addf %40, %42 : vector<8x32xf32>
    %44 = vector.extract_strided_slice %36 {offsets = [0, 64], sizes = [8, 32], strides = [1, 1]} : vector<8x96xf32> to vector<8x32xf32>
    %45 = math.tanh %43 : vector<8x32xf32>
    %46 = arith.mulf %44, %45 : vector<8x32xf32>
    %47 = vector.extract_strided_slice %22 {offsets = [0, 0, 0], sizes = [1, 8, 32], strides = [1, 1, 1]} : vector<8x8x32xf32> to vector<1x8x32xf32>
    %48 = vector.shape_cast %47 : vector<1x8x32xf32> to vector<8x32xf32>
    %49 = arith.mulf %46, %48 : vector<8x32xf32>
    %50 = arith.addf %26, %49 : vector<8x32xf32>
    %51 = vector.extract_strided_slice %15 {offsets = [1, 0, 0], sizes = [1, 8, 128], strides = [1, 1, 1]} : vector<8x8x128xf32> to vector<1x8x128xf32>
    %52 = vector.shape_cast %51 : vector<1x8x128xf32> to vector<8x128xf32>
    %cst_26 = arith.constant dense<0.000000e+00> : vector<8x128xf32>
    %53 = tpu.matmul %46, %23, %cst_26 {dimension_numbers = #tpu.dot_dimension_numbers<[1], [0], [0], [1], [0, 0, 1, 1], [], []>} : vector<8x32xf32>, vector<32x128xf32>, vector<8x128xf32> -> vector<8x128xf32>
    %54 = arith.addf %52, %53 : vector<8x128xf32>
    %55 = vector.extract_strided_slice %54 {offsets = [0, 0], sizes = [8, 96], strides = [1, 1]} : vector<8x128xf32> to vector<8x96xf32>
    %56 = arith.negf %55 : vector<8x96xf32>
    %57 = math.exp %56 : vector<8x96xf32>
    %cst_27 = arith.constant 1.000000e+00 : f32
    %58 = vector.broadcast %cst_27 : f32 to vector<8x96xf32>
    %59 = arith.addf %58, %57 : vector<8x96xf32>
    %60 = arith.divf %58, %59 : vector<8x96xf32>
    %61 = vector.extract_strided_slice %54 {offsets = [0, 96], sizes = [8, 32], strides = [1, 1]} : vector<8x128xf32> to vector<8x32xf32>
    %62 = math.tanh %61 : vector<8x32xf32>
    %63 = vector.extract_strided_slice %60 {offsets = [0, 32], sizes = [8, 32], strides = [1, 1]} : vector<8x96xf32> to vector<8x32xf32>
    %64 = arith.mulf %63, %43 : vector<8x32xf32>
    %65 = vector.extract_strided_slice %60 {offsets = [0, 0], sizes = [8, 32], strides = [1, 1]} : vector<8x96xf32> to vector<8x32xf32>
    %66 = arith.mulf %65, %62 : vector<8x32xf32>
    %67 = arith.addf %64, %66 : vector<8x32xf32>
    %68 = vector.extract_strided_slice %60 {offsets = [0, 64], sizes = [8, 32], strides = [1, 1]} : vector<8x96xf32> to vector<8x32xf32>
    %69 = math.tanh %67 : vector<8x32xf32>
    %70 = arith.mulf %68, %69 : vector<8x32xf32>
    %71 = vector.extract_strided_slice %22 {offsets = [1, 0, 0], sizes = [1, 8, 32], strides = [1, 1, 1]} : vector<8x8x32xf32> to vector<1x8x32xf32>
    %72 = vector.shape_cast %71 : vector<1x8x32xf32> to vector<8x32xf32>
    %73 = arith.mulf %70, %72 : vector<8x32xf32>
    %74 = arith.addf %50, %73 : vector<8x32xf32>
    %75 = vector.extract_strided_slice %15 {offsets = [2, 0, 0], sizes = [1, 8, 128], strides = [1, 1, 1]} : vector<8x8x128xf32> to vector<1x8x128xf32>
    %76 = vector.shape_cast %75 : vector<1x8x128xf32> to vector<8x128xf32>
    %cst_28 = arith.constant dense<0.000000e+00> : vector<8x128xf32>
    %77 = tpu.matmul %70, %23, %cst_28 {dimension_numbers = #tpu.dot_dimension_numbers<[1], [0], [0], [1], [0, 0, 1, 1], [], []>} : vector<8x32xf32>, vector<32x128xf32>, vector<8x128xf32> -> vector<8x128xf32>
    %78 = arith.addf %76, %77 : vector<8x128xf32>
    %79 = vector.extract_strided_slice %78 {offsets = [0, 0], sizes = [8, 96], strides = [1, 1]} : vector<8x128xf32> to vector<8x96xf32>
    %80 = arith.negf %79 : vector<8x96xf32>
    %81 = math.exp %80 : vector<8x96xf32>
    %cst_29 = arith.constant 1.000000e+00 : f32
    %82 = vector.broadcast %cst_29 : f32 to vector<8x96xf32>
    %83 = arith.addf %82, %81 : vector<8x96xf32>
    %84 = arith.divf %82, %83 : vector<8x96xf32>
    %85 = vector.extract_strided_slice %78 {offsets = [0, 96], sizes = [8, 32], strides = [1, 1]} : vector<8x128xf32> to vector<8x32xf32>
    %86 = math.tanh %85 : vector<8x32xf32>
    %87 = vector.extract_strided_slice %84 {offsets = [0, 32], sizes = [8, 32], strides = [1, 1]} : vector<8x96xf32> to vector<8x32xf32>
    %88 = arith.mulf %87, %67 : vector<8x32xf32>
    %89 = vector.extract_strided_slice %84 {offsets = [0, 0], sizes = [8, 32], strides = [1, 1]} : vector<8x96xf32> to vector<8x32xf32>
    %90 = arith.mulf %89, %86 : vector<8x32xf32>
    %91 = arith.addf %88, %90 : vector<8x32xf32>
    %92 = vector.extract_strided_slice %84 {offsets = [0, 64], sizes = [8, 32], strides = [1, 1]} : vector<8x96xf32> to vector<8x32xf32>
    %93 = math.tanh %91 : vector<8x32xf32>
    %94 = arith.mulf %92, %93 : vector<8x32xf32>
    %95 = vector.extract_strided_slice %22 {offsets = [2, 0, 0], sizes = [1, 8, 32], strides = [1, 1, 1]} : vector<8x8x32xf32> to vector<1x8x32xf32>
    %96 = vector.shape_cast %95 : vector<1x8x32xf32> to vector<8x32xf32>
    %97 = arith.mulf %94, %96 : vector<8x32xf32>
    %98 = arith.addf %74, %97 : vector<8x32xf32>
    %99 = vector.extract_strided_slice %15 {offsets = [3, 0, 0], sizes = [1, 8, 128], strides = [1, 1, 1]} : vector<8x8x128xf32> to vector<1x8x128xf32>
    %100 = vector.shape_cast %99 : vector<1x8x128xf32> to vector<8x128xf32>
    %cst_30 = arith.constant dense<0.000000e+00> : vector<8x128xf32>
    %101 = tpu.matmul %94, %23, %cst_30 {dimension_numbers = #tpu.dot_dimension_numbers<[1], [0], [0], [1], [0, 0, 1, 1], [], []>} : vector<8x32xf32>, vector<32x128xf32>, vector<8x128xf32> -> vector<8x128xf32>
    %102 = arith.addf %100, %101 : vector<8x128xf32>
    %103 = vector.extract_strided_slice %102 {offsets = [0, 0], sizes = [8, 96], strides = [1, 1]} : vector<8x128xf32> to vector<8x96xf32>
    %104 = arith.negf %103 : vector<8x96xf32>
    %105 = math.exp %104 : vector<8x96xf32>
    %cst_31 = arith.constant 1.000000e+00 : f32
    %106 = vector.broadcast %cst_31 : f32 to vector<8x96xf32>
    %107 = arith.addf %106, %105 : vector<8x96xf32>
    %108 = arith.divf %106, %107 : vector<8x96xf32>
    %109 = vector.extract_strided_slice %102 {offsets = [0, 96], sizes = [8, 32], strides = [1, 1]} : vector<8x128xf32> to vector<8x32xf32>
    %110 = math.tanh %109 : vector<8x32xf32>
    %111 = vector.extract_strided_slice %108 {offsets = [0, 32], sizes = [8, 32], strides = [1, 1]} : vector<8x96xf32> to vector<8x32xf32>
    %112 = arith.mulf %111, %91 : vector<8x32xf32>
    %113 = vector.extract_strided_slice %108 {offsets = [0, 0], sizes = [8, 32], strides = [1, 1]} : vector<8x96xf32> to vector<8x32xf32>
    %114 = arith.mulf %113, %110 : vector<8x32xf32>
    %115 = arith.addf %112, %114 : vector<8x32xf32>
    %116 = vector.extract_strided_slice %108 {offsets = [0, 64], sizes = [8, 32], strides = [1, 1]} : vector<8x96xf32> to vector<8x32xf32>
    %117 = math.tanh %115 : vector<8x32xf32>
    %118 = arith.mulf %116, %117 : vector<8x32xf32>
    %119 = vector.extract_strided_slice %22 {offsets = [3, 0, 0], sizes = [1, 8, 32], strides = [1, 1, 1]} : vector<8x8x32xf32> to vector<1x8x32xf32>
    %120 = vector.shape_cast %119 : vector<1x8x32xf32> to vector<8x32xf32>
    %121 = arith.mulf %118, %120 : vector<8x32xf32>
    %122 = arith.addf %98, %121 : vector<8x32xf32>
    %123 = vector.extract_strided_slice %15 {offsets = [4, 0, 0], sizes = [1, 8, 128], strides = [1, 1, 1]} : vector<8x8x128xf32> to vector<1x8x128xf32>
    %124 = vector.shape_cast %123 : vector<1x8x128xf32> to vector<8x128xf32>
    %cst_32 = arith.constant dense<0.000000e+00> : vector<8x128xf32>
    %125 = tpu.matmul %118, %23, %cst_32 {dimension_numbers = #tpu.dot_dimension_numbers<[1], [0], [0], [1], [0, 0, 1, 1], [], []>} : vector<8x32xf32>, vector<32x128xf32>, vector<8x128xf32> -> vector<8x128xf32>
    %126 = arith.addf %124, %125 : vector<8x128xf32>
    %127 = vector.extract_strided_slice %126 {offsets = [0, 0], sizes = [8, 96], strides = [1, 1]} : vector<8x128xf32> to vector<8x96xf32>
    %128 = arith.negf %127 : vector<8x96xf32>
    %129 = math.exp %128 : vector<8x96xf32>
    %cst_33 = arith.constant 1.000000e+00 : f32
    %130 = vector.broadcast %cst_33 : f32 to vector<8x96xf32>
    %131 = arith.addf %130, %129 : vector<8x96xf32>
    %132 = arith.divf %130, %131 : vector<8x96xf32>
    %133 = vector.extract_strided_slice %126 {offsets = [0, 96], sizes = [8, 32], strides = [1, 1]} : vector<8x128xf32> to vector<8x32xf32>
    %134 = math.tanh %133 : vector<8x32xf32>
    %135 = vector.extract_strided_slice %132 {offsets = [0, 32], sizes = [8, 32], strides = [1, 1]} : vector<8x96xf32> to vector<8x32xf32>
    %136 = arith.mulf %135, %115 : vector<8x32xf32>
    %137 = vector.extract_strided_slice %132 {offsets = [0, 0], sizes = [8, 32], strides = [1, 1]} : vector<8x96xf32> to vector<8x32xf32>
    %138 = arith.mulf %137, %134 : vector<8x32xf32>
    %139 = arith.addf %136, %138 : vector<8x32xf32>
    %140 = vector.extract_strided_slice %132 {offsets = [0, 64], sizes = [8, 32], strides = [1, 1]} : vector<8x96xf32> to vector<8x32xf32>
    %141 = math.tanh %139 : vector<8x32xf32>
    %142 = arith.mulf %140, %141 : vector<8x32xf32>
    %143 = vector.extract_strided_slice %22 {offsets = [4, 0, 0], sizes = [1, 8, 32], strides = [1, 1, 1]} : vector<8x8x32xf32> to vector<1x8x32xf32>
    %144 = vector.shape_cast %143 : vector<1x8x32xf32> to vector<8x32xf32>
    %145 = arith.mulf %142, %144 : vector<8x32xf32>
    %146 = arith.addf %122, %145 : vector<8x32xf32>
    %147 = vector.extract_strided_slice %15 {offsets = [5, 0, 0], sizes = [1, 8, 128], strides = [1, 1, 1]} : vector<8x8x128xf32> to vector<1x8x128xf32>
    %148 = vector.shape_cast %147 : vector<1x8x128xf32> to vector<8x128xf32>
    %cst_34 = arith.constant dense<0.000000e+00> : vector<8x128xf32>
    %149 = tpu.matmul %142, %23, %cst_34 {dimension_numbers = #tpu.dot_dimension_numbers<[1], [0], [0], [1], [0, 0, 1, 1], [], []>} : vector<8x32xf32>, vector<32x128xf32>, vector<8x128xf32> -> vector<8x128xf32>
    %150 = arith.addf %148, %149 : vector<8x128xf32>
    %151 = vector.extract_strided_slice %150 {offsets = [0, 0], sizes = [8, 96], strides = [1, 1]} : vector<8x128xf32> to vector<8x96xf32>
    %152 = arith.negf %151 : vector<8x96xf32>
    %153 = math.exp %152 : vector<8x96xf32>
    %cst_35 = arith.constant 1.000000e+00 : f32
    %154 = vector.broadcast %cst_35 : f32 to vector<8x96xf32>
    %155 = arith.addf %154, %153 : vector<8x96xf32>
    %156 = arith.divf %154, %155 : vector<8x96xf32>
    %157 = vector.extract_strided_slice %150 {offsets = [0, 96], sizes = [8, 32], strides = [1, 1]} : vector<8x128xf32> to vector<8x32xf32>
    %158 = math.tanh %157 : vector<8x32xf32>
    %159 = vector.extract_strided_slice %156 {offsets = [0, 32], sizes = [8, 32], strides = [1, 1]} : vector<8x96xf32> to vector<8x32xf32>
    %160 = arith.mulf %159, %139 : vector<8x32xf32>
    %161 = vector.extract_strided_slice %156 {offsets = [0, 0], sizes = [8, 32], strides = [1, 1]} : vector<8x96xf32> to vector<8x32xf32>
    %162 = arith.mulf %161, %158 : vector<8x32xf32>
    %163 = arith.addf %160, %162 : vector<8x32xf32>
    %164 = vector.extract_strided_slice %156 {offsets = [0, 64], sizes = [8, 32], strides = [1, 1]} : vector<8x96xf32> to vector<8x32xf32>
    %165 = math.tanh %163 : vector<8x32xf32>
    %166 = arith.mulf %164, %165 : vector<8x32xf32>
    %167 = vector.extract_strided_slice %22 {offsets = [5, 0, 0], sizes = [1, 8, 32], strides = [1, 1, 1]} : vector<8x8x32xf32> to vector<1x8x32xf32>
    %168 = vector.shape_cast %167 : vector<1x8x32xf32> to vector<8x32xf32>
    %169 = arith.mulf %166, %168 : vector<8x32xf32>
    %170 = arith.addf %146, %169 : vector<8x32xf32>
    %171 = vector.extract_strided_slice %15 {offsets = [6, 0, 0], sizes = [1, 8, 128], strides = [1, 1, 1]} : vector<8x8x128xf32> to vector<1x8x128xf32>
    %172 = vector.shape_cast %171 : vector<1x8x128xf32> to vector<8x128xf32>
    %cst_36 = arith.constant dense<0.000000e+00> : vector<8x128xf32>
    %173 = tpu.matmul %166, %23, %cst_36 {dimension_numbers = #tpu.dot_dimension_numbers<[1], [0], [0], [1], [0, 0, 1, 1], [], []>} : vector<8x32xf32>, vector<32x128xf32>, vector<8x128xf32> -> vector<8x128xf32>
    %174 = arith.addf %172, %173 : vector<8x128xf32>
    %175 = vector.extract_strided_slice %174 {offsets = [0, 0], sizes = [8, 96], strides = [1, 1]} : vector<8x128xf32> to vector<8x96xf32>
    %176 = arith.negf %175 : vector<8x96xf32>
    %177 = math.exp %176 : vector<8x96xf32>
    %cst_37 = arith.constant 1.000000e+00 : f32
    %178 = vector.broadcast %cst_37 : f32 to vector<8x96xf32>
    %179 = arith.addf %178, %177 : vector<8x96xf32>
    %180 = arith.divf %178, %179 : vector<8x96xf32>
    %181 = vector.extract_strided_slice %174 {offsets = [0, 96], sizes = [8, 32], strides = [1, 1]} : vector<8x128xf32> to vector<8x32xf32>
    %182 = math.tanh %181 : vector<8x32xf32>
    %183 = vector.extract_strided_slice %180 {offsets = [0, 32], sizes = [8, 32], strides = [1, 1]} : vector<8x96xf32> to vector<8x32xf32>
    %184 = arith.mulf %183, %163 : vector<8x32xf32>
    %185 = vector.extract_strided_slice %180 {offsets = [0, 0], sizes = [8, 32], strides = [1, 1]} : vector<8x96xf32> to vector<8x32xf32>
    %186 = arith.mulf %185, %182 : vector<8x32xf32>
    %187 = arith.addf %184, %186 : vector<8x32xf32>
    %188 = vector.extract_strided_slice %180 {offsets = [0, 64], sizes = [8, 32], strides = [1, 1]} : vector<8x96xf32> to vector<8x32xf32>
    %189 = math.tanh %187 : vector<8x32xf32>
    %190 = arith.mulf %188, %189 : vector<8x32xf32>
    %191 = vector.extract_strided_slice %22 {offsets = [6, 0, 0], sizes = [1, 8, 32], strides = [1, 1, 1]} : vector<8x8x32xf32> to vector<1x8x32xf32>
    %192 = vector.shape_cast %191 : vector<1x8x32xf32> to vector<8x32xf32>
    %193 = arith.mulf %190, %192 : vector<8x32xf32>
    %194 = arith.addf %170, %193 : vector<8x32xf32>
    %195 = vector.extract_strided_slice %15 {offsets = [7, 0, 0], sizes = [1, 8, 128], strides = [1, 1, 1]} : vector<8x8x128xf32> to vector<1x8x128xf32>
    %196 = vector.shape_cast %195 : vector<1x8x128xf32> to vector<8x128xf32>
    %cst_38 = arith.constant dense<0.000000e+00> : vector<8x128xf32>
    %197 = tpu.matmul %190, %23, %cst_38 {dimension_numbers = #tpu.dot_dimension_numbers<[1], [0], [0], [1], [0, 0, 1, 1], [], []>} : vector<8x32xf32>, vector<32x128xf32>, vector<8x128xf32> -> vector<8x128xf32>
    %198 = arith.addf %196, %197 : vector<8x128xf32>
    %199 = vector.extract_strided_slice %198 {offsets = [0, 0], sizes = [8, 96], strides = [1, 1]} : vector<8x128xf32> to vector<8x96xf32>
    %200 = arith.negf %199 : vector<8x96xf32>
    %201 = math.exp %200 : vector<8x96xf32>
    %cst_39 = arith.constant 1.000000e+00 : f32
    %202 = vector.broadcast %cst_39 : f32 to vector<8x96xf32>
    %203 = arith.addf %202, %201 : vector<8x96xf32>
    %204 = arith.divf %202, %203 : vector<8x96xf32>
    %205 = vector.extract_strided_slice %198 {offsets = [0, 96], sizes = [8, 32], strides = [1, 1]} : vector<8x128xf32> to vector<8x32xf32>
    %206 = math.tanh %205 : vector<8x32xf32>
    %207 = vector.extract_strided_slice %204 {offsets = [0, 32], sizes = [8, 32], strides = [1, 1]} : vector<8x96xf32> to vector<8x32xf32>
    %208 = arith.mulf %207, %187 : vector<8x32xf32>
    %209 = vector.extract_strided_slice %204 {offsets = [0, 0], sizes = [8, 32], strides = [1, 1]} : vector<8x96xf32> to vector<8x32xf32>
    %210 = arith.mulf %209, %206 : vector<8x32xf32>
    %211 = arith.addf %208, %210 : vector<8x32xf32>
    %212 = vector.extract_strided_slice %204 {offsets = [0, 64], sizes = [8, 32], strides = [1, 1]} : vector<8x96xf32> to vector<8x32xf32>
    %213 = math.tanh %211 : vector<8x32xf32>
    %214 = arith.mulf %212, %213 : vector<8x32xf32>
    %215 = vector.extract_strided_slice %22 {offsets = [7, 0, 0], sizes = [1, 8, 32], strides = [1, 1, 1]} : vector<8x8x32xf32> to vector<1x8x32xf32>
    %216 = vector.shape_cast %215 : vector<1x8x32xf32> to vector<8x32xf32>
    %217 = arith.mulf %214, %216 : vector<8x32xf32>
    %218 = arith.addf %194, %217 : vector<8x32xf32>
    %c0_40 = arith.constant 0 : index
    %c0_41 = arith.constant 0 : index
    %219 = vector.load %arg11[%c0_40, %c0_41] : memref<32x128xf32, #tpu.memory_space<vmem>>, vector<32x128xf32>
    %cst_42 = arith.constant dense<0.000000e+00> : vector<8x128xf32>
    %220 = tpu.matmul %218, %219, %cst_42 {dimension_numbers = #tpu.dot_dimension_numbers<[1], [0], [0], [1], [0, 0, 1, 1], [], []>} : vector<8x32xf32>, vector<32x128xf32>, vector<8x128xf32> -> vector<8x128xf32>
    %c0_43 = arith.constant 0 : index
    %c0_44 = arith.constant 0 : index
    %221 = vector.load %arg12[%c0_43, %c0_44] : memref<1x128xf32, #tpu.memory_space<vmem>>, vector<1x128xf32>
    %222 = vector.broadcast %221 : vector<1x128xf32> to vector<8x128xf32>
    %223 = arith.addf %220, %222 : vector<8x128xf32>
    %224 = math.tanh %223 : vector<8x128xf32>
    %c0_45 = arith.constant 0 : index
    %c0_46 = arith.constant 0 : index
    %225 = vector.load %arg13[%c0_45, %c0_46] : memref<8x128xf32, #tpu.memory_space<vmem>>, vector<8x128xf32>
    tpu.vector_store %arg13[%c0_45, %c0_46], %224 {strides = array<i32>} : memref<8x128xf32, #tpu.memory_space<vmem>>, vector<8x128xf32>,
    return
  }
  func.func @transform_0(%arg0: i32) -> (i32, i32, i32) {
    %c0_i32 = arith.constant 0 : i32
    %c0_i32_0 = arith.constant 0 : i32
    %c0_i32_1 = arith.constant 0 : i32
    return %c0_i32, %arg0, %c0_i32_0 : i32, i32, i32
  }
  func.func @transform_1(%arg0: i32) -> (i32, i32, i32) {
    %c0_i32 = arith.constant 0 : i32
    %c0_i32_0 = arith.constant 0 : i32
    %c0_i32_1 = arith.constant 0 : i32
    return %c0_i32, %arg0, %c0_i32_0 : i32, i32, i32
  }
  func.func @transform_2(%arg0: i32) -> (i32, i32, i32) {
    %c0_i32 = arith.constant 0 : i32
    %c0_i32_0 = arith.constant 0 : i32
    %c0_i32_1 = arith.constant 0 : i32
    return %c0_i32, %arg0, %c0_i32_0 : i32, i32, i32
  }
  func.func @transform_3(%arg0: i32) -> (i32, i32) {
    %c0_i32 = arith.constant 0 : i32
    %c0_i32_0 = arith.constant 0 : i32
    return %arg0, %c0_i32 : i32, i32
  }
  func.func @transform_4(%arg0: i32) -> (i32, i32) {
    %c0_i32 = arith.constant 0 : i32
    %c0_i32_0 = arith.constant 0 : i32
    return %arg0, %c0_i32 : i32, i32
  }
  func.func @transform_5(%arg0: i32) -> (i32, i32) {
    %c0_i32 = arith.constant 0 : i32
    %c0_i32_0 = arith.constant 0 : i32
    %c0_i32_1 = arith.constant 0 : i32
    return %c0_i32, %c0_i32_0 : i32, i32
  }
  func.func @transform_6(%arg0: i32) -> (i32, i32) {
    %c0_i32 = arith.constant 0 : i32
    %c0_i32_0 = arith.constant 0 : i32
    %c0_i32_1 = arith.constant 0 : i32
    return %c0_i32, %c0_i32_0 : i32, i32
  }
  func.func @transform_7(%arg0: i32) -> (i32, i32) {
    %c0_i32 = arith.constant 0 : i32
    %c0_i32_0 = arith.constant 0 : i32
    %c0_i32_1 = arith.constant 0 : i32
    return %c0_i32, %c0_i32_0 : i32, i32
  }
  func.func @transform_8(%arg0: i32) -> (i32, i32) {
    %c0_i32 = arith.constant 0 : i32
    %c0_i32_0 = arith.constant 0 : i32
    %c0_i32_1 = arith.constant 0 : i32
    return %c0_i32, %c0_i32_0 : i32, i32
  }
  func.func @transform_9(%arg0: i32) -> (i32, i32) {
    %c0_i32 = arith.constant 0 : i32
    %c0_i32_0 = arith.constant 0 : i32
    %c0_i32_1 = arith.constant 0 : i32
    return %c0_i32, %c0_i32_0 : i32, i32
  }
  func.func @transform_10(%arg0: i32) -> (i32, i32) {
    %c0_i32 = arith.constant 0 : i32
    %c0_i32_0 = arith.constant 0 : i32
    %c0_i32_1 = arith.constant 0 : i32
    return %c0_i32, %c0_i32_0 : i32, i32
  }
  func.func @transform_11(%arg0: i32) -> (i32, i32) {
    %c0_i32 = arith.constant 0 : i32
    %c0_i32_0 = arith.constant 0 : i32
    %c0_i32_1 = arith.constant 0 : i32
    return %c0_i32, %c0_i32_0 : i32, i32
  }
  func.func @transform_12(%arg0: i32) -> (i32, i32) {
    %c0_i32 = arith.constant 0 : i32
    %c0_i32_0 = arith.constant 0 : i32
    return %arg0, %c0_i32 : i32, i32
  }
}

module attributes {stable_mosaic.version = 11 : i64} {
  func.func @_decoder_kernel(%arg0: memref<6x8x128xf32, #tpu.memory_space<vmem>>, %arg1: memref<8x32xf32, #tpu.memory_space<vmem>>, %arg2: memref<8x32xf32, #tpu.memory_space<vmem>>, %arg3: memref<128x128xbf16, #tpu.memory_space<vmem>>, %arg4: memref<1x128xf32, #tpu.memory_space<vmem>>, %arg5: memref<32x128xf32, #tpu.memory_space<vmem>>, %arg6: memref<32x128xf32, #tpu.memory_space<vmem>>, %arg7: memref<32x128xf32, #tpu.memory_space<vmem>>, %arg8: memref<1x128xf32, #tpu.memory_space<vmem>>, %arg9: memref<6x8x128xf32, #tpu.memory_space<vmem>>) attributes {dimension_semantics = [], scalar_prefetch = 0 : i64, scratch_operands = 0 : i64, tpu.core_type = #tpu.core_type<tc>} {
    %c0 = arith.constant 0 : index
    %c0_0 = arith.constant 0 : index
    %c0_1 = arith.constant 0 : index
    %0 = vector.load %arg0[%c0, %c0_0, %c0_1] : memref<6x8x128xf32, #tpu.memory_space<vmem>>, vector<6x8x128xf32>
    %1 = vector.shape_cast %0 : vector<6x8x128xf32> to vector<48x128xf32>
    %2 = arith.truncf %1 : vector<48x128xf32> to vector<48x128xbf16>
    %c0_2 = arith.constant 0 : index
    %c0_3 = arith.constant 0 : index
    %3 = vector.load %arg3[%c0_2, %c0_3] : memref<128x128xbf16, #tpu.memory_space<vmem>>, vector<128x128xbf16>
    %cst = arith.constant dense<0.000000e+00> : vector<48x128xf32>
    %4 = tpu.matmul %2, %3, %cst {dimension_numbers = #tpu.dot_dimension_numbers<[1], [0], [0], [1], [0, 0, 1, 1], [], []>} : vector<48x128xbf16>, vector<128x128xbf16>, vector<48x128xf32> -> vector<48x128xf32>
    %c0_4 = arith.constant 0 : index
    %c0_5 = arith.constant 0 : index
    %5 = vector.load %arg4[%c0_4, %c0_5] : memref<1x128xf32, #tpu.memory_space<vmem>>, vector<1x128xf32>
    %6 = vector.broadcast %5 : vector<1x128xf32> to vector<48x128xf32>
    %7 = arith.addf %4, %6 : vector<48x128xf32>
    %8 = vector.shape_cast %7 : vector<48x128xf32> to vector<6x8x128xf32>
    %c0_6 = arith.constant 0 : index
    %c0_7 = arith.constant 0 : index
    %9 = vector.load %arg5[%c0_6, %c0_7] : memref<32x128xf32, #tpu.memory_space<vmem>>, vector<32x128xf32>
    %c0_8 = arith.constant 0 : index
    %c0_9 = arith.constant 0 : index
    %10 = vector.load %arg6[%c0_8, %c0_9] : memref<32x128xf32, #tpu.memory_space<vmem>>, vector<32x128xf32>
    %c0_10 = arith.constant 0 : index
    %c0_11 = arith.constant 0 : index
    %11 = vector.load %arg7[%c0_10, %c0_11] : memref<32x128xf32, #tpu.memory_space<vmem>>, vector<32x128xf32>
    %c0_12 = arith.constant 0 : index
    %c0_13 = arith.constant 0 : index
    %12 = vector.load %arg1[%c0_12, %c0_13] : memref<8x32xf32, #tpu.memory_space<vmem>>, vector<8x32xf32>
    %c0_14 = arith.constant 0 : index
    %c0_15 = arith.constant 0 : index
    %13 = vector.load %arg2[%c0_14, %c0_15] : memref<8x32xf32, #tpu.memory_space<vmem>>, vector<8x32xf32>
    %c0_16 = arith.constant 0 : index
    %c0_17 = arith.constant 0 : index
    %14 = vector.load %arg8[%c0_16, %c0_17] : memref<1x128xf32, #tpu.memory_space<vmem>>, vector<1x128xf32>
    %15 = vector.shape_cast %14 : vector<1x128xf32> to vector<1x1x128xf32>
    %16 = vector.shape_cast %15 : vector<1x1x128xf32> to vector<1x1x128xf32>
    %17 = vector.broadcast %16 : vector<1x1x128xf32> to vector<6x8x128xf32>
    %c0_18 = arith.constant 0 : index
    %c0_19 = arith.constant 0 : index
    %c0_20 = arith.constant 0 : index
    %18 = vector.load %arg9[%c0_18, %c0_19, %c0_20] : memref<6x8x128xf32, #tpu.memory_space<vmem>>, vector<6x8x128xf32>
    tpu.vector_store %arg9[%c0_18, %c0_19, %c0_20], %17 {strides = array<i32>} : memref<6x8x128xf32, #tpu.memory_space<vmem>>, vector<6x8x128xf32>,
    %19 = vector.extract_strided_slice %8 {offsets = [0, 0, 0], sizes = [1, 8, 128], strides = [1, 1, 1]} : vector<6x8x128xf32> to vector<1x8x128xf32>
    %20 = vector.shape_cast %19 : vector<1x8x128xf32> to vector<8x128xf32>
    %cst_21 = arith.constant dense<0.000000e+00> : vector<8x128xf32>
    %21 = tpu.matmul %12, %9, %cst_21 {dimension_numbers = #tpu.dot_dimension_numbers<[1], [0], [0], [1], [0, 0, 1, 1], [], []>} : vector<8x32xf32>, vector<32x128xf32>, vector<8x128xf32> -> vector<8x128xf32>
    %22 = arith.addf %20, %21 : vector<8x128xf32>
    %23 = vector.extract_strided_slice %22 {offsets = [0, 0], sizes = [8, 96], strides = [1, 1]} : vector<8x128xf32> to vector<8x96xf32>
    %24 = arith.negf %23 : vector<8x96xf32>
    %25 = math.exp %24 : vector<8x96xf32>
    %cst_22 = arith.constant 1.000000e+00 : f32
    %26 = vector.broadcast %cst_22 : f32 to vector<8x96xf32>
    %27 = arith.addf %26, %25 : vector<8x96xf32>
    %28 = arith.divf %26, %27 : vector<8x96xf32>
    %29 = vector.extract_strided_slice %22 {offsets = [0, 96], sizes = [8, 32], strides = [1, 1]} : vector<8x128xf32> to vector<8x32xf32>
    %30 = math.tanh %29 : vector<8x32xf32>
    %31 = vector.extract_strided_slice %28 {offsets = [0, 32], sizes = [8, 32], strides = [1, 1]} : vector<8x96xf32> to vector<8x32xf32>
    %32 = arith.mulf %31, %13 : vector<8x32xf32>
    %33 = vector.extract_strided_slice %28 {offsets = [0, 0], sizes = [8, 32], strides = [1, 1]} : vector<8x96xf32> to vector<8x32xf32>
    %34 = arith.mulf %33, %30 : vector<8x32xf32>
    %35 = arith.addf %32, %34 : vector<8x32xf32>
    %36 = vector.extract_strided_slice %28 {offsets = [0, 64], sizes = [8, 32], strides = [1, 1]} : vector<8x96xf32> to vector<8x32xf32>
    %37 = math.tanh %35 : vector<8x32xf32>
    %38 = arith.mulf %36, %37 : vector<8x32xf32>
    %c0_23 = arith.constant 0 : index
    %c0_24 = arith.constant 0 : index
    %c0_25 = arith.constant 0 : index
    %39 = vector.load %arg9[%c0_23, %c0_24, %c0_25] : memref<6x8x128xf32, #tpu.memory_space<vmem>>, vector<1x8x128xf32>
    %40 = vector.shape_cast %39 : vector<1x8x128xf32> to vector<8x128xf32>
    %cst_26 = arith.constant dense<0.000000e+00> : vector<8x128xf32>
    %41 = tpu.matmul %38, %10, %cst_26 {dimension_numbers = #tpu.dot_dimension_numbers<[1], [0], [0], [1], [0, 0, 1, 1], [], []>} : vector<8x32xf32>, vector<32x128xf32>, vector<8x128xf32> -> vector<8x128xf32>
    %42 = arith.addf %40, %41 : vector<8x128xf32>
    %c0_27 = arith.constant 0 : index
    %c0_28 = arith.constant 0 : index
    %c0_29 = arith.constant 0 : index
    %43 = vector.load %arg9[%c0_27, %c0_28, %c0_29] : memref<6x8x128xf32, #tpu.memory_space<vmem>>, vector<1x8x128xf32>
    %44 = vector.shape_cast %43 : vector<1x8x128xf32> to vector<8x128xf32>
    %45 = vector.shape_cast %42 : vector<8x128xf32> to vector<1x8x128xf32>
    tpu.vector_store %arg9[%c0_27, %c0_28, %c0_29], %45 {strides = array<i32>} : memref<6x8x128xf32, #tpu.memory_space<vmem>>, vector<1x8x128xf32>,
    %c5 = arith.constant 5 : index
    %c0_30 = arith.constant 0 : index
    %c0_31 = arith.constant 0 : index
    %46 = vector.load %arg9[%c5, %c0_30, %c0_31] : memref<6x8x128xf32, #tpu.memory_space<vmem>>, vector<1x8x128xf32>
    %47 = vector.shape_cast %46 : vector<1x8x128xf32> to vector<8x128xf32>
    %cst_32 = arith.constant dense<0.000000e+00> : vector<8x128xf32>
    %48 = tpu.matmul %38, %11, %cst_32 {dimension_numbers = #tpu.dot_dimension_numbers<[1], [0], [0], [1], [0, 0, 1, 1], [], []>} : vector<8x32xf32>, vector<32x128xf32>, vector<8x128xf32> -> vector<8x128xf32>
    %49 = arith.addf %47, %48 : vector<8x128xf32>
    %c5_33 = arith.constant 5 : index
    %c0_34 = arith.constant 0 : index
    %c0_35 = arith.constant 0 : index
    %50 = vector.load %arg9[%c5_33, %c0_34, %c0_35] : memref<6x8x128xf32, #tpu.memory_space<vmem>>, vector<1x8x128xf32>
    %51 = vector.shape_cast %50 : vector<1x8x128xf32> to vector<8x128xf32>
    %52 = vector.shape_cast %49 : vector<8x128xf32> to vector<1x8x128xf32>
    tpu.vector_store %arg9[%c5_33, %c0_34, %c0_35], %52 {strides = array<i32>} : memref<6x8x128xf32, #tpu.memory_space<vmem>>, vector<1x8x128xf32>,
    %53 = vector.extract_strided_slice %8 {offsets = [1, 0, 0], sizes = [1, 8, 128], strides = [1, 1, 1]} : vector<6x8x128xf32> to vector<1x8x128xf32>
    %54 = vector.shape_cast %53 : vector<1x8x128xf32> to vector<8x128xf32>
    %cst_36 = arith.constant dense<0.000000e+00> : vector<8x128xf32>
    %55 = tpu.matmul %38, %9, %cst_36 {dimension_numbers = #tpu.dot_dimension_numbers<[1], [0], [0], [1], [0, 0, 1, 1], [], []>} : vector<8x32xf32>, vector<32x128xf32>, vector<8x128xf32> -> vector<8x128xf32>
    %56 = arith.addf %54, %55 : vector<8x128xf32>
    %57 = vector.extract_strided_slice %56 {offsets = [0, 0], sizes = [8, 96], strides = [1, 1]} : vector<8x128xf32> to vector<8x96xf32>
    %58 = arith.negf %57 : vector<8x96xf32>
    %59 = math.exp %58 : vector<8x96xf32>
    %cst_37 = arith.constant 1.000000e+00 : f32
    %60 = vector.broadcast %cst_37 : f32 to vector<8x96xf32>
    %61 = arith.addf %60, %59 : vector<8x96xf32>
    %62 = arith.divf %60, %61 : vector<8x96xf32>
    %63 = vector.extract_strided_slice %56 {offsets = [0, 96], sizes = [8, 32], strides = [1, 1]} : vector<8x128xf32> to vector<8x32xf32>
    %64 = math.tanh %63 : vector<8x32xf32>
    %65 = vector.extract_strided_slice %62 {offsets = [0, 32], sizes = [8, 32], strides = [1, 1]} : vector<8x96xf32> to vector<8x32xf32>
    %66 = arith.mulf %65, %35 : vector<8x32xf32>
    %67 = vector.extract_strided_slice %62 {offsets = [0, 0], sizes = [8, 32], strides = [1, 1]} : vector<8x96xf32> to vector<8x32xf32>
    %68 = arith.mulf %67, %64 : vector<8x32xf32>
    %69 = arith.addf %66, %68 : vector<8x32xf32>
    %70 = vector.extract_strided_slice %62 {offsets = [0, 64], sizes = [8, 32], strides = [1, 1]} : vector<8x96xf32> to vector<8x32xf32>
    %71 = math.tanh %69 : vector<8x32xf32>
    %72 = arith.mulf %70, %71 : vector<8x32xf32>
    %c1 = arith.constant 1 : index
    %c0_38 = arith.constant 0 : index
    %c0_39 = arith.constant 0 : index
    %73 = vector.load %arg9[%c1, %c0_38, %c0_39] : memref<6x8x128xf32, #tpu.memory_space<vmem>>, vector<1x8x128xf32>
    %74 = vector.shape_cast %73 : vector<1x8x128xf32> to vector<8x128xf32>
    %cst_40 = arith.constant dense<0.000000e+00> : vector<8x128xf32>
    %75 = tpu.matmul %72, %10, %cst_40 {dimension_numbers = #tpu.dot_dimension_numbers<[1], [0], [0], [1], [0, 0, 1, 1], [], []>} : vector<8x32xf32>, vector<32x128xf32>, vector<8x128xf32> -> vector<8x128xf32>
    %76 = arith.addf %74, %75 : vector<8x128xf32>
    %c1_41 = arith.constant 1 : index
    %c0_42 = arith.constant 0 : index
    %c0_43 = arith.constant 0 : index
    %77 = vector.load %arg9[%c1_41, %c0_42, %c0_43] : memref<6x8x128xf32, #tpu.memory_space<vmem>>, vector<1x8x128xf32>
    %78 = vector.shape_cast %77 : vector<1x8x128xf32> to vector<8x128xf32>
    %79 = vector.shape_cast %76 : vector<8x128xf32> to vector<1x8x128xf32>
    tpu.vector_store %arg9[%c1_41, %c0_42, %c0_43], %79 {strides = array<i32>} : memref<6x8x128xf32, #tpu.memory_space<vmem>>, vector<1x8x128xf32>,
    %c4 = arith.constant 4 : index
    %c0_44 = arith.constant 0 : index
    %c0_45 = arith.constant 0 : index
    %80 = vector.load %arg9[%c4, %c0_44, %c0_45] : memref<6x8x128xf32, #tpu.memory_space<vmem>>, vector<1x8x128xf32>
    %81 = vector.shape_cast %80 : vector<1x8x128xf32> to vector<8x128xf32>
    %cst_46 = arith.constant dense<0.000000e+00> : vector<8x128xf32>
    %82 = tpu.matmul %72, %11, %cst_46 {dimension_numbers = #tpu.dot_dimension_numbers<[1], [0], [0], [1], [0, 0, 1, 1], [], []>} : vector<8x32xf32>, vector<32x128xf32>, vector<8x128xf32> -> vector<8x128xf32>
    %83 = arith.addf %81, %82 : vector<8x128xf32>
    %c4_47 = arith.constant 4 : index
    %c0_48 = arith.constant 0 : index
    %c0_49 = arith.constant 0 : index
    %84 = vector.load %arg9[%c4_47, %c0_48, %c0_49] : memref<6x8x128xf32, #tpu.memory_space<vmem>>, vector<1x8x128xf32>
    %85 = vector.shape_cast %84 : vector<1x8x128xf32> to vector<8x128xf32>
    %86 = vector.shape_cast %83 : vector<8x128xf32> to vector<1x8x128xf32>
    tpu.vector_store %arg9[%c4_47, %c0_48, %c0_49], %86 {strides = array<i32>} : memref<6x8x128xf32, #tpu.memory_space<vmem>>, vector<1x8x128xf32>,
    %87 = vector.extract_strided_slice %8 {offsets = [2, 0, 0], sizes = [1, 8, 128], strides = [1, 1, 1]} : vector<6x8x128xf32> to vector<1x8x128xf32>
    %88 = vector.shape_cast %87 : vector<1x8x128xf32> to vector<8x128xf32>
    %cst_50 = arith.constant dense<0.000000e+00> : vector<8x128xf32>
    %89 = tpu.matmul %72, %9, %cst_50 {dimension_numbers = #tpu.dot_dimension_numbers<[1], [0], [0], [1], [0, 0, 1, 1], [], []>} : vector<8x32xf32>, vector<32x128xf32>, vector<8x128xf32> -> vector<8x128xf32>
    %90 = arith.addf %88, %89 : vector<8x128xf32>
    %91 = vector.extract_strided_slice %90 {offsets = [0, 0], sizes = [8, 96], strides = [1, 1]} : vector<8x128xf32> to vector<8x96xf32>
    %92 = arith.negf %91 : vector<8x96xf32>
    %93 = math.exp %92 : vector<8x96xf32>
    %cst_51 = arith.constant 1.000000e+00 : f32
    %94 = vector.broadcast %cst_51 : f32 to vector<8x96xf32>
    %95 = arith.addf %94, %93 : vector<8x96xf32>
    %96 = arith.divf %94, %95 : vector<8x96xf32>
    %97 = vector.extract_strided_slice %90 {offsets = [0, 96], sizes = [8, 32], strides = [1, 1]} : vector<8x128xf32> to vector<8x32xf32>
    %98 = math.tanh %97 : vector<8x32xf32>
    %99 = vector.extract_strided_slice %96 {offsets = [0, 32], sizes = [8, 32], strides = [1, 1]} : vector<8x96xf32> to vector<8x32xf32>
    %100 = arith.mulf %99, %69 : vector<8x32xf32>
    %101 = vector.extract_strided_slice %96 {offsets = [0, 0], sizes = [8, 32], strides = [1, 1]} : vector<8x96xf32> to vector<8x32xf32>
    %102 = arith.mulf %101, %98 : vector<8x32xf32>
    %103 = arith.addf %100, %102 : vector<8x32xf32>
    %104 = vector.extract_strided_slice %96 {offsets = [0, 64], sizes = [8, 32], strides = [1, 1]} : vector<8x96xf32> to vector<8x32xf32>
    %105 = math.tanh %103 : vector<8x32xf32>
    %106 = arith.mulf %104, %105 : vector<8x32xf32>
    %c2 = arith.constant 2 : index
    %c0_52 = arith.constant 0 : index
    %c0_53 = arith.constant 0 : index
    %107 = vector.load %arg9[%c2, %c0_52, %c0_53] : memref<6x8x128xf32, #tpu.memory_space<vmem>>, vector<1x8x128xf32>
    %108 = vector.shape_cast %107 : vector<1x8x128xf32> to vector<8x128xf32>
    %cst_54 = arith.constant dense<0.000000e+00> : vector<8x128xf32>
    %109 = tpu.matmul %106, %10, %cst_54 {dimension_numbers = #tpu.dot_dimension_numbers<[1], [0], [0], [1], [0, 0, 1, 1], [], []>} : vector<8x32xf32>, vector<32x128xf32>, vector<8x128xf32> -> vector<8x128xf32>
    %110 = arith.addf %108, %109 : vector<8x128xf32>
    %c2_55 = arith.constant 2 : index
    %c0_56 = arith.constant 0 : index
    %c0_57 = arith.constant 0 : index
    %111 = vector.load %arg9[%c2_55, %c0_56, %c0_57] : memref<6x8x128xf32, #tpu.memory_space<vmem>>, vector<1x8x128xf32>
    %112 = vector.shape_cast %111 : vector<1x8x128xf32> to vector<8x128xf32>
    %113 = vector.shape_cast %110 : vector<8x128xf32> to vector<1x8x128xf32>
    tpu.vector_store %arg9[%c2_55, %c0_56, %c0_57], %113 {strides = array<i32>} : memref<6x8x128xf32, #tpu.memory_space<vmem>>, vector<1x8x128xf32>,
    %c3 = arith.constant 3 : index
    %c0_58 = arith.constant 0 : index
    %c0_59 = arith.constant 0 : index
    %114 = vector.load %arg9[%c3, %c0_58, %c0_59] : memref<6x8x128xf32, #tpu.memory_space<vmem>>, vector<1x8x128xf32>
    %115 = vector.shape_cast %114 : vector<1x8x128xf32> to vector<8x128xf32>
    %cst_60 = arith.constant dense<0.000000e+00> : vector<8x128xf32>
    %116 = tpu.matmul %106, %11, %cst_60 {dimension_numbers = #tpu.dot_dimension_numbers<[1], [0], [0], [1], [0, 0, 1, 1], [], []>} : vector<8x32xf32>, vector<32x128xf32>, vector<8x128xf32> -> vector<8x128xf32>
    %117 = arith.addf %115, %116 : vector<8x128xf32>
    %c3_61 = arith.constant 3 : index
    %c0_62 = arith.constant 0 : index
    %c0_63 = arith.constant 0 : index
    %118 = vector.load %arg9[%c3_61, %c0_62, %c0_63] : memref<6x8x128xf32, #tpu.memory_space<vmem>>, vector<1x8x128xf32>
    %119 = vector.shape_cast %118 : vector<1x8x128xf32> to vector<8x128xf32>
    %120 = vector.shape_cast %117 : vector<8x128xf32> to vector<1x8x128xf32>
    tpu.vector_store %arg9[%c3_61, %c0_62, %c0_63], %120 {strides = array<i32>} : memref<6x8x128xf32, #tpu.memory_space<vmem>>, vector<1x8x128xf32>,
    %121 = vector.extract_strided_slice %8 {offsets = [3, 0, 0], sizes = [1, 8, 128], strides = [1, 1, 1]} : vector<6x8x128xf32> to vector<1x8x128xf32>
    %122 = vector.shape_cast %121 : vector<1x8x128xf32> to vector<8x128xf32>
    %cst_64 = arith.constant dense<0.000000e+00> : vector<8x128xf32>
    %123 = tpu.matmul %106, %9, %cst_64 {dimension_numbers = #tpu.dot_dimension_numbers<[1], [0], [0], [1], [0, 0, 1, 1], [], []>} : vector<8x32xf32>, vector<32x128xf32>, vector<8x128xf32> -> vector<8x128xf32>
    %124 = arith.addf %122, %123 : vector<8x128xf32>
    %125 = vector.extract_strided_slice %124 {offsets = [0, 0], sizes = [8, 96], strides = [1, 1]} : vector<8x128xf32> to vector<8x96xf32>
    %126 = arith.negf %125 : vector<8x96xf32>
    %127 = math.exp %126 : vector<8x96xf32>
    %cst_65 = arith.constant 1.000000e+00 : f32
    %128 = vector.broadcast %cst_65 : f32 to vector<8x96xf32>
    %129 = arith.addf %128, %127 : vector<8x96xf32>
    %130 = arith.divf %128, %129 : vector<8x96xf32>
    %131 = vector.extract_strided_slice %124 {offsets = [0, 96], sizes = [8, 32], strides = [1, 1]} : vector<8x128xf32> to vector<8x32xf32>
    %132 = math.tanh %131 : vector<8x32xf32>
    %133 = vector.extract_strided_slice %130 {offsets = [0, 32], sizes = [8, 32], strides = [1, 1]} : vector<8x96xf32> to vector<8x32xf32>
    %134 = arith.mulf %133, %103 : vector<8x32xf32>
    %135 = vector.extract_strided_slice %130 {offsets = [0, 0], sizes = [8, 32], strides = [1, 1]} : vector<8x96xf32> to vector<8x32xf32>
    %136 = arith.mulf %135, %132 : vector<8x32xf32>
    %137 = arith.addf %134, %136 : vector<8x32xf32>
    %138 = vector.extract_strided_slice %130 {offsets = [0, 64], sizes = [8, 32], strides = [1, 1]} : vector<8x96xf32> to vector<8x32xf32>
    %139 = math.tanh %137 : vector<8x32xf32>
    %140 = arith.mulf %138, %139 : vector<8x32xf32>
    %c3_66 = arith.constant 3 : index
    %c0_67 = arith.constant 0 : index
    %c0_68 = arith.constant 0 : index
    %141 = vector.load %arg9[%c3_66, %c0_67, %c0_68] : memref<6x8x128xf32, #tpu.memory_space<vmem>>, vector<1x8x128xf32>
    %142 = vector.shape_cast %141 : vector<1x8x128xf32> to vector<8x128xf32>
    %cst_69 = arith.constant dense<0.000000e+00> : vector<8x128xf32>
    %143 = tpu.matmul %140, %10, %cst_69 {dimension_numbers = #tpu.dot_dimension_numbers<[1], [0], [0], [1], [0, 0, 1, 1], [], []>} : vector<8x32xf32>, vector<32x128xf32>, vector<8x128xf32> -> vector<8x128xf32>
    %144 = arith.addf %142, %143 : vector<8x128xf32>
    %c3_70 = arith.constant 3 : index
    %c0_71 = arith.constant 0 : index
    %c0_72 = arith.constant 0 : index
    %145 = vector.load %arg9[%c3_70, %c0_71, %c0_72] : memref<6x8x128xf32, #tpu.memory_space<vmem>>, vector<1x8x128xf32>
    %146 = vector.shape_cast %145 : vector<1x8x128xf32> to vector<8x128xf32>
    %147 = vector.shape_cast %144 : vector<8x128xf32> to vector<1x8x128xf32>
    tpu.vector_store %arg9[%c3_70, %c0_71, %c0_72], %147 {strides = array<i32>} : memref<6x8x128xf32, #tpu.memory_space<vmem>>, vector<1x8x128xf32>,
    %c2_73 = arith.constant 2 : index
    %c0_74 = arith.constant 0 : index
    %c0_75 = arith.constant 0 : index
    %148 = vector.load %arg9[%c2_73, %c0_74, %c0_75] : memref<6x8x128xf32, #tpu.memory_space<vmem>>, vector<1x8x128xf32>
    %149 = vector.shape_cast %148 : vector<1x8x128xf32> to vector<8x128xf32>
    %cst_76 = arith.constant dense<0.000000e+00> : vector<8x128xf32>
    %150 = tpu.matmul %140, %11, %cst_76 {dimension_numbers = #tpu.dot_dimension_numbers<[1], [0], [0], [1], [0, 0, 1, 1], [], []>} : vector<8x32xf32>, vector<32x128xf32>, vector<8x128xf32> -> vector<8x128xf32>
    %151 = arith.addf %149, %150 : vector<8x128xf32>
    %c2_77 = arith.constant 2 : index
    %c0_78 = arith.constant 0 : index
    %c0_79 = arith.constant 0 : index
    %152 = vector.load %arg9[%c2_77, %c0_78, %c0_79] : memref<6x8x128xf32, #tpu.memory_space<vmem>>, vector<1x8x128xf32>
    %153 = vector.shape_cast %152 : vector<1x8x128xf32> to vector<8x128xf32>
    %154 = vector.shape_cast %151 : vector<8x128xf32> to vector<1x8x128xf32>
    tpu.vector_store %arg9[%c2_77, %c0_78, %c0_79], %154 {strides = array<i32>} : memref<6x8x128xf32, #tpu.memory_space<vmem>>, vector<1x8x128xf32>,
    %155 = vector.extract_strided_slice %8 {offsets = [4, 0, 0], sizes = [1, 8, 128], strides = [1, 1, 1]} : vector<6x8x128xf32> to vector<1x8x128xf32>
    %156 = vector.shape_cast %155 : vector<1x8x128xf32> to vector<8x128xf32>
    %cst_80 = arith.constant dense<0.000000e+00> : vector<8x128xf32>
    %157 = tpu.matmul %140, %9, %cst_80 {dimension_numbers = #tpu.dot_dimension_numbers<[1], [0], [0], [1], [0, 0, 1, 1], [], []>} : vector<8x32xf32>, vector<32x128xf32>, vector<8x128xf32> -> vector<8x128xf32>
    %158 = arith.addf %156, %157 : vector<8x128xf32>
    %159 = vector.extract_strided_slice %158 {offsets = [0, 0], sizes = [8, 96], strides = [1, 1]} : vector<8x128xf32> to vector<8x96xf32>
    %160 = arith.negf %159 : vector<8x96xf32>
    %161 = math.exp %160 : vector<8x96xf32>
    %cst_81 = arith.constant 1.000000e+00 : f32
    %162 = vector.broadcast %cst_81 : f32 to vector<8x96xf32>
    %163 = arith.addf %162, %161 : vector<8x96xf32>
    %164 = arith.divf %162, %163 : vector<8x96xf32>
    %165 = vector.extract_strided_slice %158 {offsets = [0, 96], sizes = [8, 32], strides = [1, 1]} : vector<8x128xf32> to vector<8x32xf32>
    %166 = math.tanh %165 : vector<8x32xf32>
    %167 = vector.extract_strided_slice %164 {offsets = [0, 32], sizes = [8, 32], strides = [1, 1]} : vector<8x96xf32> to vector<8x32xf32>
    %168 = arith.mulf %167, %137 : vector<8x32xf32>
    %169 = vector.extract_strided_slice %164 {offsets = [0, 0], sizes = [8, 32], strides = [1, 1]} : vector<8x96xf32> to vector<8x32xf32>
    %170 = arith.mulf %169, %166 : vector<8x32xf32>
    %171 = arith.addf %168, %170 : vector<8x32xf32>
    %172 = vector.extract_strided_slice %164 {offsets = [0, 64], sizes = [8, 32], strides = [1, 1]} : vector<8x96xf32> to vector<8x32xf32>
    %173 = math.tanh %171 : vector<8x32xf32>
    %174 = arith.mulf %172, %173 : vector<8x32xf32>
    %c4_82 = arith.constant 4 : index
    %c0_83 = arith.constant 0 : index
    %c0_84 = arith.constant 0 : index
    %175 = vector.load %arg9[%c4_82, %c0_83, %c0_84] : memref<6x8x128xf32, #tpu.memory_space<vmem>>, vector<1x8x128xf32>
    %176 = vector.shape_cast %175 : vector<1x8x128xf32> to vector<8x128xf32>
    %cst_85 = arith.constant dense<0.000000e+00> : vector<8x128xf32>
    %177 = tpu.matmul %174, %10, %cst_85 {dimension_numbers = #tpu.dot_dimension_numbers<[1], [0], [0], [1], [0, 0, 1, 1], [], []>} : vector<8x32xf32>, vector<32x128xf32>, vector<8x128xf32> -> vector<8x128xf32>
    %178 = arith.addf %176, %177 : vector<8x128xf32>
    %c4_86 = arith.constant 4 : index
    %c0_87 = arith.constant 0 : index
    %c0_88 = arith.constant 0 : index
    %179 = vector.load %arg9[%c4_86, %c0_87, %c0_88] : memref<6x8x128xf32, #tpu.memory_space<vmem>>, vector<1x8x128xf32>
    %180 = vector.shape_cast %179 : vector<1x8x128xf32> to vector<8x128xf32>
    %181 = vector.shape_cast %178 : vector<8x128xf32> to vector<1x8x128xf32>
    tpu.vector_store %arg9[%c4_86, %c0_87, %c0_88], %181 {strides = array<i32>} : memref<6x8x128xf32, #tpu.memory_space<vmem>>, vector<1x8x128xf32>,
    %c1_89 = arith.constant 1 : index
    %c0_90 = arith.constant 0 : index
    %c0_91 = arith.constant 0 : index
    %182 = vector.load %arg9[%c1_89, %c0_90, %c0_91] : memref<6x8x128xf32, #tpu.memory_space<vmem>>, vector<1x8x128xf32>
    %183 = vector.shape_cast %182 : vector<1x8x128xf32> to vector<8x128xf32>
    %cst_92 = arith.constant dense<0.000000e+00> : vector<8x128xf32>
    %184 = tpu.matmul %174, %11, %cst_92 {dimension_numbers = #tpu.dot_dimension_numbers<[1], [0], [0], [1], [0, 0, 1, 1], [], []>} : vector<8x32xf32>, vector<32x128xf32>, vector<8x128xf32> -> vector<8x128xf32>
    %185 = arith.addf %183, %184 : vector<8x128xf32>
    %c1_93 = arith.constant 1 : index
    %c0_94 = arith.constant 0 : index
    %c0_95 = arith.constant 0 : index
    %186 = vector.load %arg9[%c1_93, %c0_94, %c0_95] : memref<6x8x128xf32, #tpu.memory_space<vmem>>, vector<1x8x128xf32>
    %187 = vector.shape_cast %186 : vector<1x8x128xf32> to vector<8x128xf32>
    %188 = vector.shape_cast %185 : vector<8x128xf32> to vector<1x8x128xf32>
    tpu.vector_store %arg9[%c1_93, %c0_94, %c0_95], %188 {strides = array<i32>} : memref<6x8x128xf32, #tpu.memory_space<vmem>>, vector<1x8x128xf32>,
    %189 = vector.extract_strided_slice %8 {offsets = [5, 0, 0], sizes = [1, 8, 128], strides = [1, 1, 1]} : vector<6x8x128xf32> to vector<1x8x128xf32>
    %190 = vector.shape_cast %189 : vector<1x8x128xf32> to vector<8x128xf32>
    %cst_96 = arith.constant dense<0.000000e+00> : vector<8x128xf32>
    %191 = tpu.matmul %174, %9, %cst_96 {dimension_numbers = #tpu.dot_dimension_numbers<[1], [0], [0], [1], [0, 0, 1, 1], [], []>} : vector<8x32xf32>, vector<32x128xf32>, vector<8x128xf32> -> vector<8x128xf32>
    %192 = arith.addf %190, %191 : vector<8x128xf32>
    %193 = vector.extract_strided_slice %192 {offsets = [0, 0], sizes = [8, 96], strides = [1, 1]} : vector<8x128xf32> to vector<8x96xf32>
    %194 = arith.negf %193 : vector<8x96xf32>
    %195 = math.exp %194 : vector<8x96xf32>
    %cst_97 = arith.constant 1.000000e+00 : f32
    %196 = vector.broadcast %cst_97 : f32 to vector<8x96xf32>
    %197 = arith.addf %196, %195 : vector<8x96xf32>
    %198 = arith.divf %196, %197 : vector<8x96xf32>
    %199 = vector.extract_strided_slice %192 {offsets = [0, 96], sizes = [8, 32], strides = [1, 1]} : vector<8x128xf32> to vector<8x32xf32>
    %200 = math.tanh %199 : vector<8x32xf32>
    %201 = vector.extract_strided_slice %198 {offsets = [0, 32], sizes = [8, 32], strides = [1, 1]} : vector<8x96xf32> to vector<8x32xf32>
    %202 = arith.mulf %201, %171 : vector<8x32xf32>
    %203 = vector.extract_strided_slice %198 {offsets = [0, 0], sizes = [8, 32], strides = [1, 1]} : vector<8x96xf32> to vector<8x32xf32>
    %204 = arith.mulf %203, %200 : vector<8x32xf32>
    %205 = arith.addf %202, %204 : vector<8x32xf32>
    %206 = vector.extract_strided_slice %198 {offsets = [0, 64], sizes = [8, 32], strides = [1, 1]} : vector<8x96xf32> to vector<8x32xf32>
    %207 = math.tanh %205 : vector<8x32xf32>
    %208 = arith.mulf %206, %207 : vector<8x32xf32>
    %c5_98 = arith.constant 5 : index
    %c0_99 = arith.constant 0 : index
    %c0_100 = arith.constant 0 : index
    %209 = vector.load %arg9[%c5_98, %c0_99, %c0_100] : memref<6x8x128xf32, #tpu.memory_space<vmem>>, vector<1x8x128xf32>
    %210 = vector.shape_cast %209 : vector<1x8x128xf32> to vector<8x128xf32>
    %cst_101 = arith.constant dense<0.000000e+00> : vector<8x128xf32>
    %211 = tpu.matmul %208, %10, %cst_101 {dimension_numbers = #tpu.dot_dimension_numbers<[1], [0], [0], [1], [0, 0, 1, 1], [], []>} : vector<8x32xf32>, vector<32x128xf32>, vector<8x128xf32> -> vector<8x128xf32>
    %212 = arith.addf %210, %211 : vector<8x128xf32>
    %c5_102 = arith.constant 5 : index
    %c0_103 = arith.constant 0 : index
    %c0_104 = arith.constant 0 : index
    %213 = vector.load %arg9[%c5_102, %c0_103, %c0_104] : memref<6x8x128xf32, #tpu.memory_space<vmem>>, vector<1x8x128xf32>
    %214 = vector.shape_cast %213 : vector<1x8x128xf32> to vector<8x128xf32>
    %215 = vector.shape_cast %212 : vector<8x128xf32> to vector<1x8x128xf32>
    tpu.vector_store %arg9[%c5_102, %c0_103, %c0_104], %215 {strides = array<i32>} : memref<6x8x128xf32, #tpu.memory_space<vmem>>, vector<1x8x128xf32>,
    %c0_105 = arith.constant 0 : index
    %c0_106 = arith.constant 0 : index
    %c0_107 = arith.constant 0 : index
    %216 = vector.load %arg9[%c0_105, %c0_106, %c0_107] : memref<6x8x128xf32, #tpu.memory_space<vmem>>, vector<1x8x128xf32>
    %217 = vector.shape_cast %216 : vector<1x8x128xf32> to vector<8x128xf32>
    %cst_108 = arith.constant dense<0.000000e+00> : vector<8x128xf32>
    %218 = tpu.matmul %208, %11, %cst_108 {dimension_numbers = #tpu.dot_dimension_numbers<[1], [0], [0], [1], [0, 0, 1, 1], [], []>} : vector<8x32xf32>, vector<32x128xf32>, vector<8x128xf32> -> vector<8x128xf32>
    %219 = arith.addf %217, %218 : vector<8x128xf32>
    %c0_109 = arith.constant 0 : index
    %c0_110 = arith.constant 0 : index
    %c0_111 = arith.constant 0 : index
    %220 = vector.load %arg9[%c0_109, %c0_110, %c0_111] : memref<6x8x128xf32, #tpu.memory_space<vmem>>, vector<1x8x128xf32>
    %221 = vector.shape_cast %220 : vector<1x8x128xf32> to vector<8x128xf32>
    %222 = vector.shape_cast %219 : vector<8x128xf32> to vector<1x8x128xf32>
    tpu.vector_store %arg9[%c0_109, %c0_110, %c0_111], %222 {strides = array<i32>} : memref<6x8x128xf32, #tpu.memory_space<vmem>>, vector<1x8x128xf32>,
    return
  }
}

</mosaic_0001>

<llo_original>
// kernel: reverse
$region0: #{reverse}
  %s0 = inlined_call_operand.vmem [shape: f32[8,16], index: 0, kind: input, shape index: {}]
  %s1 = inlined_call_operand.vmem [shape: f32[8,16], index: 1, kind: output, shape index: {}]
  $region1: #{reverse} parent=0
    #allocation0 [shape = 'u8[4096]{0}', space=vmem, size = 0x1000, scoped, tag = 'operand span for operand 0']
    #allocation1 [shape = 'u8[4096]{0}', space=vmem, size = 0x1000, scoped, tag = 'operand span for operand 1']
    // Predicated region
    $region2: #{reverse} parent=1 // pred_check
      _
    $region3: #{reverse} parent=1 // pred_check_branch
      %3 = sbr.rel (0) target = $region5
    $region4: #{reverse} parent=1 // pred_region
      // Predicated region
      $region6: #{reverse} parent=4 // pred_check
        _
      $region7: #{reverse} parent=4 // pred_check_branch
        %5 = sbr.rel (0) target = $region9
      $region8: #{reverse} parent=4 // pred_region
        // Predicated region
        $region21: #{reverse} parent=8 // pred_check
          _
        $region22: #{reverse} parent=8 // pred_check_branch
          %21 = sbr.rel (0) target = $region24
        $region23: #{reverse} parent=8 // pred_region
          loop: start=0, step=1, limit=1
          $region25: #{reverse} parent=23 // loop_pre_header
            _
          $region26: #{reverse} parent=23 // loop_header
            %s23 = sphi 0, %s27
            %p24 = scmp.ge.s32.totalorder %s23, 1
            %s28 = sphi %s0, %s0
            %s29 = sphi [#allocation0], [#allocation0]
          $region27: #{reverse} parent=23 // loop_header_branch
            %26 = sbr.rel (%p24) target = $region31
          $region28: #{reverse} parent=23 // loop_body
            %v30 = vld [vmem:[%s28] sm:$0xff]
            %31 = vst [vmem:[%s29] sm:$0xff] %v30
          $region29: #{reverse} parent=23 // loop_footer
            %s27 = sadd.s32 1, %s23
          $region30: #{reverse} parent=23 // loop_footer_branch
            %22 = sbr.rel target = $region26
          $region31: #{reverse} parent=23 // loop_exit
            _
        $region24: #{reverse} parent=8 // pred_fallthru
          _
        // Predicated region
        $region32: #{reverse} parent=8 // pred_check
          _
        $region33: #{reverse} parent=8 // pred_check_branch
          %33 = sbr.rel target = $region35
        $region34: #{reverse} parent=8 // pred_region
          _
        $region35: #{reverse} parent=8 // pred_fallthru
          _
      $region9: #{reverse} parent=4 // pred_fallthru
        _
      // Predicated region
      $region10: #{reverse} parent=4 // pred_check
        _
      $region11: #{reverse} parent=4 // pred_check_branch
        %7 = sbr.rel target = $region13
      $region12: #{reverse} parent=4 // pred_region
        %s9 = ssub.s32 256, 1
        loop: start=0, step=1, limit=1
        $region14: #{reverse} parent=12 // loop_pre_header
          _
        $region15: #{reverse} parent=12 // loop_header
          %s11 = sphi 0, %s15
          %p12 = scmp.ge.s32.totalorder %s11, 1
          %s16 = sphi %s0, %s0
          %s17 = sphi [#allocation0], [#allocation0]
        $region16: #{reverse} parent=12 // loop_header_branch
          %14 = sbr.rel (%p12) target = $region20
        $region17: #{reverse} parent=12 // loop_body
          %v18 = vld [vmem:[%s16] sm:%s9]
          %19 = vst [vmem:[%s17] sm:%s9] %v18
        $region18: #{reverse} parent=12 // loop_footer
          %s15 = sadd.s32 1, %s11
        $region19: #{reverse} parent=12 // loop_footer_branch
          %10 = sbr.rel target = $region15
        $region20: #{reverse} parent=12 // loop_exit
          _
      $region13: #{reverse} parent=4 // pred_fallthru
        _
    $region5: #{reverse} parent=1 // pred_fallthru
      _
    %34 = vnop
    %s35 = scalar_lea.vmem [#allocation0], 7
    %v36 = vld [vmem:[%s35] ss:$-1 sm:$0xff]
    %37 = vst [vmem:[#allocation1] sm:$0xff] %v36
    // Predicated region
    $region36: #{reverse} parent=1 // pred_check
      _
    $region37: #{reverse} parent=1 // pred_check_branch
      %39 = sbr.rel (0) target = $region39
    $region38: #{reverse} parent=1 // pred_region
      // Predicated region
      $region40: #{reverse} parent=38 // pred_check
        _
      $region41: #{reverse} parent=38 // pred_check_branch
        %41 = sbr.rel (0) target = $region43
      $region42: #{reverse} parent=38 // pred_region
        // Predicated region
        $region55: #{reverse} parent=42 // pred_check
          _
        $region56: #{reverse} parent=42 // pred_check_branch
          %57 = sbr.rel (0) target = $region58
        $region57: #{reverse} parent=42 // pred_region
          loop: start=0, step=1, limit=1
          $region59: #{reverse} parent=57 // loop_pre_header
            _
          $region60: #{reverse} parent=57 // loop_header
            %s59 = sphi 0, %s63
            %p60 = scmp.ge.s32.totalorder %s59, 1
            %s64 = sphi [#allocation1], [#allocation1]
            %s65 = sphi %s1, %s1
          $region61: #{reverse} parent=57 // loop_header_branch
            %62 = sbr.rel (%p60) target = $region65
          $region62: #{reverse} parent=57 // loop_body
            %v66 = vld [vmem:[%s64] sm:$0xff]
            %67 = vst [vmem:[%s65] sm:$0xff] %v66
          $region63: #{reverse} parent=57 // loop_footer
            %s63 = sadd.s32 1, %s59
          $region64: #{reverse} parent=57 // loop_footer_branch
            %58 = sbr.rel target = $region60
          $region65: #{reverse} parent=57 // loop_exit
            _
        $region58: #{reverse} parent=42 // pred_fallthru
          _
        // Predicated region
        $region66: #{reverse} parent=42 // pred_check
          _
        $region67: #{reverse} parent=42 // pred_check_branch
          %69 = sbr.rel target = $region69
        $region68: #{reverse} parent=42 // pred_region
          _
        $region69: #{reverse} parent=42 // pred_fallthru
          _
      $region43: #{reverse} parent=38 // pred_fallthru
        _
      // Predicated region
      $region44: #{reverse} parent=38 // pred_check
        _
      $region45: #{reverse} parent=38 // pred_check_branch
        %43 = sbr.rel target = $region47
      $region46: #{reverse} parent=38 // pred_region
        %s45 = ssub.s32 256, 1
        loop: start=0, step=1, limit=1
        $region48: #{reverse} parent=46 // loop_pre_header
          _
        $region49: #{reverse} parent=46 // loop_header
          %s47 = sphi 0, %s51
          %p48 = scmp.ge.s32.totalorder %s47, 1
          %s52 = sphi [#allocation1], [#allocation1]
          %s53 = sphi %s1, %s1
        $region50: #{reverse} parent=46 // loop_header_branch
          %50 = sbr.rel (%p48) target = $region54
        $region51: #{reverse} parent=46 // loop_body
          %v54 = vld [vmem:[%s52] sm:%s45]
          %55 = vst [vmem:[%s53] sm:%s45] %v54
        $region52: #{reverse} parent=46 // loop_footer
          %s51 = sadd.s32 1, %s47
        $region53: #{reverse} parent=46 // loop_footer_branch
          %46 = sbr.rel target = $region49
        $region54: #{reverse} parent=46 // loop_exit
          _
      $region47: #{reverse} parent=38 // pred_fallthru
        _
    $region39: #{reverse} parent=1 // pred_fallthru
      _
    %70 = vnop

// kernel: bilstm_crf_forward.2
$region0: #{bilstm_crf_forward.2}
  #allocation0 [shape = 'u32[]', space=smem, size = 0x4, offset = 0x4, fixed_abs, tag = 'smem constant byte address 0x4 - core index']
  #allocation1 [shape = 'u32[144,128]{1,0:T(1,128)}', space=vmem, size = 0x12000, scoped, tag = 'internal scratch']
  %s0 = inlined_call_operand.vmem [shape: f32[8,16,32], index: 0, kind: input, shape index: {}]
  %s1 = inlined_call_operand.vmem [shape: f32[8,16,1], index: 1, kind: input, shape index: {}]
  %s2 = inlined_call_operand.vmem [shape: f32[8,16,1], index: 2, kind: input, shape index: {}]
  %s3 = inlined_call_operand.vmem [shape: f32[16,32], index: 3, kind: input, shape index: {}]
  %s4 = inlined_call_operand.vmem [shape: f32[16,32], index: 4, kind: input, shape index: {}]
  %s5 = inlined_call_operand.vmem [shape: bf16[32,32], index: 5, kind: input, shape index: {}]
  %s6 = inlined_call_operand.vmem [shape: f32[1,32], index: 6, kind: input, shape index: {}]
  %s7 = inlined_call_operand.vmem [shape: bf16[32,128], index: 7, kind: input, shape index: {}]
  %s8 = inlined_call_operand.vmem [shape: f32[1,128], index: 8, kind: input, shape index: {}]
  %s9 = inlined_call_operand.vmem [shape: f32[32,128], index: 9, kind: input, shape index: {}]
  %s10 = inlined_call_operand.vmem [shape: f32[32,128], index: 10, kind: input, shape index: {}]
  %s11 = inlined_call_operand.vmem [shape: f32[1,128], index: 11, kind: input, shape index: {}]
  %s12 = inlined_call_operand.vmem [shape: f32[16,128], index: 12, kind: output, shape index: {}]
  %s13 = sld [smem:[#allocation0]]
  $region195: #{bilstm_crf_forward.2} parent=0
    _
  %s15 = ssub.s32 1, %s13
  %s16 = scalar_select 0, %s15, %s13
  $region1: #{bilstm_crf_forward.2} parent=0
    #allocation2 [shape = 'u8[65536]{0}', space=vmem, size = 0x10000, scoped, tag = 'input window, operand 0']
    #allocation3 [shape = 'u8[65536]{0}', space=vmem, size = 0x10000, scoped, tag = 'input window, operand 1']
    #allocation4 [shape = 'u8[65536]{0}', space=vmem, size = 0x10000, scoped, tag = 'input window, operand 2']
    loop: start=0, step=1, limit=4
    $region2: #{bilstm_crf_forward.2} parent=1 // loop_pre_header
      _
    $region3: #{bilstm_crf_forward.2} parent=1 // loop_header
      %s18 = sphi 0, %s22
      %p19 = scmp.ge.s32.totalorder %s18, 4
      %s28 = sphi 0, %s30
      %s31 = sphi 0, %s28
      %s32 = sphi 0, %s31
      %s48 = sphi 0, %s32
      %s54 = sphi 0, %s56
      %s57 = sphi 0, %s54
      %s58 = sphi 0, %s57
      %s74 = sphi 0, %s58
      %s80 = sphi 0, %s82
      %s83 = sphi 0, %s80
      %s84 = sphi 0, %s83
      %s100 = sphi 0, %s84
      %s106 = sphi 0, %s108
      %s109 = sphi 0, %s106
      %s110 = sphi 0, %s109
      %s126 = sphi 0, %s110
      %s132 = sphi 0, %s134
      %s135 = sphi 0, %s132
      %s136 = sphi 0, %s135
      %s152 = sphi 0, %s136
      %s156 = sphi 0, %s156
      %s158 = sphi 0, %s156
      %s159 = sphi 0, %s158
      %s173 = sphi 0, %s159
      %s177 = sphi 0, %s177
      %s179 = sphi 0, %s177
      %s180 = sphi 0, %s179
      %s194 = sphi 0, %s180
      %s198 = sphi 0, %s198
      %s200 = sphi 0, %s198
      %s201 = sphi 0, %s200
      %s215 = sphi 0, %s201
      %s219 = sphi 0, %s219
      %s221 = sphi 0, %s219
      %s222 = sphi 0, %s221
      %s236 = sphi 0, %s222
      %s240 = sphi 0, %s240
      %s242 = sphi 0, %s240
      %s243 = sphi 0, %s242
      %s257 = sphi 0, %s243
      %s261 = sphi 0, %s261
      %s263 = sphi 0, %s261
      %s264 = sphi 0, %s263
      %s278 = sphi 0, %s264
      %s282 = sphi 0, %s282
      %s284 = sphi 0, %s282
      %s285 = sphi 0, %s284
      %s299 = sphi 0, %s285
      %s305 = sphi 0, %s307
      %s308 = sphi 0, %s305
      %s309 = sphi 0, %s308
      %s325 = sphi 0, %s309
    $region4: #{bilstm_crf_forward.2} parent=1 // loop_header_branch
      %21 = sbr.rel (%p19) target = $region8
    $region5: #{bilstm_crf_forward.2} parent=1 // loop_body
      %s23 = ssub.s32 %s18, 1
      %s24 = ssub.s32 %s18, 2
      %s25 = sadd.s32 %s18, 1
      %s26 = ssub.s32 %s18, %s25
      %p27 = scmp.eq.s32.totalorder %s26, 0
      %s29 = sadd.s32 %s28, 1
      %s30 = scalar_select %p27, %s28, %s29
      %p33 = pneg %p27
      %p34 = scmp.eq.s32.totalorder %s18, 1
      %p35 = por %p33, %p34
      %p36 = scmp.ne.s32.totalorder %s28, %s31
      %p37 = scmp.eq.s32.totalorder %s18, 0
      %p38 = por %p36, %p37
      %p39 = scmp.ne.s32.totalorder %s28, %s31
      %p40 = scmp.eq.s32.totalorder %s23, 1
      %p41 = por %p39, %p40
      %p42 = scmp.ne.s32.totalorder %s31, %s32
      %p43 = scmp.eq.s32.totalorder %s23, 0
      %p44 = por %p42, %p43
      %p45 = scmp.ne.s32.totalorder %s31, %s32
      %p46 = scmp.eq.s32.totalorder %s24, 1
      %p47 = por %p45, %p46
      %p49 = scmp.ne.s32.totalorder %s32, %s48
      %p50 = scmp.eq.s32.totalorder %s24, 0
      %p51 = por %p49, %p50
      %s52 = ssub.s32 %s18, %s25
      %p53 = scmp.eq.s32.totalorder %s52, 0
      %s55 = sadd.s32 %s54, 1
      %s56 = scalar_select %p53, %s54, %s55
      %p59 = pneg %p53
      %p60 = scmp.eq.s32.totalorder %s18, 1
      %p61 = por %p59, %p60
      %p62 = scmp.ne.s32.totalorder %s54, %s57
      %p63 = scmp.eq.s32.totalorder %s18, 0
      %p64 = por %p62, %p63
      %p65 = scmp.ne.s32.totalorder %s54, %s57
      %p66 = scmp.eq.s32.totalorder %s23, 1
      %p67 = por %p65, %p66
      %p68 = scmp.ne.s32.totalorder %s57, %s58
      %p69 = scmp.eq.s32.totalorder %s23, 0
      %p70 = por %p68, %p69
      %p71 = scmp.ne.s32.totalorder %s57, %s58
      %p72 = scmp.eq.s32.totalorder %s24, 1
      %p73 = por %p71, %p72
      %p75 = scmp.ne.s32.totalorder %s58, %s74
      %p76 = scmp.eq.s32.totalorder %s24, 0
      %p77 = por %p75, %p76
      %s78 = ssub.s32 %s18, %s25
      %p79 = scmp.eq.s32.totalorder %s78, 0
      %s81 = sadd.s32 %s80, 1
      %s82 = scalar_select %p79, %s80, %s81
      %p85 = pneg %p79
      %p86 = scmp.eq.s32.totalorder %s18, 1
      %p87 = por %p85, %p86
      %p88 = scmp.ne.s32.totalorder %s80, %s83
      %p89 = scmp.eq.s32.totalorder %s18, 0
      %p90 = por %p88, %p89
      %p91 = scmp.ne.s32.totalorder %s80, %s83
      %p92 = scmp.eq.s32.totalorder %s23, 1
      %p93 = por %p91, %p92
      %p94 = scmp.ne.s32.totalorder %s83, %s84
      %p95 = scmp.eq.s32.totalorder %s23, 0
      %p96 = por %p94, %p95
      %p97 = scmp.ne.s32.totalorder %s83, %s84
      %p98 = scmp.eq.s32.totalorder %s24, 1
      %p99 = por %p97, %p98
      %p101 = scmp.ne.s32.totalorder %s84, %s100
      %p102 = scmp.eq.s32.totalorder %s24, 0
      %p103 = por %p101, %p102
      %s104 = ssub.s32 %s18, %s25
      %p105 = scmp.eq.s32.totalorder %s104, 0
      %s107 = sadd.s32 %s106, 1
      %s108 = scalar_select %p105, %s106, %s107
      %p111 = pneg %p105
      %p112 = scmp.eq.s32.totalorder %s18, 1
      %p113 = por %p111, %p112
      %p114 = scmp.ne.s32.totalorder %s106, %s109
      %p115 = scmp.eq.s32.totalorder %s18, 0
      %p116 = por %p114, %p115
      %p117 = scmp.ne.s32.totalorder %s106, %s109
      %p118 = scmp.eq.s32.totalorder %s23, 1
      %p119 = por %p117, %p118
      %p120 = scmp.ne.s32.totalorder %s109, %s110
      %p121 = scmp.eq.s32.totalorder %s23, 0
      %p122 = por %p120, %p121
      %p123 = scmp.ne.s32.totalorder %s109, %s110
      %p124 = scmp.eq.s32.totalorder %s24, 1
      %p125 = por %p123, %p124
      %p127 = scmp.ne.s32.totalorder %s110, %s126
      %p128 = scmp.eq.s32.totalorder %s24, 0
      %p129 = por %p127, %p128
      %s130 = ssub.s32 %s18, %s25
      %p131 = scmp.eq.s32.totalorder %s130, 0
      %s133 = sadd.s32 %s132, 1
      %s134 = scalar_select %p131, %s132, %s133
      %p137 = pneg %p131
      %p138 = scmp.eq.s32.totalorder %s18, 1
      %p139 = por %p137, %p138
      %p140 = scmp.ne.s32.totalorder %s132, %s135
      %p141 = scmp.eq.s32.totalorder %s18, 0
      %p142 = por %p140, %p141
      %p143 = scmp.ne.s32.totalorder %s132, %s135
      %p144 = scmp.eq.s32.totalorder %s23, 1
      %p145 = por %p143, %p144
      %p146 = scmp.ne.s32.totalorder %s135, %s136
      %p147 = scmp.eq.s32.totalorder %s23, 0
      %p148 = por %p146, %p147
      %p149 = scmp.ne.s32.totalorder %s135, %s136
      %p150 = scmp.eq.s32.totalorder %s24, 1
      %p151 = por %p149, %p150
      %p153 = scmp.ne.s32.totalorder %s136, %s152
      %p154 = scmp.eq.s32.totalorder %s24, 0
      %p155 = por %p153, %p154
      %s157 = sadd.s32 %s156, 1
      %p160 = scmp.eq.s32.totalorder %s18, 1
      %p161 = scmp.ne.s32.totalorder %s156, %s158
      %p162 = scmp.eq.s32.totalorder %s18, 0
      %p163 = por %p161, %p162
      %p164 = scmp.ne.s32.totalorder %s156, %s158
      %p165 = scmp.eq.s32.totalorder %s23, 1
      %p166 = por %p164, %p165
      %p167 = scmp.ne.s32.totalorder %s158, %s159
      %p168 = scmp.eq.s32.totalorder %s23, 0
      %p169 = por %p167, %p168
      %p170 = scmp.ne.s32.totalorder %s158, %s159
      %p171 = scmp.eq.s32.totalorder %s24, 1
      %p172 = por %p170, %p171
      %p174 = scmp.ne.s32.totalorder %s159, %s173
      %p175 = scmp.eq.s32.totalorder %s24, 0
      %p176 = por %p174, %p175
      %s178 = sadd.s32 %s177, 1
      %p181 = scmp.eq.s32.totalorder %s18, 1
      %p182 = scmp.ne.s32.totalorder %s177, %s179
      %p183 = scmp.eq.s32.totalorder %s18, 0
      %p184 = por %p182, %p183
      %p185 = scmp.ne.s32.totalorder %s177, %s179
      %p186 = scmp.eq.s32.totalorder %s23, 1
      %p187 = por %p185, %p186
      %p188 = scmp.ne.s32.totalorder %s179, %s180
      %p189 = scmp.eq.s32.totalorder %s23, 0
      %p190 = por %p188, %p189
      %p191 = scmp.ne.s32.totalorder %s179, %s180
      %p192 = scmp.eq.s32.totalorder %s24, 1
      %p193 = por %p191, %p192
      %p195 = scmp.ne.s32.totalorder %s180, %s194
      %p196 = scmp.eq.s32.totalorder %s24, 0
      %p197 = por %p195, %p196
      %s199 = sadd.s32 %s198, 1
      %p202 = scmp.eq.s32.totalorder %s18, 1
      %p203 = scmp.ne.s32.totalorder %s198, %s200
      %p204 = scmp.eq.s32.totalorder %s18, 0
      %p205 = por %p203, %p204
      %p206 = scmp.ne.s32.totalorder %s198, %s200
      %p207 = scmp.eq.s32.totalorder %s23, 1
      %p208 = por %p206, %p207
      %p209 = scmp.ne.s32.totalorder %s200, %s201
      %p210 = scmp.eq.s32.totalorder %s23, 0
      %p211 = por %p209, %p210
      %p212 = scmp.ne.s32.totalorder %s200, %s201
      %p213 = scmp.eq.s32.totalorder %s24, 1
      %p214 = por %p212, %p213
      %p216 = scmp.ne.s32.totalorder %s201, %s215
      %p217 = scmp.eq.s32.totalorder %s24, 0
      %p218 = por %p216, %p217
      %s220 = sadd.s32 %s219, 1
      %p223 = scmp.eq.s32.totalorder %s18, 1
      %p224 = scmp.ne.s32.totalorder %s219, %s221
      %p225 = scmp.eq.s32.totalorder %s18, 0
      %p226 = por %p224, %p225
      %p227 = scmp.ne.s32.totalorder %s219, %s221
      %p228 = scmp.eq.s32.totalorder %s23, 1
      %p229 = por %p227, %p228
      %p230 = scmp.ne.s32.totalorder %s221, %s222
      %p231 = scmp.eq.s32.totalorder %s23, 0
      %p232 = por %p230, %p231
      %p233 = scmp.ne.s32.totalorder %s221, %s222
      %p234 = scmp.eq.s32.totalorder %s24, 1
      %p235 = por %p233, %p234
      %p237 = scmp.ne.s32.totalorder %s222, %s236
      %p238 = scmp.eq.s32.totalorder %s24, 0
      %p239 = por %p237, %p238
      %s241 = sadd.s32 %s240, 1
      %p244 = scmp.eq.s32.totalorder %s18, 1
      %p245 = scmp.ne.s32.totalorder %s240, %s242
      %p246 = scmp.eq.s32.totalorder %s18, 0
      %p247 = por %p245, %p246
      %p248 = scmp.ne.s32.totalorder %s240, %s242
      %p249 = scmp.eq.s32.totalorder %s23, 1
      %p250 = por %p248, %p249
      %p251 = scmp.ne.s32.totalorder %s242, %s243
      %p252 = scmp.eq.s32.totalorder %s23, 0
      %p253 = por %p251, %p252
      %p254 = scmp.ne.s32.totalorder %s242, %s243
      %p255 = scmp.eq.s32.totalorder %s24, 1
      %p256 = por %p254, %p255
      %p258 = scmp.ne.s32.totalorder %s243, %s257
      %p259 = scmp.eq.s32.totalorder %s24, 0
      %p260 = por %p258, %p259
      %s262 = sadd.s32 %s261, 1
      %p265 = scmp.eq.s32.totalorder %s18, 1
      %p266 = scmp.ne.s32.totalorder %s261, %s263
      %p267 = scmp.eq.s32.totalorder %s18, 0
      %p268 = por %p266, %p267
      %p269 = scmp.ne.s32.totalorder %s261, %s263
      %p270 = scmp.eq.s32.totalorder %s23, 1
      %p271 = por %p269, %p270
      %p272 = scmp.ne.s32.totalorder %s263, %s264
      %p273 = scmp.eq.s32.totalorder %s23, 0
      %p274 = por %p272, %p273
      %p275 = scmp.ne.s32.totalorder %s263, %s264
      %p276 = scmp.eq.s32.totalorder %s24, 1
      %p277 = por %p275, %p276
      %p279 = scmp.ne.s32.totalorder %s264, %s278
      %p280 = scmp.eq.s32.totalorder %s24, 0
      %p281 = por %p279, %p280
      %s283 = sadd.s32 %s282, 1
      %p286 = scmp.eq.s32.totalorder %s18, 1
      %p287 = scmp.ne.s32.totalorder %s282, %s284
      %p288 = scmp.eq.s32.totalorder %s18, 0
      %p289 = por %p287, %p288
      %p290 = scmp.ne.s32.totalorder %s282, %s284
      %p291 = scmp.eq.s32.totalorder %s23, 1
      %p292 = por %p290, %p291
      %p293 = scmp.ne.s32.totalorder %s284, %s285
      %p294 = scmp.eq.s32.totalorder %s23, 0
      %p295 = por %p293, %p294
      %p296 = scmp.ne.s32.totalorder %s284, %s285
      %p297 = scmp.eq.s32.totalorder %s24, 1
      %p298 = por %p296, %p297
      %p300 = scmp.ne.s32.totalorder %s285, %s299
      %p301 = scmp.eq.s32.totalorder %s24, 0
      %p302 = por %p300, %p301
      %s303 = ssub.s32 %s18, %s25
      %p304 = scmp.eq.s32.totalorder %s303, 0
      %s306 = sadd.s32 %s305, 1
      %s307 = scalar_select %p304, %s305, %s306
      %p310 = pneg %p304
      %p311 = scmp.eq.s32.totalorder %s18, 1
      %p312 = por %p310, %p311
      %p313 = scmp.ne.s32.totalorder %s305, %s308
      %p314 = scmp.eq.s32.totalorder %s18, 0
      %p315 = por %p313, %p314
      %p316 = scmp.ne.s32.totalorder %s305, %s308
      %p317 = scmp.eq.s32.totalorder %s23, 1
      %p318 = por %p316, %p317
      %p319 = scmp.ne.s32.totalorder %s308, %s309
      %p320 = scmp.eq.s32.totalorder %s23, 0
      %p321 = por %p319, %p320
      %p322 = scmp.ne.s32.totalorder %s308, %s309
      %p323 = scmp.eq.s32.totalorder %s24, 1
      %p324 = por %p322, %p323
      %p326 = scmp.ne.s32.totalorder %s309, %s325
      %p327 = scmp.eq.s32.totalorder %s24, 0
      %p328 = por %p326, %p327
      %p329 = scmp.le.s32.totalorder 1, %s18
      %p330 = scmp.lt.s32.totalorder %s18, 3
      %p331 = pnand %p329, %p330
      %p332 = pneg %p331
      // Predicated region
      $region9: #{bilstm_crf_forward.2} parent=5 // pred_check
        _
      $region10: #{bilstm_crf_forward.2} parent=5 // pred_check_branch
        %334 = sbr.rel (%p331) target = $region12
      $region11: #{bilstm_crf_forward.2} parent=5 // pred_region
        %s335 = ssub.s32 %s18, 1
        // Predicated region
        $region13: #{bilstm_crf_forward.2} parent=11 // pred_check
          %p336 = pneg %p169
        $region14: #{bilstm_crf_forward.2} parent=11 // pred_check_branch
          %338 = sbr.rel (%p336) target = $region16
        $region15: #{bilstm_crf_forward.2} parent=11 // pred_region
          _
        $region16: #{bilstm_crf_forward.2} parent=11 // pred_fallthru
          _
        // Predicated region
        $region17: #{bilstm_crf_forward.2} parent=11 // pred_check
          %p339 = pneg %p190
        $region18: #{bilstm_crf_forward.2} parent=11 // pred_check_branch
          %341 = sbr.rel (%p339) target = $region20
        $region19: #{bilstm_crf_forward.2} parent=11 // pred_region
          _
        $region20: #{bilstm_crf_forward.2} parent=11 // pred_fallthru
          _
        // Predicated region
        $region21: #{bilstm_crf_forward.2} parent=11 // pred_check
          %p342 = pneg %p211
        $region22: #{bilstm_crf_forward.2} parent=11 // pred_check_branch
          %344 = sbr.rel (%p342) target = $region24
        $region23: #{bilstm_crf_forward.2} parent=11 // pred_region
          _
        $region24: #{bilstm_crf_forward.2} parent=11 // pred_fallthru
          _
        // Predicated region
        $region25: #{bilstm_crf_forward.2} parent=11 // pred_check
          %p345 = pneg %p232
        $region26: #{bilstm_crf_forward.2} parent=11 // pred_check_branch
          %347 = sbr.rel (%p345) target = $region28
        $region27: #{bilstm_crf_forward.2} parent=11 // pred_region
          _
        $region28: #{bilstm_crf_forward.2} parent=11 // pred_fallthru
          _
        // Predicated region
        $region29: #{bilstm_crf_forward.2} parent=11 // pred_check
          %p348 = pneg %p253
        $region30: #{bilstm_crf_forward.2} parent=11 // pred_check_branch
          %350 = sbr.rel (%p348) target = $region32
        $region31: #{bilstm_crf_forward.2} parent=11 // pred_region
          _
        $region32: #{bilstm_crf_forward.2} parent=11 // pred_fallthru
          _
        // Predicated region
        $region33: #{bilstm_crf_forward.2} parent=11 // pred_check
          %p351 = pneg %p274
        $region34: #{bilstm_crf_forward.2} parent=11 // pred_check_branch
          %353 = sbr.rel (%p351) target = $region36
        $region35: #{bilstm_crf_forward.2} parent=11 // pred_region
          _
        $region36: #{bilstm_crf_forward.2} parent=11 // pred_fallthru
          _
        // Predicated region
        $region37: #{bilstm_crf_forward.2} parent=11 // pred_check
          %p354 = pneg %p295
        $region38: #{bilstm_crf_forward.2} parent=11 // pred_check_branch
          %356 = sbr.rel (%p354) target = $region40
        $region39: #{bilstm_crf_forward.2} parent=11 // pred_region
          _
        $region40: #{bilstm_crf_forward.2} parent=11 // pred_fallthru
          _
      $region12: #{bilstm_crf_forward.2} parent=5 // pred_fallthru
        _
      %p357 = scmp.lt.s32.totalorder %s18, 2
      // Predicated region
      $region41: #{bilstm_crf_forward.2} parent=5 // pred_check
        %p358 = pneg %p357
      $region42: #{bilstm_crf_forward.2} parent=5 // pred_check_branch
        %360 = sbr.rel (%p358) target = $region44
      $region43: #{bilstm_crf_forward.2} parent=5 // pred_region
        // Predicated region
        $region45: #{bilstm_crf_forward.2} parent=43 // pred_check
          %p361 = pneg %p38
        $region46: #{bilstm_crf_forward.2} parent=43 // pred_check_branch
          %363 = sbr.rel (%p361) target = $region48
        $region47: #{bilstm_crf_forward.2} parent=43 // pred_region
          %s364 = sand.u32 %s28, 1
          %s365 = sand.u32 %s28, 1
          %s366 = smul.addr %s365, 64
          %s367 = scalar_lea.vmem [#allocation2], %s366
          %s368 = smul.addr %s18, 8
          %s369 = scalar_lea.vmem %s0, %s368
          // Predicated region
          $region49: #{bilstm_crf_forward.2} parent=47 // pred_check
            _
          $region50: #{bilstm_crf_forward.2} parent=47 // pred_check_branch
            %371 = sbr.rel (0) target = $region52
          $region51: #{bilstm_crf_forward.2} parent=47 // pred_region
            // Predicated region
            $region53: #{bilstm_crf_forward.2} parent=51 // pred_check
              _
            $region54: #{bilstm_crf_forward.2} parent=51 // pred_check_branch
              %373 = sbr.rel (0) target = $region56
            $region55: #{bilstm_crf_forward.2} parent=51 // pred_region
              // Predicated region
              $region68: #{bilstm_crf_forward.2} parent=55 // pred_check
                _
              $region69: #{bilstm_crf_forward.2} parent=55 // pred_check_branch
                %403 = sbr.rel (0) target = $region71
              $region70: #{bilstm_crf_forward.2} parent=55 // pred_region
                loop: start=0, step=1, limit=1
                $region72: #{bilstm_crf_forward.2} parent=70 // loop_pre_header
                  _
                $region73: #{bilstm_crf_forward.2} parent=70 // loop_header
                  %s405 = sphi 0, %s409
                  %p406 = scmp.ge.s32.totalorder %s405, 1
                  %s410 = sphi %s369, %s369
                  %s411 = sphi %s367, %s367
                $region74: #{bilstm_crf_forward.2} parent=70 // loop_header_branch
                  %408 = sbr.rel (%p406) target = $region78
                $region75: #{bilstm_crf_forward.2} parent=70 // loop_body
                  %v412 = vld [vmem:[%s410] sm:$0xff]
                  %413 = vst [vmem:[%s411] sm:$0xff] %v412
                  %v414 = vld [vmem:[%s410 + $0x10] sm:$0xff]
                  %415 = vst [vmem:[%s411 + $0x8] sm:$0xff] %v414
                  %v416 = vld [vmem:[%s410 + $0x20] sm:$0xff]
                  %417 = vst [vmem:[%s411 + $0x10] sm:$0xff] %v416
                  %v418 = vld [vmem:[%s410 + $0x30] sm:$0xff]
                  %419 = vst [vmem:[%s411 + $0x18] sm:$0xff] %v418
                  %v420 = vld [vmem:[%s410 + $0x40] sm:$0xff]
                  %421 = vst [vmem:[%s411 + $0x20] sm:$0xff] %v420
                  %v422 = vld [vmem:[%s410 + $0x50] sm:$0xff]
                  %423 = vst [vmem:[%s411 + $0x28] sm:$0xff] %v422
                  %v424 = vld [vmem:[%s410 + $0x60] sm:$0xff]
                  %425 = vst [vmem:[%s411 + $0x30] sm:$0xff] %v424
                  %v426 = vld [vmem:[%s410 + $0x70] sm:$0xff]
                  %427 = vst [vmem:[%s411 + $0x38] sm:$0xff] %v426
                $region76: #{bilstm_crf_forward.2} parent=70 // loop_footer
                  %s409 = sadd.s32 1, %s405
                $region77: #{bilstm_crf_forward.2} parent=70 // loop_footer_branch
                  %404 = sbr.rel target = $region73
                $region78: #{bilstm_crf_forward.2} parent=70 // loop_exit
                  _
              $region71: #{bilstm_crf_forward.2} parent=55 // pred_fallthru
                _
              // Predicated region
              $region79: #{bilstm_crf_forward.2} parent=55 // pred_check
                _
              $region80: #{bilstm_crf_forward.2} parent=55 // pred_check_branch
                %429 = sbr.rel target = $region82
              $region81: #{bilstm_crf_forward.2} parent=55 // pred_region
                _
              $region82: #{bilstm_crf_forward.2} parent=55 // pred_fallthru
                _
            $region56: #{bilstm_crf_forward.2} parent=51 // pred_fallthru
              _
            // Predicated region
            $region57: #{bilstm_crf_forward.2} parent=51 // pred_check
              _
            $region58: #{bilstm_crf_forward.2} parent=51 // pred_check_branch
              %375 = sbr.rel target = $region60
            $region59: #{bilstm_crf_forward.2} parent=51 // pred_region
              %s377 = ssub.s32 256, 1
              loop: start=0, step=1, limit=1
              $region61: #{bilstm_crf_forward.2} parent=59 // loop_pre_header
                _
              $region62: #{bilstm_crf_forward.2} parent=59 // loop_header
                %s379 = sphi 0, %s383
                %p380 = scmp.ge.s32.totalorder %s379, 1
                %s384 = sphi %s369, %s369
                %s385 = sphi %s367, %s367
              $region63: #{bilstm_crf_forward.2} parent=59 // loop_header_branch
                %382 = sbr.rel (%p380) target = $region67
              $region64: #{bilstm_crf_forward.2} parent=59 // loop_body
                %v386 = vld [vmem:[%s384] sm:%s377]
                %387 = vst [vmem:[%s385] sm:%s377] %v386
                %v388 = vld [vmem:[%s384 + $0x10] sm:%s377]
                %389 = vst [vmem:[%s385 + $0x8] sm:%s377] %v388
                %v390 = vld [vmem:[%s384 + $0x20] sm:%s377]
                %391 = vst [vmem:[%s385 + $0x10] sm:%s377] %v390
                %v392 = vld [vmem:[%s384 + $0x30] sm:%s377]
                %393 = vst [vmem:[%s385 + $0x18] sm:%s377] %v392
                %v394 = vld [vmem:[%s384 + $0x40] sm:%s377]
                %395 = vst [vmem:[%s385 + $0x20] sm:%s377] %v394
                %v396 = vld [vmem:[%s384 + $0x50] sm:%s377]
                %397 = vst [vmem:[%s385 + $0x28] sm:%s377] %v396
                %v398 = vld [vmem:[%s384 + $0x60] sm:%s377]
                %399 = vst [vmem:[%s385 + $0x30] sm:%s377] %v398
                %v400 = vld [vmem:[%s384 + $0x70] sm:%s377]
                %401 = vst [vmem:[%s385 + $0x38] sm:%s377] %v400
              $region65: #{bilstm_crf_forward.2} parent=59 // loop_footer
                %s383 = sadd.s32 1, %s379
              $region66: #{bilstm_crf_forward.2} parent=59 // loop_footer_branch
                %378 = sbr.rel target = $region62
              $region67: #{bilstm_crf_forward.2} parent=59 // loop_exit
                _
            $region60: #{bilstm_crf_forward.2} parent=51 // pred_fallthru
              _
          $region52: #{bilstm_crf_forward.2} parent=47 // pred_fallthru
            _
          %430 = vnop
        $region48: #{bilstm_crf_forward.2} parent=43 // pred_fallthru
          _
        // Predicated region
        $region83: #{bilstm_crf_forward.2} parent=43 // pred_check
          %p431 = pneg %p64
        $region84: #{bilstm_crf_forward.2} parent=43 // pred_check_branch
          %433 = sbr.rel (%p431) target = $region86
        $region85: #{bilstm_crf_forward.2} parent=43 // pred_region
          %s434 = sand.u32 %s54, 1
          %s435 = sand.u32 %s54, 1
          %s436 = smul.addr %s435, 64
          %s437 = scalar_lea.vmem [#allocation3], %s436
          %s438 = smul.addr %s18, 8
          %s439 = scalar_lea.vmem %s1, %s438
          // Predicated region
          $region87: #{bilstm_crf_forward.2} parent=85 // pred_check
            _
          $region88: #{bilstm_crf_forward.2} parent=85 // pred_check_branch
            %441 = sbr.rel (0) target = $region90
          $region89: #{bilstm_crf_forward.2} parent=85 // pred_region
            // Predicated region
            $region91: #{bilstm_crf_forward.2} parent=89 // pred_check
              _
            $region92: #{bilstm_crf_forward.2} parent=89 // pred_check_branch
              %443 = sbr.rel (0) target = $region94
            $region93: #{bilstm_crf_forward.2} parent=89 // pred_region
              // Predicated region
              $region106: #{bilstm_crf_forward.2} parent=93 // pred_check
                _
              $region107: #{bilstm_crf_forward.2} parent=93 // pred_check_branch
                %473 = sbr.rel (0) target = $region109
              $region108: #{bilstm_crf_forward.2} parent=93 // pred_region
                loop: start=0, step=1, limit=1
                $region110: #{bilstm_crf_forward.2} parent=108 // loop_pre_header
                  _
                $region111: #{bilstm_crf_forward.2} parent=108 // loop_header
                  %s475 = sphi 0, %s479
                  %p476 = scmp.ge.s32.totalorder %s475, 1
                  %s480 = sphi %s439, %s439
                  %s481 = sphi %s437, %s437
                $region112: #{bilstm_crf_forward.2} parent=108 // loop_header_branch
                  %478 = sbr.rel (%p476) target = $region116
                $region113: #{bilstm_crf_forward.2} parent=108 // loop_body
                  %v482 = vld [vmem:[%s480] sm:$0xff]
                  %483 = vst [vmem:[%s481] sm:$0xff] %v482
                  %v484 = vld [vmem:[%s480 + $0x10] sm:$0xff]
                  %485 = vst [vmem:[%s481 + $0x8] sm:$0xff] %v484
                  %v486 = vld [vmem:[%s480 + $0x20] sm:$0xff]
                  %487 = vst [vmem:[%s481 + $0x10] sm:$0xff] %v486
                  %v488 = vld [vmem:[%s480 + $0x30] sm:$0xff]
                  %489 = vst [vmem:[%s481 + $0x18] sm:$0xff] %v488
                  %v490 = vld [vmem:[%s480 + $0x40] sm:$0xff]
                  %491 = vst [vmem:[%s481 + $0x20] sm:$0xff] %v490
                  %v492 = vld [vmem:[%s480 + $0x50] sm:$0xff]
                  %493 = vst [vmem:[%s481 + $0x28] sm:$0xff] %v492
                  %v494 = vld [vmem:[%s480 + $0x60] sm:$0xff]
                  %495 = vst [vmem:[%s481 + $0x30] sm:$0xff] %v494
                  %v496 = vld [vmem:[%s480 + $0x70] sm:$0xff]
                  %497 = vst [vmem:[%s481 + $0x38] sm:$0xff] %v496
                $region114: #{bilstm_crf_forward.2} parent=108 // loop_footer
                  %s479 = sadd.s32 1, %s475
                $region115: #{bilstm_crf_forward.2} parent=108 // loop_footer_branch
                  %474 = sbr.rel target = $region111
                $region116: #{bilstm_crf_forward.2} parent=108 // loop_exit
                  _
              $region109: #{bilstm_crf_forward.2} parent=93 // pred_fallthru
                _
              // Predicated region
              $region117: #{bilstm_crf_forward.2} parent=93 // pred_check
                _
              $region118: #{bilstm_crf_forward.2} parent=93 // pred_check_branch
                %499 = sbr.rel target = $region120
              $region119: #{bilstm_crf_forward.2} parent=93 // pred_region
                _
              $region120: #{bilstm_crf_forward.2} parent=93 // pred_fallthru
                _
            $region94: #{bilstm_crf_forward.2} parent=89 // pred_fallthru
              _
            // Predicated region
            $region95: #{bilstm_crf_forward.2} parent=89 // pred_check
              _
            $region96: #{bilstm_crf_forward.2} parent=89 // pred_check_branch
              %445 = sbr.rel target = $region98
            $region97: #{bilstm_crf_forward.2} parent=89 // pred_region
              %s447 = ssub.s32 256, 1
              loop: start=0, step=1, limit=1
              $region99: #{bilstm_crf_forward.2} parent=97 // loop_pre_header
                _
              $region100: #{bilstm_crf_forward.2} parent=97 // loop_header
                %s449 = sphi 0, %s453
                %p450 = scmp.ge.s32.totalorder %s449, 1
                %s454 = sphi %s439, %s439
                %s455 = sphi %s437, %s437
              $region101: #{bilstm_crf_forward.2} parent=97 // loop_header_branch
                %452 = sbr.rel (%p450) target = $region105
              $region102: #{bilstm_crf_forward.2} parent=97 // loop_body
                %v456 = vld [vmem:[%s454] sm:%s447]
                %457 = vst [vmem:[%s455] sm:%s447] %v456
                %v458 = vld [vmem:[%s454 + $0x10] sm:%s447]
                %459 = vst [vmem:[%s455 + $0x8] sm:%s447] %v458
                %v460 = vld [vmem:[%s454 + $0x20] sm:%s447]
                %461 = vst [vmem:[%s455 + $0x10] sm:%s447] %v460
                %v462 = vld [vmem:[%s454 + $0x30] sm:%s447]
                %463 = vst [vmem:[%s455 + $0x18] sm:%s447] %v462
                %v464 = vld [vmem:[%s454 + $0x40] sm:%s447]
                %465 = vst [vmem:[%s455 + $0x20] sm:%s447] %v464
                %v466 = vld [vmem:[%s454 + $0x50] sm:%s447]
                %467 = vst [vmem:[%s455 + $0x28] sm:%s447] %v466
                %v468 = vld [vmem:[%s454 + $0x60] sm:%s447]
                %469 = vst [vmem:[%s455 + $0x30] sm:%s447] %v468
                %v470 = vld [vmem:[%s454 + $0x70] sm:%s447]
                %471 = vst [vmem:[%s455 + $0x38] sm:%s447] %v470
              $region103: #{bilstm_crf_forward.2} parent=97 // loop_footer
                %s453 = sadd.s32 1, %s449
              $region104: #{bilstm_crf_forward.2} parent=97 // loop_footer_branch
                %448 = sbr.rel target = $region100
              $region105: #{bilstm_crf_forward.2} parent=97 // loop_exit
                _
            $region98: #{bilstm_crf_forward.2} parent=89 // pred_fallthru
              _
          $region90: #{bilstm_crf_forward.2} parent=85 // pred_fallthru
            _
          %500 = vnop
        $region86: #{bilstm_crf_forward.2} parent=43 // pred_fallthru
          _
        // Predicated region
        $region121: #{bilstm_crf_forward.2} parent=43 // pred_check
          %p501 = pneg %p90
        $region122: #{bilstm_crf_forward.2} parent=43 // pred_check_branch
          %503 = sbr.rel (%p501) target = $region124
        $region123: #{bilstm_crf_forward.2} parent=43 // pred_region
          %s504 = sand.u32 %s80, 1
          %s505 = sand.u32 %s80, 1
          %s506 = smul.addr %s505, 64
          %s507 = scalar_lea.vmem [#allocation4], %s506
          %s508 = smul.addr %s18, 8
          %s509 = scalar_lea.vmem %s2, %s508
          // Predicated region
          $region125: #{bilstm_crf_forward.2} parent=123 // pred_check
            _
          $region126: #{bilstm_crf_forward.2} parent=123 // pred_check_branch
            %511 = sbr.rel (0) target = $region128
          $region127: #{bilstm_crf_forward.2} parent=123 // pred_region
            // Predicated region
            $region129: #{bilstm_crf_forward.2} parent=127 // pred_check
              _
            $region130: #{bilstm_crf_forward.2} parent=127 // pred_check_branch
              %513 = sbr.rel (0) target = $region132
            $region131: #{bilstm_crf_forward.2} parent=127 // pred_region
              // Predicated region
              $region144: #{bilstm_crf_forward.2} parent=131 // pred_check
                _
              $region145: #{bilstm_crf_forward.2} parent=131 // pred_check_branch
                %543 = sbr.rel (0) target = $region147
              $region146: #{bilstm_crf_forward.2} parent=131 // pred_region
                loop: start=0, step=1, limit=1
                $region148: #{bilstm_crf_forward.2} parent=146 // loop_pre_header
                  _
                $region149: #{bilstm_crf_forward.2} parent=146 // loop_header
                  %s545 = sphi 0, %s549
                  %p546 = scmp.ge.s32.totalorder %s545, 1
                  %s550 = sphi %s509, %s509
                  %s551 = sphi %s507, %s507
                $region150: #{bilstm_crf_forward.2} parent=146 // loop_header_branch
                  %548 = sbr.rel (%p546) target = $region154
                $region151: #{bilstm_crf_forward.2} parent=146 // loop_body
                  %v552 = vld [vmem:[%s550] sm:$0xff]
                  %553 = vst [vmem:[%s551] sm:$0xff] %v552
                  %v554 = vld [vmem:[%s550 + $0x10] sm:$0xff]
                  %555 = vst [vmem:[%s551 + $0x8] sm:$0xff] %v554
                  %v556 = vld [vmem:[%s550 + $0x20] sm:$0xff]
                  %557 = vst [vmem:[%s551 + $0x10] sm:$0xff] %v556
                  %v558 = vld [vmem:[%s550 + $0x30] sm:$0xff]
                  %559 = vst [vmem:[%s551 + $0x18] sm:$0xff] %v558
                  %v560 = vld [vmem:[%s550 + $0x40] sm:$0xff]
                  %561 = vst [vmem:[%s551 + $0x20] sm:$0xff] %v560
                  %v562 = vld [vmem:[%s550 + $0x50] sm:$0xff]
                  %563 = vst [vmem:[%s551 + $0x28] sm:$0xff] %v562
                  %v564 = vld [vmem:[%s550 + $0x60] sm:$0xff]
                  %565 = vst [vmem:[%s551 + $0x30] sm:$0xff] %v564
                  %v566 = vld [vmem:[%s550 + $0x70] sm:$0xff]
                  %567 = vst [vmem:[%s551 + $0x38] sm:$0xff] %v566
                $region152: #{bilstm_crf_forward.2} parent=146 // loop_footer
                  %s549 = sadd.s32 1, %s545
                $region153: #{bilstm_crf_forward.2} parent=146 // loop_footer_branch
                  %544 = sbr.rel target = $region149
                $region154: #{bilstm_crf_forward.2} parent=146 // loop_exit
                  _
              $region147: #{bilstm_crf_forward.2} parent=131 // pred_fallthru
                _
              // Predicated region
              $region155: #{bilstm_crf_forward.2} parent=131 // pred_check
                _
              $region156: #{bilstm_crf_forward.2} parent=131 // pred_check_branch
                %569 = sbr.rel target = $region158
              $region157: #{bilstm_crf_forward.2} parent=131 // pred_region
                _
              $region158: #{bilstm_crf_forward.2} parent=131 // pred_fallthru
                _
            $region132: #{bilstm_crf_forward.2} parent=127 // pred_fallthru
              _
            // Predicated region
            $region133: #{bilstm_crf_forward.2} parent=127 // pred_check
              _
            $region134: #{bilstm_crf_forward.2} parent=127 // pred_check_branch
              %515 = sbr.rel target = $region136
            $region135: #{bilstm_crf_forward.2} parent=127 // pred_region
              %s517 = ssub.s32 256, 1
              loop: start=0, step=1, limit=1
              $region137: #{bilstm_crf_forward.2} parent=135 // loop_pre_header
                _
              $region138: #{bilstm_crf_forward.2} parent=135 // loop_header
                %s519 = sphi 0, %s523
                %p520 = scmp.ge.s32.totalorder %s519, 1
                %s524 = sphi %s509, %s509
                %s525 = sphi %s507, %s507
              $region139: #{bilstm_crf_forward.2} parent=135 // loop_header_branch
                %522 = sbr.rel (%p520) target = $region143
              $region140: #{bilstm_crf_forward.2} parent=135 // loop_body
                %v526 = vld [vmem:[%s524] sm:%s517]
                %527 = vst [vmem:[%s525] sm:%s517] %v526
                %v528 = vld [vmem:[%s524 + $0x10] sm:%s517]
                %529 = vst [vmem:[%s525 + $0x8] sm:%s517] %v528
                %v530 = vld [vmem:[%s524 + $0x20] sm:%s517]
                %531 = vst [vmem:[%s525 + $0x10] sm:%s517] %v530
                %v532 = vld [vmem:[%s524 + $0x30] sm:%s517]
                %533 = vst [vmem:[%s525 + $0x18] sm:%s517] %v532
                %v534 = vld [vmem:[%s524 + $0x40] sm:%s517]
                %535 = vst [vmem:[%s525 + $0x20] sm:%s517] %v534
                %v536 = vld [vmem:[%s524 + $0x50] sm:%s517]
                %537 = vst [vmem:[%s525 + $0x28] sm:%s517] %v536
                %v538 = vld [vmem:[%s524 + $0x60] sm:%s517]
                %539 = vst [vmem:[%s525 + $0x30] sm:%s517] %v538
                %v540 = vld [vmem:[%s524 + $0x70] sm:%s517]
                %541 = vst [vmem:[%s525 + $0x38] sm:%s517] %v540
              $region141: #{bilstm_crf_forward.2} parent=135 // loop_footer
                %s523 = sadd.s32 1, %s519
              $region142: #{bilstm_crf_forward.2} parent=135 // loop_footer_branch
                %518 = sbr.rel target = $region138
              $region143: #{bilstm_crf_forward.2} parent=135 // loop_exit
                _
            $region136: #{bilstm_crf_forward.2} parent=127 // pred_fallthru
              _
          $region128: #{bilstm_crf_forward.2} parent=123 // pred_fallthru
            _
          %570 = vnop
        $region124: #{bilstm_crf_forward.2} parent=43 // pred_fallthru
          _
        // Predicated region
        $region159: #{bilstm_crf_forward.2} parent=43 // pred_check
          %p571 = pneg %p116
        $region160: #{bilstm_crf_forward.2} parent=43 // pred_check_branch
          %573 = sbr.rel (%p571) target = $region162
        $region161: #{bilstm_crf_forward.2} parent=43 // pred_region
          %p574 = scmp.lt.s32.totalorder %s18, 1
          %s575 = scalar_select %p574, %s18, 1
          %s576 = smul.addr %s575, 8
          %s577 = scalar_lea.vmem %s3, %s576
        $region162: #{bilstm_crf_forward.2} parent=43 // pred_fallthru
          _
        // Predicated region
        $region163: #{bilstm_crf_forward.2} parent=43 // pred_check
          %p578 = pneg %p142
        $region164: #{bilstm_crf_forward.2} parent=43 // pred_check_branch
          %580 = sbr.rel (%p578) target = $region166
        $region165: #{bilstm_crf_forward.2} parent=43 // pred_region
          %p581 = scmp.lt.s32.totalorder %s18, 1
          %s582 = scalar_select %p581, %s18, 1
          %s583 = smul.addr %s582, 8
          %s584 = scalar_lea.vmem %s4, %s583
        $region166: #{bilstm_crf_forward.2} parent=43 // pred_fallthru
          _
      $region44: #{bilstm_crf_forward.2} parent=5 // pred_fallthru
        _
      %p585 = scmp.le.s32.totalorder 1, %s18
      %p586 = scmp.lt.s32.totalorder %s18, 3
      %p587 = pnand %p585, %p586
      %p588 = pneg %p587
      // Predicated region
      $region167: #{bilstm_crf_forward.2} parent=5 // pred_check
        _
      $region168: #{bilstm_crf_forward.2} parent=5 // pred_check_branch
        %590 = sbr.rel (%p587) target = $region170
      $region169: #{bilstm_crf_forward.2} parent=5 // pred_region
        %s591 = ssub.s32 %s18, 1
        %s592 = sand.u32 %s31, 1
        %s593 = sand.u32 %s31, 1
        %s594 = smul.addr %s593, 64
        %s595 = scalar_lea.vmem [#allocation2], %s594
        // Predicated region
        $region171: #{bilstm_crf_forward.2} parent=169 // pred_check
          %p596 = pneg %p44
        $region172: #{bilstm_crf_forward.2} parent=169 // pred_check_branch
          %598 = sbr.rel (%p596) target = $region174
        $region173: #{bilstm_crf_forward.2} parent=169 // pred_region
          _
        $region174: #{bilstm_crf_forward.2} parent=169 // pred_fallthru
          _
        %s599 = sand.u32 %s57, 1
        %s600 = sand.u32 %s57, 1
        %s601 = smul.addr %s600, 64
        %s602 = scalar_lea.vmem [#allocation3], %s601
        // Predicated region
        $region175: #{bilstm_crf_forward.2} parent=169 // pred_check
          %p603 = pneg %p70
        $region176: #{bilstm_crf_forward.2} parent=169 // pred_check_branch
          %605 = sbr.rel (%p603) target = $region178
        $region177: #{bilstm_crf_forward.2} parent=169 // pred_region
          _
        $region178: #{bilstm_crf_forward.2} parent=169 // pred_fallthru
          _
        %s606 = sand.u32 %s83, 1
        %s607 = sand.u32 %s83, 1
        %s608 = smul.addr %s607, 64
        %s609 = scalar_lea.vmem [#allocation4], %s608
        // Predicated region
        $region179: #{bilstm_crf_forward.2} parent=169 // pred_check
          %p610 = pneg %p96
        $region180: #{bilstm_crf_forward.2} parent=169 // pred_check_branch
          %612 = sbr.rel (%p610) target = $region182
        $region181: #{bilstm_crf_forward.2} parent=169 // pred_region
          _
        $region182: #{bilstm_crf_forward.2} parent=169 // pred_fallthru
          _
        %s613 = sand.u32 %s31, 1
        %s614 = sand.u32 %s31, 1
        %s615 = smul.addr %s614, 64
        %s616 = scalar_lea.vmem [#allocation2], %s615
        %p617 = pneg %p44
        %p618 = pneg %p41
        %s619 = sand.u32 %s57, 1
        %s620 = sand.u32 %s57, 1
        %s621 = smul.addr %s620, 64
        %s622 = scalar_lea.vmem [#allocation3], %s621
        %p623 = pneg %p70
        %p624 = pneg %p67
        %s625 = sand.u32 %s83, 1
        %s626 = sand.u32 %s83, 1
        %s627 = smul.addr %s626, 64
        %s628 = scalar_lea.vmem [#allocation4], %s627
        %p629 = pneg %p96
        %p630 = pneg %p93
        %p631 = scmp.lt.s32.totalorder %s23, 1
        %s632 = scalar_select %p631, %s23, 1
        %s633 = smul.addr %s632, 8
        %s634 = scalar_lea.vmem %s3, %s633
        %p635 = pneg %p122
        %p636 = pneg %p119
        %p637 = scmp.lt.s32.totalorder %s23, 1
        %s638 = scalar_select %p637, %s23, 1
        %s639 = smul.addr %s638, 8
        %s640 = scalar_lea.vmem %s4, %s639
        %p641 = pneg %p148
        %p642 = pneg %p145
        %p643 = pneg %p169
        %p644 = pneg %p166
        %p645 = pneg %p190
        %p646 = pneg %p187
        %p647 = pneg %p211
        %p648 = pneg %p208
        %p649 = pneg %p232
        %p650 = pneg %p229
        %p651 = pneg %p253
        %p652 = pneg %p250
        %p653 = pneg %p274
        %p654 = pneg %p271
        %p655 = pneg %p295
        %p656 = pneg %p292
        %p657 = pneg %p321
        %p658 = pneg %p318
        %p659 = scmp.lt.s32.totalorder %s23, 1
        %s660 = scalar_select %p659, %s23, 1
        %s661 = smul.addr %s660, 8
        %s662 = scalar_lea.vmem %s12, %s661
        %p663 = scmp.lt.s32.totalorder %s23, 1
        %s664 = scalar_select %p663, %s23, 1
        %s665 = smul.addr %s664, 8
        %s666 = scalar_lea.vmem %s3, %s665
        %p667 = scmp.lt.s32.totalorder %s23, 1
        %s668 = scalar_select %p667, %s23, 1
        %s669 = smul.addr %s668, 8
        %s670 = scalar_lea.vmem %s4, %s669
        %p671 = scmp.lt.s32.totalorder %s23, 1
        %s672 = scalar_select %p671, %s23, 1
        %s673 = smul.addr %s672, 8
        %s674 = scalar_lea.vmem %s12, %s673
        %v676 = vld [vmem:[%s595] sm:$0xff]
        %v677 = vld [vmem:[%s595 + $0x8] sm:$0xff]
        %v678 = vld [vmem:[%s595 + $0x10] sm:$0xff]
        %v679 = vld [vmem:[%s595 + $0x18] sm:$0xff]
        %v680 = vld [vmem:[%s595 + $0x20] sm:$0xff]
        %v681 = vld [vmem:[%s595 + $0x28] sm:$0xff]
        %v682 = vld [vmem:[%s595 + $0x30] sm:$0xff]
        %v683 = vld [vmem:[%s595 + $0x38] sm:$0xff]
        %v684 = vpack.c.bf16 %v677, %v676
        %v685 = vpack.c.bf16 %v679, %v678
        %v686 = vpack.c.bf16 %v681, %v680
        %v687 = vpack.c.bf16 %v683, %v682
        %v688 = vld [vmem:[%s5] sm:$0xf]
        %v689 = vld [vmem:[%s5 + $0x4] sm:$0xf]
        %v690 = vld [vmem:[%s5 + $0x8] sm:$0xf]
        %v691 = vld [vmem:[%s5 + $0xc] sm:$0xf]
        %v692 = vld [vmem:[%s6] sm:$0x1]
        %v694 = vlaneseq
        %v695 = vshrl.u32 %v694, 7
        %v696 = vsub.s32 0, %v695
        %v697 = vrot.slane %v692, %v696
        %v703 = vunpack.c.l.b16 %v688
        %v704 = vunpack.c.l.b16 %v689
        %v705 = vunpack.c.l.b16 %v690
        %v706 = vunpack.c.l.b16 %v691
        %v707 = vpack.c.b16 %v704, %v703
        %v708 = vpack.c.b16 %v706, %v705
        %vm711 = vcmask 261120
        %v713 = vsel %vm711, %v684, 0
        %v716 = vsel %vm711, %v685, 0
        %v719 = vsel %vm711, %v686, 0
        %v722 = vsel %vm711, %v687, 0
        %724 = vmatprep.subr.bf16.mxu0 0
        %725 = vmatpush1.bf16.msra.mxu0 0
        %726 = vmatprep.subr.bf16.mxu0 0
        %727 = vmatpush1.bf16.msra.mxu0 0
        %728 = vmatprep.subr.bf16.mxu0 0
        %729 = vmatpush1.bf16.msra.mxu0 0
        %730 = vmatprep.subr.bf16.mxu0 0
        %731 = vmatpush1.bf16.msra.mxu0 0
        %732 = vmatprep.subr.bf16.mxu0 0
        %733 = vmatpush1.bf16.msra.mxu0 0
        %734 = vmatprep.subr.bf16.mxu0 0
        %735 = vmatpush1.bf16.msra.mxu0 0
        %736 = vmatprep.subr.bf16.mxu0 0
        %737 = vmatpush1.bf16.msra.mxu0 %v708
        %738 = vmatprep.subr.bf16.mxu0 0
        %739 = vmatpush1.bf16.msra.mxu0 %v707
        %740 = vmatprep.subr.bf16.mxu0 0
        %741 = vmatpush2.bf16.msra.mxu0 0
        %742 = vmatprep.subr.bf16.mxu0 0
        %743 = vmatpush2.bf16.msra.mxu0 0
        %744 = vmatprep.subr.bf16.mxu0 0
        %745 = vmatpush2.bf16.msra.mxu0 0
        %746 = vmatprep.subr.bf16.mxu0 0
        %747 = vmatpush2.bf16.msra.mxu0 0
        %748 = vmatprep.subr.bf16.mxu0 0
        %749 = vmatpush2.bf16.msra.mxu0 0
        %750 = vmatprep.subr.bf16.mxu0 0
        %751 = vmatpush2.bf16.msra.mxu0 0
        %752 = vmatprep.subr.bf16.mxu0 0
        %753 = vmatpush2.bf16.msra.mxu0 0
        %754 = vmatprep.subr.bf16.mxu0 0
        %755 = vmatpush2.bf16.msra.mxu0 0
        %756 = vmatprep.mubr.bf16.mxu0 0
        %757 = vmatmul.mubr.bf16.gmra.mxu0 %v713
        %v758 = vpop.f32.mrf.mxu0
        %v759 = vadd.f32 %v697, %v758
        %v760 = vpop.f32.mrf.mxu0
        %v761 = vpop.f32.mrf.mxu0
        %v762 = vadd.f32 %v697, %v761
        %v763 = vpop.f32.mrf.mxu0
        %764 = vmatprep.mubr.bf16.mxu0 0
        %765 = vmatmul.mubr.bf16.gmra.mxu0 %v716
        %v766 = vpop.f32.mrf.mxu0
        %v767 = vadd.f32 %v697, %v766
        %v768 = vpop.f32.mrf.mxu0
        %v769 = vpop.f32.mrf.mxu0
        %v770 = vadd.f32 %v697, %v769
        %v771 = vpop.f32.mrf.mxu0
        %772 = vmatprep.mubr.bf16.mxu0 0
        %773 = vmatmul.mubr.bf16.gmra.mxu0 %v719
        %v774 = vpop.f32.mrf.mxu0
        %v775 = vadd.f32 %v697, %v774
        %v776 = vpop.f32.mrf.mxu0
        %v777 = vpop.f32.mrf.mxu0
        %v778 = vadd.f32 %v697, %v777
        %v779 = vpop.f32.mrf.mxu0
        %780 = vmatprep.mubr.bf16.mxu0 0
        %781 = vmatmul.mubr.bf16.gmra.mxu0 %v722
        %v782 = vpop.f32.mrf.mxu0
        %v783 = vadd.f32 %v697, %v782
        %v784 = vpop.f32.mrf.mxu0
        %v785 = vpop.f32.mrf.mxu0
        %v786 = vadd.f32 %v697, %v785
        %v787 = vpop.f32.mrf.mxu0
        %788 = vdwg.mxu0
        %v789 = vtanh.pop %v759
        %v790 = vtanh.pop %v762
        %v791 = vtanh.pop %v767
        %v792 = vtanh.pop %v770
        %v793 = vtanh.pop %v775
        %v794 = vtanh.pop %v778
        %v795 = vtanh.pop %v783
        %v796 = vtanh.pop %v786
        %v797 = vpack.c.bf16 %v790, %v789
        %v798 = vpack.c.bf16 %v792, %v791
        %v799 = vpack.c.bf16 %v794, %v793
        %v800 = vpack.c.bf16 %v796, %v795
        %v801 = vld [vmem:[%s7] sm:$0xf]
        %v802 = vld [vmem:[%s7 + $0x4] sm:$0xf]
        %v803 = vld [vmem:[%s7 + $0x8] sm:$0xf]
        %v804 = vld [vmem:[%s7 + $0xc] sm:$0xf]
        %v805 = vld [vmem:[%s8] sm:$0x1]
        %v807 = vlaneseq
        %v808 = vshrl.u32 %v807, 7
        %v809 = vsub.s32 0, %v808
        %v810 = vrot.slane %v805, %v809
        %v816 = vunpack.c.l.b16 %v801
        %v817 = vunpack.c.l.b16 %v802
        %v818 = vunpack.c.l.b16 %v803
        %v819 = vunpack.c.l.b16 %v804
        %v820 = vpack.c.b16 %v817, %v816
        %v821 = vpack.c.b16 %v819, %v818
        %v825 = vsel %vm711, %v797, 0
        %v828 = vsel %vm711, %v798, 0
        %v831 = vsel %vm711, %v799, 0
        %v834 = vsel %vm711, %v800, 0
        %836 = vmatprep.subr.bf16.mxu0 0
        %837 = vmatpush1.bf16.msra.mxu0 0
        %838 = vmatprep.subr.bf16.mxu0 0
        %839 = vmatpush1.bf16.msra.mxu0 0
        %840 = vmatprep.subr.bf16.mxu0 0
        %841 = vmatpush1.bf16.msra.mxu0 0
        %842 = vmatprep.subr.bf16.mxu0 0
        %843 = vmatpush1.bf16.msra.mxu0 0
        %844 = vmatprep.subr.bf16.mxu0 0
        %845 = vmatpush1.bf16.msra.mxu0 0
        %846 = vmatprep.subr.bf16.mxu0 0
        %847 = vmatpush1.bf16.msra.mxu0 0
        %848 = vmatprep.subr.bf16.mxu0 0
        %849 = vmatpush1.bf16.msra.mxu0 %v821
        %850 = vmatprep.subr.bf16.mxu0 0
        %851 = vmatpush1.bf16.msra.mxu0 %v820
        %852 = vmatprep.subr.bf16.mxu0 0
        %853 = vmatpush2.bf16.msra.mxu0 0
        %854 = vmatprep.subr.bf16.mxu0 0
        %855 = vmatpush2.bf16.msra.mxu0 0
        %856 = vmatprep.subr.bf16.mxu0 0
        %857 = vmatpush2.bf16.msra.mxu0 0
        %858 = vmatprep.subr.bf16.mxu0 0
        %859 = vmatpush2.bf16.msra.mxu0 0
        %860 = vmatprep.subr.bf16.mxu0 0
        %861 = vmatpush2.bf16.msra.mxu0 0
        %862 = vmatprep.subr.bf16.mxu0 0
        %863 = vmatpush2.bf16.msra.mxu0 0
        %864 = vmatprep.subr.bf16.mxu0 0
        %865 = vmatpush2.bf16.msra.mxu0 0
        %866 = vmatprep.subr.bf16.mxu0 0
        %867 = vmatpush2.bf16.msra.mxu0 0
        %868 = vmatprep.mubr.bf16.mxu0 0
        %869 = vmatmul.mubr.bf16.gmra.mxu0 %v825
        %v870 = vpop.f32.mrf.mxu0
        %v871 = vadd.f32 %v810, %v870
        %v872 = vpop.f32.mrf.mxu0
        %v873 = vpop.f32.mrf.mxu0
        %v874 = vadd.f32 %v810, %v873
        %v875 = vpop.f32.mrf.mxu0
        %876 = vmatprep.mubr.bf16.mxu0 0
        %877 = vmatmul.mubr.bf16.gmra.mxu0 %v828
        %v878 = vpop.f32.mrf.mxu0
        %v879 = vadd.f32 %v810, %v878
        %v880 = vpop.f32.mrf.mxu0
        %v881 = vpop.f32.mrf.mxu0
        %v882 = vadd.f32 %v810, %v881
        %v883 = vpop.f32.mrf.mxu0
        %884 = vmatprep.mubr.bf16.mxu0 0
        %885 = vmatmul.mubr.bf16.gmra.mxu0 %v831
        %v886 = vpop.f32.mrf.mxu0
        %v887 = vadd.f32 %v810, %v886
        %v888 = vpop.f32.mrf.mxu0
        %v889 = vpop.f32.mrf.mxu0
        %v890 = vadd.f32 %v810, %v889
        %v891 = vpop.f32.mrf.mxu0
        %892 = vmatprep.mubr.bf16.mxu0 0
        %893 = vmatmul.mubr.bf16.gmra.mxu0 %v834
        %v894 = vpop.f32.mrf.mxu0
        %v895 = vadd.f32 %v810, %v894
        %v896 = vpop.f32.mrf.mxu0
        %v897 = vpop.f32.mrf.mxu0
        %v898 = vadd.f32 %v810, %v897
        %v899 = vpop.f32.mrf.mxu0
        %900 = vdwg.mxu0
        %v901 = vld [vmem:[%s602] sm:$0xff]
        %v902 = vld [vmem:[%s602 + $0x8] sm:$0xff]
        %v903 = vld [vmem:[%s602 + $0x10] sm:$0xff]
        %v904 = vld [vmem:[%s602 + $0x18] sm:$0xff]
        %v905 = vld [vmem:[%s602 + $0x20] sm:$0xff]
        %v906 = vld [vmem:[%s602 + $0x28] sm:$0xff]
        %v907 = vld [vmem:[%s602 + $0x30] sm:$0xff]
        %v908 = vld [vmem:[%s602 + $0x38] sm:$0xff]
        %910 = vset.pattern.permute.xlu0 0
        %911 = vperm.xlu0 %910, %v901
        %v912 = vpop.permute.xlu0 %911
        %915 = vset.pattern.permute.xlu0 0
        %916 = vperm.xlu0 %915, %v902
        %v917 = vpop.permute.xlu0 %916
        %920 = vset.pattern.permute.xlu0 0
        %921 = vperm.xlu0 %920, %v903
        %v922 = vpop.permute.xlu0 %921
        %925 = vset.pattern.permute.xlu0 0
        %926 = vperm.xlu0 %925, %v904
        %v927 = vpop.permute.xlu0 %926
        %930 = vset.pattern.permute.xlu0 0
        %931 = vperm.xlu0 %930, %v905
        %v932 = vpop.permute.xlu0 %931
        %935 = vset.pattern.permute.xlu0 0
        %936 = vperm.xlu0 %935, %v906
        %v937 = vpop.permute.xlu0 %936
        %940 = vset.pattern.permute.xlu0 0
        %941 = vperm.xlu0 %940, %v907
        %v942 = vpop.permute.xlu0 %941
        %945 = vset.pattern.permute.xlu0 0
        %946 = vperm.xlu0 %945, %v908
        %v947 = vpop.permute.xlu0 %946
        %v949 = vld [vmem:[%s609] sm:$0xff]
        %v950 = vld [vmem:[%s609 + $0x8] sm:$0xff]
        %v951 = vld [vmem:[%s609 + $0x10] sm:$0xff]
        %v952 = vld [vmem:[%s609 + $0x18] sm:$0xff]
        %v953 = vld [vmem:[%s609 + $0x20] sm:$0xff]
        %v954 = vld [vmem:[%s609 + $0x28] sm:$0xff]
        %v955 = vld [vmem:[%s609 + $0x30] sm:$0xff]
        %v956 = vld [vmem:[%s609 + $0x38] sm:$0xff]
        %958 = vset.pattern.permute.xlu0 0
        %959 = vperm.xlu0 %958, %v949
        %v960 = vpop.permute.xlu0 %959
        %963 = vset.pattern.permute.xlu0 0
        %964 = vperm.xlu0 %963, %v950
        %v965 = vpop.permute.xlu0 %964
        %968 = vset.pattern.permute.xlu0 0
        %969 = vperm.xlu0 %968, %v951
        %v970 = vpop.permute.xlu0 %969
        %973 = vset.pattern.permute.xlu0 0
        %974 = vperm.xlu0 %973, %v952
        %v975 = vpop.permute.xlu0 %974
        %978 = vset.pattern.permute.xlu0 0
        %979 = vperm.xlu0 %978, %v953
        %v980 = vpop.permute.xlu0 %979
        %983 = vset.pattern.permute.xlu0 0
        %984 = vperm.xlu0 %983, %v954
        %v985 = vpop.permute.xlu0 %984
        %988 = vset.pattern.permute.xlu0 0
        %989 = vperm.xlu0 %988, %v955
        %v990 = vpop.permute.xlu0 %989
        %993 = vset.pattern.permute.xlu0 0
        %994 = vperm.xlu0 %993, %v956
        %v995 = vpop.permute.xlu0 %994
        %vm997 = vcmask 130048
        %v998 = vsel %vm997, %v912, %v960
        %v999 = vsel %vm997, %v917, %v965
        %v1000 = vsel %vm997, %v922, %v970
        %v1001 = vsel %vm997, %v927, %v975
        %v1002 = vsel %vm997, %v932, %v980
        %v1003 = vsel %vm997, %v937, %v985
        %v1004 = vsel %vm997, %v942, %v990
        %v1005 = vsel %vm997, %v947, %v995
        %v1006 = vld [vmem:[%s9] sm:$0xff]
        %v1007 = vld [vmem:[%s9 + $0x8] sm:$0xff]
        %v1008 = vld [vmem:[%s9 + $0x10] sm:$0xff]
        %v1009 = vld [vmem:[%s9 + $0x18] sm:$0xff]
        %v1010 = vld [vmem:[%s666] sm:$0xff]
        %v1011 = vld [vmem:[%s670] sm:$0xff]
        %v1013 = vsel %vm711, %v1010, 0
        %1015 = vmatprep.subr.mxu0 0.0
        %1016 = vmatpush1.msra.mxu0 0.0
        %1017 = vmatprep.subr.mxu0 0.0
        %1018 = vmatpush1.msra.mxu0 0.0
        %1019 = vmatprep.subr.mxu0 0.0
        %1020 = vmatpush1.msra.mxu0 0.0
        %1021 = vmatprep.subr.mxu0 0.0
        %1022 = vmatpush1.msra.mxu0 0.0
        %1023 = vmatprep.subr.mxu0 0.0
        %1024 = vmatpush1.msra.mxu0 0.0
        %1025 = vmatprep.subr.mxu0 0.0
        %1026 = vmatpush1.msra.mxu0 0.0
        %1027 = vmatprep.subr.mxu0 0.0
        %1028 = vmatpush1.msra.mxu0 0.0
        %1029 = vmatprep.subr.mxu0 0.0
        %1030 = vmatpush1.msra.mxu0 0.0
        %1031 = vmatprep.subr.mxu0 0.0
        %1032 = vmatpush1.msra.mxu0 0.0
        %1033 = vmatprep.subr.mxu0 0.0
        %1034 = vmatpush1.msra.mxu0 0.0
        %1035 = vmatprep.subr.mxu0 0.0
        %1036 = vmatpush1.msra.mxu0 0.0
        %1037 = vmatprep.subr.mxu0 0.0
        %1038 = vmatpush1.msra.mxu0 0.0
        %1039 = vmatprep.subr.mxu0 0.0
        %1040 = vmatpush1.msra.mxu0 %v1009
        %1041 = vmatprep.subr.mxu0 0.0
        %1042 = vmatpush1.msra.mxu0 %v1008
        %1043 = vmatprep.subr.mxu0 0.0
        %1044 = vmatpush1.msra.mxu0 %v1007
        %1045 = vmatprep.subr.mxu0 0.0
        %1046 = vmatpush1.msra.mxu0 %v1006
        %1047 = vmatprep.subr.mxu0 0.0
        %1048 = vmatpush2.msra.mxu0 0.0
        %1049 = vmatprep.subr.mxu0 0.0
        %1050 = vmatpush2.msra.mxu0 0.0
        %1051 = vmatprep.subr.mxu0 0.0
        %1052 = vmatpush2.msra.mxu0 0.0
        %1053 = vmatprep.subr.mxu0 0.0
        %1054 = vmatpush2.msra.mxu0 0.0
        %1055 = vmatprep.subr.mxu0 0.0
        %1056 = vmatpush2.msra.mxu0 0.0
        %1057 = vmatprep.subr.mxu0 0.0
        %1058 = vmatpush2.msra.mxu0 0.0
        %1059 = vmatprep.subr.mxu0 0.0
        %1060 = vmatpush2.msra.mxu0 0.0
        %1061 = vmatprep.subr.mxu0 0.0
        %1062 = vmatpush2.msra.mxu0 0.0
        %1063 = vmatprep.subr.mxu0 0.0
        %1064 = vmatpush2.msra.mxu0 0.0
        %1065 = vmatprep.subr.mxu0 0.0
        %1066 = vmatpush2.msra.mxu0 0.0
        %1067 = vmatprep.subr.mxu0 0.0
        %1068 = vmatpush2.msra.mxu0 0.0
        %1069 = vmatprep.subr.mxu0 0.0
        %1070 = vmatpush2.msra.mxu0 0.0
        %1071 = vmatprep.subr.mxu0 0.0
        %1072 = vmatpush2.msra.mxu0 0.0
        %1073 = vmatprep.subr.mxu0 0.0
        %1074 = vmatpush2.msra.mxu0 0.0
        %1075 = vmatprep.subr.mxu0 0.0
        %1076 = vmatpush2.msra.mxu0 0.0
        %1077 = vmatprep.subr.mxu0 0.0
        %1078 = vmatpush2.msra.mxu0 0.0
        %1079 = vmatprep.mubr.f32.mxu0 0.0
        %1080 = vmatmul.mubr.f32.gmra.mxu0 %v1013
        %v1081 = vpop.f32.mrf.mxu0
        %v1082 = vadd.f32 0.0, %v1081
        %v1083 = vpop.f32.mrf.mxu0
        %1084 = vdwg.mxu0
        %v1085 = vadd.f32 %v871, %v1082
        %v1086 = vxor.u32 %v1085, 2147483648
        %v1087 = vmul.f32 %v1086, 1.442695
        %v1088 = vpow.pop %v1087
        %v1089 = vadd.f32 %v1088, 1.0
        %v1090 = vrcp.pop %v1089
        %v1091 = vmul.f32 1.0, %v1090
        %v1092 = vtanh.pop %v1085
        %1094 = vrot.lane.b32.xlu0 %v1011, 32
        %v1095 = vpop.permute.xlu0 %1094
        %v1097 = vmul.f32 %v1091, %v1095
        %1099 = vrot.lane.b32.xlu0 %v1092, 32
        %v1100 = vpop.permute.xlu0 %1099
        %v1102 = vmul.f32 %v1091, %v1100
        %1104 = vrot.lane.b32.xlu0 %v1102, 32
        %v1105 = vpop.permute.xlu0 %1104
        %v1107 = vadd.f32 %v1097, %v1105
        %v1108 = vtanh.pop %v1107
        %1110 = vrot.lane.b32.xlu0 %v1108, 32
        %v1111 = vpop.permute.xlu0 %1110
        %v1113 = vmul.f32 %v1091, %v1111
        %1115 = vrot.lane.b32.xlu0 %v998, 64
        %v1116 = vpop.permute.xlu0 %1115
        %v1118 = vmul.f32 %v1113, %v1116
        %v1119 = vadd.f32 %v1118, 0.0
        %1121 = vrot.lane.b32.xlu0 %v1113, 64
        %v1122 = vpop.permute.xlu0 %1121
        %v1123 = vsel %vm711, %v1122, 0
        %1125 = vmatprep.subr.mxu0 0.0
        %1126 = vmatpush1.msra.mxu0 0.0
        %1127 = vmatprep.subr.mxu0 0.0
        %1128 = vmatpush1.msra.mxu0 0.0
        %1129 = vmatprep.subr.mxu0 0.0
        %1130 = vmatpush1.msra.mxu0 0.0
        %1131 = vmatprep.subr.mxu0 0.0
        %1132 = vmatpush1.msra.mxu0 0.0
        %1133 = vmatprep.subr.mxu0 0.0
        %1134 = vmatpush1.msra.mxu0 0.0
        %1135 = vmatprep.subr.mxu0 0.0
        %1136 = vmatpush1.msra.mxu0 0.0
        %1137 = vmatprep.subr.mxu0 0.0
        %1138 = vmatpush1.msra.mxu0 0.0
        %1139 = vmatprep.subr.mxu0 0.0
        %1140 = vmatpush1.msra.mxu0 0.0
        %1141 = vmatprep.subr.mxu0 0.0
        %1142 = vmatpush1.msra.mxu0 0.0
        %1143 = vmatprep.subr.mxu0 0.0
        %1144 = vmatpush1.msra.mxu0 0.0
        %1145 = vmatprep.subr.mxu0 0.0
        %1146 = vmatpush1.msra.mxu0 0.0
        %1147 = vmatprep.subr.mxu0 0.0
        %1148 = vmatpush1.msra.mxu0 0.0
        %1149 = vmatprep.subr.mxu0 0.0
        %1150 = vmatpush1.msra.mxu0 %v1009
        %1151 = vmatprep.subr.mxu0 0.0
        %1152 = vmatpush1.msra.mxu0 %v1008
        %1153 = vmatprep.subr.mxu0 0.0
        %1154 = vmatpush1.msra.mxu0 %v1007
        %1155 = vmatprep.subr.mxu0 0.0
        %1156 = vmatpush1.msra.mxu0 %v1006
        %1157 = vmatprep.subr.mxu0 0.0
        %1158 = vmatpush2.msra.mxu0 0.0
        %1159 = vmatprep.subr.mxu0 0.0
        %1160 = vmatpush2.msra.mxu0 0.0
        %1161 = vmatprep.subr.mxu0 0.0
        %1162 = vmatpush2.msra.mxu0 0.0
        %1163 = vmatprep.subr.mxu0 0.0
        %1164 = vmatpush2.msra.mxu0 0.0
        %1165 = vmatprep.subr.mxu0 0.0
        %1166 = vmatpush2.msra.mxu0 0.0
        %1167 = vmatprep.subr.mxu0 0.0
        %1168 = vmatpush2.msra.mxu0 0.0
        %1169 = vmatprep.subr.mxu0 0.0
        %1170 = vmatpush2.msra.mxu0 0.0
        %1171 = vmatprep.subr.mxu0 0.0
        %1172 = vmatpush2.msra.mxu0 0.0
        %1173 = vmatprep.subr.mxu0 0.0
        %1174 = vmatpush2.msra.mxu0 0.0
        %1175 = vmatprep.subr.mxu0 0.0
        %1176 = vmatpush2.msra.mxu0 0.0
        %1177 = vmatprep.subr.mxu0 0.0
        %1178 = vmatpush2.msra.mxu0 0.0
        %1179 = vmatprep.subr.mxu0 0.0
        %1180 = vmatpush2.msra.mxu0 0.0
        %1181 = vmatprep.subr.mxu0 0.0
        %1182 = vmatpush2.msra.mxu0 0.0
        %1183 = vmatprep.subr.mxu0 0.0
        %1184 = vmatpush2.msra.mxu0 0.0
        %1185 = vmatprep.subr.mxu0 0.0
        %1186 = vmatpush2.msra.mxu0 0.0
        %1187 = vmatprep.subr.mxu0 0.0
        %1188 = vmatpush2.msra.mxu0 0.0
        %1189 = vmatprep.mubr.f32.mxu0 0.0
        %1190 = vmatmul.mubr.f32.gmra.mxu0 %v1123
        %v1191 = vpop.f32.mrf.mxu0
        %v1192 = vadd.f32 0.0, %v1191
        %v1193 = vpop.f32.mrf.mxu0
        %1194 = vdwg.mxu0
        %v1195 = vadd.f32 %v874, %v1192
        %v1196 = vxor.u32 %v1195, 2147483648
        %v1197 = vmul.f32 %v1196, 1.442695
        %v1198 = vpow.pop %v1197
        %v1199 = vadd.f32 %v1198, 1.0
        %v1200 = vrcp.pop %v1199
        %v1201 = vmul.f32 1.0, %v1200
        %v1202 = vtanh.pop %v1195
        %v1203 = vmul.f32 %v1201, %v1107
        %1205 = vrot.lane.b32.xlu0 %v1202, 32
        %v1206 = vpop.permute.xlu0 %1205
        %v1208 = vmul.f32 %v1201, %v1206
        %1210 = vrot.lane.b32.xlu0 %v1208, 32
        %v1211 = vpop.permute.xlu0 %1210
        %v1213 = vadd.f32 %v1203, %v1211
        %v1214 = vtanh.pop %v1213
        %1216 = vrot.lane.b32.xlu0 %v1214, 32
        %v1217 = vpop.permute.xlu0 %1216
        %v1219 = vmul.f32 %v1201, %v1217
        %1221 = vrot.lane.b32.xlu0 %v999, 64
        %v1222 = vpop.permute.xlu0 %1221
        %v1224 = vmul.f32 %v1219, %v1222
        %v1225 = vadd.f32 %v1119, %v1224
        %1227 = vrot.lane.b32.xlu0 %v1219, 64
        %v1228 = vpop.permute.xlu0 %1227
        %v1229 = vsel %vm711, %v1228, 0
        %1231 = vmatprep.subr.mxu0 0.0
        %1232 = vmatpush1.msra.mxu0 0.0
        %1233 = vmatprep.subr.mxu0 0.0
        %1234 = vmatpush1.msra.mxu0 0.0
        %1235 = vmatprep.subr.mxu0 0.0
        %1236 = vmatpush1.msra.mxu0 0.0
        %1237 = vmatprep.subr.mxu0 0.0
        %1238 = vmatpush1.msra.mxu0 0.0
        %1239 = vmatprep.subr.mxu0 0.0
        %1240 = vmatpush1.msra.mxu0 0.0
        %1241 = vmatprep.subr.mxu0 0.0
        %1242 = vmatpush1.msra.mxu0 0.0
        %1243 = vmatprep.subr.mxu0 0.0
        %1244 = vmatpush1.msra.mxu0 0.0
        %1245 = vmatprep.subr.mxu0 0.0
        %1246 = vmatpush1.msra.mxu0 0.0
        %1247 = vmatprep.subr.mxu0 0.0
        %1248 = vmatpush1.msra.mxu0 0.0
        %1249 = vmatprep.subr.mxu0 0.0
        %1250 = vmatpush1.msra.mxu0 0.0
        %1251 = vmatprep.subr.mxu0 0.0
        %1252 = vmatpush1.msra.mxu0 0.0
        %1253 = vmatprep.subr.mxu0 0.0
        %1254 = vmatpush1.msra.mxu0 0.0
        %1255 = vmatprep.subr.mxu0 0.0
        %1256 = vmatpush1.msra.mxu0 %v1009
        %1257 = vmatprep.subr.mxu0 0.0
        %1258 = vmatpush1.msra.mxu0 %v1008
        %1259 = vmatprep.subr.mxu0 0.0
        %1260 = vmatpush1.msra.mxu0 %v1007
        %1261 = vmatprep.subr.mxu0 0.0
        %1262 = vmatpush1.msra.mxu0 %v1006
        %1263 = vmatprep.subr.mxu0 0.0
        %1264 = vmatpush2.msra.mxu0 0.0
        %1265 = vmatprep.subr.mxu0 0.0
        %1266 = vmatpush2.msra.mxu0 0.0
        %1267 = vmatprep.subr.mxu0 0.0
        %1268 = vmatpush2.msra.mxu0 0.0
        %1269 = vmatprep.subr.mxu0 0.0
        %1270 = vmatpush2.msra.mxu0 0.0
        %1271 = vmatprep.subr.mxu0 0.0
        %1272 = vmatpush2.msra.mxu0 0.0
        %1273 = vmatprep.subr.mxu0 0.0
        %1274 = vmatpush2.msra.mxu0 0.0
        %1275 = vmatprep.subr.mxu0 0.0
        %1276 = vmatpush2.msra.mxu0 0.0
        %1277 = vmatprep.subr.mxu0 0.0
        %1278 = vmatpush2.msra.mxu0 0.0
        %1279 = vmatprep.subr.mxu0 0.0
        %1280 = vmatpush2.msra.mxu0 0.0
        %1281 = vmatprep.subr.mxu0 0.0
        %1282 = vmatpush2.msra.mxu0 0.0
        %1283 = vmatprep.subr.mxu0 0.0
        %1284 = vmatpush2.msra.mxu0 0.0
        %1285 = vmatprep.subr.mxu0 0.0
        %1286 = vmatpush2.msra.mxu0 0.0
        %1287 = vmatprep.subr.mxu0 0.0
        %1288 = vmatpush2.msra.mxu0 0.0
        %1289 = vmatprep.subr.mxu0 0.0
        %1290 = vmatpush2.msra.mxu0 0.0
        %1291 = vmatprep.subr.mxu0 0.0
        %1292 = vmatpush2.msra.mxu0 0.0
        %1293 = vmatprep.subr.mxu0 0.0
        %1294 = vmatpush2.msra.mxu0 0.0
        %1295 = vmatprep.mubr.f32.mxu0 0.0
        %1296 = vmatmul.mubr.f32.gmra.mxu0 %v1229
        %v1297 = vpop.f32.mrf.mxu0
        %v1298 = vadd.f32 0.0, %v1297
        %v1299 = vpop.f32.mrf.mxu0
        %1300 = vdwg.mxu0
        %v1301 = vadd.f32 %v879, %v1298
        %v1302 = vxor.u32 %v1301, 2147483648
        %v1303 = vmul.f32 %v1302, 1.442695
        %v1304 = vpow.pop %v1303
        %v1305 = vadd.f32 %v1304, 1.0
        %v1306 = vrcp.pop %v1305
        %v1307 = vmul.f32 1.0, %v1306
        %v1308 = vtanh.pop %v1301
        %v1309 = vmul.f32 %v1307, %v1213
        %1311 = vrot.lane.b32.xlu0 %v1308, 32
        %v1312 = vpop.permute.xlu0 %1311
        %v1314 = vmul.f32 %v1307, %v1312
        %1316 = vrot.lane.b32.xlu0 %v1314, 32
        %v1317 = vpop.permute.xlu0 %1316
        %v1319 = vadd.f32 %v1309, %v1317
        %v1320 = vtanh.pop %v1319
        %1322 = vrot.lane.b32.xlu0 %v1320, 32
        %v1323 = vpop.permute.xlu0 %1322
        %v1325 = vmul.f32 %v1307, %v1323
        %1327 = vrot.lane.b32.xlu0 %v1000, 64
        %v1328 = vpop.permute.xlu0 %1327
        %v1330 = vmul.f32 %v1325, %v1328
        %v1331 = vadd.f32 %v1225, %v1330
        %1333 = vrot.lane.b32.xlu0 %v1325, 64
        %v1334 = vpop.permute.xlu0 %1333
        %v1335 = vsel %vm711, %v1334, 0
        %1337 = vmatprep.subr.mxu0 0.0
        %1338 = vmatpush1.msra.mxu0 0.0
        %1339 = vmatprep.subr.mxu0 0.0
        %1340 = vmatpush1.msra.mxu0 0.0
        %1341 = vmatprep.subr.mxu0 0.0
        %1342 = vmatpush1.msra.mxu0 0.0
        %1343 = vmatprep.subr.mxu0 0.0
        %1344 = vmatpush1.msra.mxu0 0.0
        %1345 = vmatprep.subr.mxu0 0.0
        %1346 = vmatpush1.msra.mxu0 0.0
        %1347 = vmatprep.subr.mxu0 0.0
        %1348 = vmatpush1.msra.mxu0 0.0
        %1349 = vmatprep.subr.mxu0 0.0
        %1350 = vmatpush1.msra.mxu0 0.0
        %1351 = vmatprep.subr.mxu0 0.0
        %1352 = vmatpush1.msra.mxu0 0.0
        %1353 = vmatprep.subr.mxu0 0.0
        %1354 = vmatpush1.msra.mxu0 0.0
        %1355 = vmatprep.subr.mxu0 0.0
        %1356 = vmatpush1.msra.mxu0 0.0
        %1357 = vmatprep.subr.mxu0 0.0
        %1358 = vmatpush1.msra.mxu0 0.0
        %1359 = vmatprep.subr.mxu0 0.0
        %1360 = vmatpush1.msra.mxu0 0.0
        %1361 = vmatprep.subr.mxu0 0.0
        %1362 = vmatpush1.msra.mxu0 %v1009
        %1363 = vmatprep.subr.mxu0 0.0
        %1364 = vmatpush1.msra.mxu0 %v1008
        %1365 = vmatprep.subr.mxu0 0.0
        %1366 = vmatpush1.msra.mxu0 %v1007
        %1367 = vmatprep.subr.mxu0 0.0
        %1368 = vmatpush1.msra.mxu0 %v1006
        %1369 = vmatprep.subr.mxu0 0.0
        %1370 = vmatpush2.msra.mxu0 0.0
        %1371 = vmatprep.subr.mxu0 0.0
        %1372 = vmatpush2.msra.mxu0 0.0
        %1373 = vmatprep.subr.mxu0 0.0
        %1374 = vmatpush2.msra.mxu0 0.0
        %1375 = vmatprep.subr.mxu0 0.0
        %1376 = vmatpush2.msra.mxu0 0.0
        %1377 = vmatprep.subr.mxu0 0.0
        %1378 = vmatpush2.msra.mxu0 0.0
        %1379 = vmatprep.subr.mxu0 0.0
        %1380 = vmatpush2.msra.mxu0 0.0
        %1381 = vmatprep.subr.mxu0 0.0
        %1382 = vmatpush2.msra.mxu0 0.0
        %1383 = vmatprep.subr.mxu0 0.0
        %1384 = vmatpush2.msra.mxu0 0.0
        %1385 = vmatprep.subr.mxu0 0.0
        %1386 = vmatpush2.msra.mxu0 0.0
        %1387 = vmatprep.subr.mxu0 0.0
        %1388 = vmatpush2.msra.mxu0 0.0
        %1389 = vmatprep.subr.mxu0 0.0
        %1390 = vmatpush2.msra.mxu0 0.0
        %1391 = vmatprep.subr.mxu0 0.0
        %1392 = vmatpush2.msra.mxu0 0.0
        %1393 = vmatprep.subr.mxu0 0.0
        %1394 = vmatpush2.msra.mxu0 0.0
        %1395 = vmatprep.subr.mxu0 0.0
        %1396 = vmatpush2.msra.mxu0 0.0
        %1397 = vmatprep.subr.mxu0 0.0
        %1398 = vmatpush2.msra.mxu0 0.0
        %1399 = vmatprep.subr.mxu0 0.0
        %1400 = vmatpush2.msra.mxu0 0.0
        %1401 = vmatprep.mubr.f32.mxu0 0.0
        %1402 = vmatmul.mubr.f32.gmra.mxu0 %v1335
        %v1403 = vpop.f32.mrf.mxu0
        %v1404 = vadd.f32 0.0, %v1403
        %v1405 = vpop.f32.mrf.mxu0
        %1406 = vdwg.mxu0
        %v1407 = vadd.f32 %v882, %v1404
        %v1408 = vxor.u32 %v1407, 2147483648
        %v1409 = vmul.f32 %v1408, 1.442695
        %v1410 = vpow.pop %v1409
        %v1411 = vadd.f32 %v1410, 1.0
        %v1412 = vrcp.pop %v1411
        %v1413 = vmul.f32 1.0, %v1412
        %v1414 = vtanh.pop %v1407
        %v1415 = vmul.f32 %v1413, %v1319
        %1417 = vrot.lane.b32.xlu0 %v1414, 32
        %v1418 = vpop.permute.xlu0 %1417
        %v1420 = vmul.f32 %v1413, %v1418
        %1422 = vrot.lane.b32.xlu0 %v1420, 32
        %v1423 = vpop.permute.xlu0 %1422
        %v1425 = vadd.f32 %v1415, %v1423
        %v1426 = vtanh.pop %v1425
        %1428 = vrot.lane.b32.xlu0 %v1426, 32
        %v1429 = vpop.permute.xlu0 %1428
        %v1431 = vmul.f32 %v1413, %v1429
        %1433 = vrot.lane.b32.xlu0 %v1001, 64
        %v1434 = vpop.permute.xlu0 %1433
        %v1436 = vmul.f32 %v1431, %v1434
        %v1437 = vadd.f32 %v1331, %v1436
        %1439 = vrot.lane.b32.xlu0 %v1431, 64
        %v1440 = vpop.permute.xlu0 %1439
        %v1441 = vsel %vm711, %v1440, 0
        %1443 = vmatprep.subr.mxu0 0.0
        %1444 = vmatpush1.msra.mxu0 0.0
        %1445 = vmatprep.subr.mxu0 0.0
        %1446 = vmatpush1.msra.mxu0 0.0
        %1447 = vmatprep.subr.mxu0 0.0
        %1448 = vmatpush1.msra.mxu0 0.0
        %1449 = vmatprep.subr.mxu0 0.0
        %1450 = vmatpush1.msra.mxu0 0.0
        %1451 = vmatprep.subr.mxu0 0.0
        %1452 = vmatpush1.msra.mxu0 0.0
        %1453 = vmatprep.subr.mxu0 0.0
        %1454 = vmatpush1.msra.mxu0 0.0
        %1455 = vmatprep.subr.mxu0 0.0
        %1456 = vmatpush1.msra.mxu0 0.0
        %1457 = vmatprep.subr.mxu0 0.0
        %1458 = vmatpush1.msra.mxu0 0.0
        %1459 = vmatprep.subr.mxu0 0.0
        %1460 = vmatpush1.msra.mxu0 0.0
        %1461 = vmatprep.subr.mxu0 0.0
        %1462 = vmatpush1.msra.mxu0 0.0
        %1463 = vmatprep.subr.mxu0 0.0
        %1464 = vmatpush1.msra.mxu0 0.0
        %1465 = vmatprep.subr.mxu0 0.0
        %1466 = vmatpush1.msra.mxu0 0.0
        %1467 = vmatprep.subr.mxu0 0.0
        %1468 = vmatpush1.msra.mxu0 %v1009
        %1469 = vmatprep.subr.mxu0 0.0
        %1470 = vmatpush1.msra.mxu0 %v1008
        %1471 = vmatprep.subr.mxu0 0.0
        %1472 = vmatpush1.msra.mxu0 %v1007
        %1473 = vmatprep.subr.mxu0 0.0
        %1474 = vmatpush1.msra.mxu0 %v1006
        %1475 = vmatprep.subr.mxu0 0.0
        %1476 = vmatpush2.msra.mxu0 0.0
        %1477 = vmatprep.subr.mxu0 0.0
        %1478 = vmatpush2.msra.mxu0 0.0
        %1479 = vmatprep.subr.mxu0 0.0
        %1480 = vmatpush2.msra.mxu0 0.0
        %1481 = vmatprep.subr.mxu0 0.0
        %1482 = vmatpush2.msra.mxu0 0.0
        %1483 = vmatprep.subr.mxu0 0.0
        %1484 = vmatpush2.msra.mxu0 0.0
        %1485 = vmatprep.subr.mxu0 0.0
        %1486 = vmatpush2.msra.mxu0 0.0
        %1487 = vmatprep.subr.mxu0 0.0
        %1488 = vmatpush2.msra.mxu0 0.0
        %1489 = vmatprep.subr.mxu0 0.0
        %1490 = vmatpush2.msra.mxu0 0.0
        %1491 = vmatprep.subr.mxu0 0.0
        %1492 = vmatpush2.msra.mxu0 0.0
        %1493 = vmatprep.subr.mxu0 0.0
        %1494 = vmatpush2.msra.mxu0 0.0
        %1495 = vmatprep.subr.mxu0 0.0
        %1496 = vmatpush2.msra.mxu0 0.0
        %1497 = vmatprep.subr.mxu0 0.0
        %1498 = vmatpush2.msra.mxu0 0.0
        %1499 = vmatprep.subr.mxu0 0.0
        %1500 = vmatpush2.msra.mxu0 0.0
        %1501 = vmatprep.subr.mxu0 0.0
        %1502 = vmatpush2.msra.mxu0 0.0
        %1503 = vmatprep.subr.mxu0 0.0
        %1504 = vmatpush2.msra.mxu0 0.0
        %1505 = vmatprep.subr.mxu0 0.0
        %1506 = vmatpush2.msra.mxu0 0.0
        %1507 = vmatprep.mubr.f32.mxu0 0.0
        %1508 = vmatmul.mubr.f32.gmra.mxu0 %v1441
        %v1509 = vpop.f32.mrf.mxu0
        %v1510 = vadd.f32 0.0, %v1509
        %v1511 = vpop.f32.mrf.mxu0
        %1512 = vdwg.mxu0
        %v1513 = vadd.f32 %v887, %v1510
        %v1514 = vxor.u32 %v1513, 2147483648
        %v1515 = vmul.f32 %v1514, 1.442695
        %v1516 = vpow.pop %v1515
        %v1517 = vadd.f32 %v1516, 1.0
        %v1518 = vrcp.pop %v1517
        %v1519 = vmul.f32 1.0, %v1518
        %v1520 = vtanh.pop %v1513
        %v1521 = vmul.f32 %v1519, %v1425
        %1523 = vrot.lane.b32.xlu0 %v1520, 32
        %v1524 = vpop.permute.xlu0 %1523
        %v1526 = vmul.f32 %v1519, %v1524
        %1528 = vrot.lane.b32.xlu0 %v1526, 32
        %v1529 = vpop.permute.xlu0 %1528
        %v1531 = vadd.f32 %v1521, %v1529
        %v1532 = vtanh.pop %v1531
        %1534 = vrot.lane.b32.xlu0 %v1532, 32
        %v1535 = vpop.permute.xlu0 %1534
        %v1537 = vmul.f32 %v1519, %v1535
        %1539 = vrot.lane.b32.xlu0 %v1002, 64
        %v1540 = vpop.permute.xlu0 %1539
        %v1542 = vmul.f32 %v1537, %v1540
        %v1543 = vadd.f32 %v1437, %v1542
        %1545 = vrot.lane.b32.xlu0 %v1537, 64
        %v1546 = vpop.permute.xlu0 %1545
        %v1547 = vsel %vm711, %v1546, 0
        %1549 = vmatprep.subr.mxu0 0.0
        %1550 = vmatpush1.msra.mxu0 0.0
        %1551 = vmatprep.subr.mxu0 0.0
        %1552 = vmatpush1.msra.mxu0 0.0
        %1553 = vmatprep.subr.mxu0 0.0
        %1554 = vmatpush1.msra.mxu0 0.0
        %1555 = vmatprep.subr.mxu0 0.0
        %1556 = vmatpush1.msra.mxu0 0.0
        %1557 = vmatprep.subr.mxu0 0.0
        %1558 = vmatpush1.msra.mxu0 0.0
        %1559 = vmatprep.subr.mxu0 0.0
        %1560 = vmatpush1.msra.mxu0 0.0
        %1561 = vmatprep.subr.mxu0 0.0
        %1562 = vmatpush1.msra.mxu0 0.0
        %1563 = vmatprep.subr.mxu0 0.0
        %1564 = vmatpush1.msra.mxu0 0.0
        %1565 = vmatprep.subr.mxu0 0.0
        %1566 = vmatpush1.msra.mxu0 0.0
        %1567 = vmatprep.subr.mxu0 0.0
        %1568 = vmatpush1.msra.mxu0 0.0
        %1569 = vmatprep.subr.mxu0 0.0
        %1570 = vmatpush1.msra.mxu0 0.0
        %1571 = vmatprep.subr.mxu0 0.0
        %1572 = vmatpush1.msra.mxu0 0.0
        %1573 = vmatprep.subr.mxu0 0.0
        %1574 = vmatpush1.msra.mxu0 %v1009
        %1575 = vmatprep.subr.mxu0 0.0
        %1576 = vmatpush1.msra.mxu0 %v1008
        %1577 = vmatprep.subr.mxu0 0.0
        %1578 = vmatpush1.msra.mxu0 %v1007
        %1579 = vmatprep.subr.mxu0 0.0
        %1580 = vmatpush1.msra.mxu0 %v1006
        %1581 = vmatprep.subr.mxu0 0.0
        %1582 = vmatpush2.msra.mxu0 0.0
        %1583 = vmatprep.subr.mxu0 0.0
        %1584 = vmatpush2.msra.mxu0 0.0
        %1585 = vmatprep.subr.mxu0 0.0
        %1586 = vmatpush2.msra.mxu0 0.0
        %1587 = vmatprep.subr.mxu0 0.0
        %1588 = vmatpush2.msra.mxu0 0.0
        %1589 = vmatprep.subr.mxu0 0.0
        %1590 = vmatpush2.msra.mxu0 0.0
        %1591 = vmatprep.subr.mxu0 0.0
        %1592 = vmatpush2.msra.mxu0 0.0
        %1593 = vmatprep.subr.mxu0 0.0
        %1594 = vmatpush2.msra.mxu0 0.0
        %1595 = vmatprep.subr.mxu0 0.0
        %1596 = vmatpush2.msra.mxu0 0.0
        %1597 = vmatprep.subr.mxu0 0.0
        %1598 = vmatpush2.msra.mxu0 0.0
        %1599 = vmatprep.subr.mxu0 0.0
        %1600 = vmatpush2.msra.mxu0 0.0
        %1601 = vmatprep.subr.mxu0 0.0
        %1602 = vmatpush2.msra.mxu0 0.0
        %1603 = vmatprep.subr.mxu0 0.0
        %1604 = vmatpush2.msra.mxu0 0.0
        %1605 = vmatprep.subr.mxu0 0.0
        %1606 = vmatpush2.msra.mxu0 0.0
        %1607 = vmatprep.subr.mxu0 0.0
        %1608 = vmatpush2.msra.mxu0 0.0
        %1609 = vmatprep.subr.mxu0 0.0
        %1610 = vmatpush2.msra.mxu0 0.0
        %1611 = vmatprep.subr.mxu0 0.0
        %1612 = vmatpush2.msra.mxu0 0.0
        %1613 = vmatprep.mubr.f32.mxu0 0.0
        %1614 = vmatmul.mubr.f32.gmra.mxu0 %v1547
        %v1615 = vpop.f32.mrf.mxu0
        %v1616 = vadd.f32 0.0, %v1615
        %v1617 = vpop.f32.mrf.mxu0
        %1618 = vdwg.mxu0
        %v1619 = vadd.f32 %v890, %v1616
        %v1620 = vxor.u32 %v1619, 2147483648
        %v1621 = vmul.f32 %v1620, 1.442695
        %v1622 = vpow.pop %v1621
        %v1623 = vadd.f32 %v1622, 1.0
        %v1624 = vrcp.pop %v1623
        %v1625 = vmul.f32 1.0, %v1624
        %v1626 = vtanh.pop %v1619
        %v1627 = vmul.f32 %v1625, %v1531
        %1629 = vrot.lane.b32.xlu0 %v1626, 32
        %v1630 = vpop.permute.xlu0 %1629
        %v1632 = vmul.f32 %v1625, %v1630
        %1634 = vrot.lane.b32.xlu0 %v1632, 32
        %v1635 = vpop.permute.xlu0 %1634
        %v1637 = vadd.f32 %v1627, %v1635
        %v1638 = vtanh.pop %v1637
        %1640 = vrot.lane.b32.xlu0 %v1638, 32
        %v1641 = vpop.permute.xlu0 %1640
        %v1643 = vmul.f32 %v1625, %v1641
        %1645 = vrot.lane.b32.xlu0 %v1003, 64
        %v1646 = vpop.permute.xlu0 %1645
        %v1648 = vmul.f32 %v1643, %v1646
        %v1649 = vadd.f32 %v1543, %v1648
        %1651 = vrot.lane.b32.xlu0 %v1643, 64
        %v1652 = vpop.permute.xlu0 %1651
        %v1653 = vsel %vm711, %v1652, 0
        %1655 = vmatprep.subr.mxu0 0.0
        %1656 = vmatpush1.msra.mxu0 0.0
        %1657 = vmatprep.subr.mxu0 0.0
        %1658 = vmatpush1.msra.mxu0 0.0
        %1659 = vmatprep.subr.mxu0 0.0
        %1660 = vmatpush1.msra.mxu0 0.0
        %1661 = vmatprep.subr.mxu0 0.0
        %1662 = vmatpush1.msra.mxu0 0.0
        %1663 = vmatprep.subr.mxu0 0.0
        %1664 = vmatpush1.msra.mxu0 0.0
        %1665 = vmatprep.subr.mxu0 0.0
        %1666 = vmatpush1.msra.mxu0 0.0
        %1667 = vmatprep.subr.mxu0 0.0
        %1668 = vmatpush1.msra.mxu0 0.0
        %1669 = vmatprep.subr.mxu0 0.0
        %1670 = vmatpush1.msra.mxu0 0.0
        %1671 = vmatprep.subr.mxu0 0.0
        %1672 = vmatpush1.msra.mxu0 0.0
        %1673 = vmatprep.subr.mxu0 0.0
        %1674 = vmatpush1.msra.mxu0 0.0
        %1675 = vmatprep.subr.mxu0 0.0
        %1676 = vmatpush1.msra.mxu0 0.0
        %1677 = vmatprep.subr.mxu0 0.0
        %1678 = vmatpush1.msra.mxu0 0.0
        %1679 = vmatprep.subr.mxu0 0.0
        %1680 = vmatpush1.msra.mxu0 %v1009
        %1681 = vmatprep.subr.mxu0 0.0
        %1682 = vmatpush1.msra.mxu0 %v1008
        %1683 = vmatprep.subr.mxu0 0.0
        %1684 = vmatpush1.msra.mxu0 %v1007
        %1685 = vmatprep.subr.mxu0 0.0
        %1686 = vmatpush1.msra.mxu0 %v1006
        %1687 = vmatprep.subr.mxu0 0.0
        %1688 = vmatpush2.msra.mxu0 0.0
        %1689 = vmatprep.subr.mxu0 0.0
        %1690 = vmatpush2.msra.mxu0 0.0
        %1691 = vmatprep.subr.mxu0 0.0
        %1692 = vmatpush2.msra.mxu0 0.0
        %1693 = vmatprep.subr.mxu0 0.0
        %1694 = vmatpush2.msra.mxu0 0.0
        %1695 = vmatprep.subr.mxu0 0.0
        %1696 = vmatpush2.msra.mxu0 0.0
        %1697 = vmatprep.subr.mxu0 0.0
        %1698 = vmatpush2.msra.mxu0 0.0
        %1699 = vmatprep.subr.mxu0 0.0
        %1700 = vmatpush2.msra.mxu0 0.0
        %1701 = vmatprep.subr.mxu0 0.0
        %1702 = vmatpush2.msra.mxu0 0.0
        %1703 = vmatprep.subr.mxu0 0.0
        %1704 = vmatpush2.msra.mxu0 0.0
        %1705 = vmatprep.subr.mxu0 0.0
        %1706 = vmatpush2.msra.mxu0 0.0
        %1707 = vmatprep.subr.mxu0 0.0
        %1708 = vmatpush2.msra.mxu0 0.0
        %1709 = vmatprep.subr.mxu0 0.0
        %1710 = vmatpush2.msra.mxu0 0.0
        %1711 = vmatprep.subr.mxu0 0.0
        %1712 = vmatpush2.msra.mxu0 0.0
        %1713 = vmatprep.subr.mxu0 0.0
        %1714 = vmatpush2.msra.mxu0 0.0
        %1715 = vmatprep.subr.mxu0 0.0
        %1716 = vmatpush2.msra.mxu0 0.0
        %1717 = vmatprep.subr.mxu0 0.0
        %1718 = vmatpush2.msra.mxu0 0.0
        %1719 = vmatprep.mubr.f32.mxu0 0.0
        %1720 = vmatmul.mubr.f32.gmra.mxu0 %v1653
        %v1721 = vpop.f32.mrf.mxu0
        %v1722 = vadd.f32 0.0, %v1721
        %v1723 = vpop.f32.mrf.mxu0
        %1724 = vdwg.mxu0
        %v1725 = vadd.f32 %v895, %v1722
        %v1726 = vxor.u32 %v1725, 2147483648
        %v1727 = vmul.f32 %v1726, 1.442695
        %v1728 = vpow.pop %v1727
        %v1729 = vadd.f32 %v1728, 1.0
        %v1730 = vrcp.pop %v1729
        %v1731 = vmul.f32 1.0, %v1730
        %v1732 = vtanh.pop %v1725
        %v1733 = vmul.f32 %v1731, %v1637
        %1735 = vrot.lane.b32.xlu0 %v1732, 32
        %v1736 = vpop.permute.xlu0 %1735
        %v1738 = vmul.f32 %v1731, %v1736
        %1740 = vrot.lane.b32.xlu0 %v1738, 32
        %v1741 = vpop.permute.xlu0 %1740
        %v1743 = vadd.f32 %v1733, %v1741
        %v1744 = vtanh.pop %v1743
        %1746 = vrot.lane.b32.xlu0 %v1744, 32
        %v1747 = vpop.permute.xlu0 %1746
        %v1749 = vmul.f32 %v1731, %v1747
        %1751 = vrot.lane.b32.xlu0 %v1004, 64
        %v1752 = vpop.permute.xlu0 %1751
        %v1754 = vmul.f32 %v1749, %v1752
        %v1755 = vadd.f32 %v1649, %v1754
        %1757 = vrot.lane.b32.xlu0 %v1749, 64
        %v1758 = vpop.permute.xlu0 %1757
        %v1759 = vsel %vm711, %v1758, 0
        %1761 = vmatprep.subr.mxu0 0.0
        %1762 = vmatpush1.msra.mxu0 0.0
        %1763 = vmatprep.subr.mxu0 0.0
        %1764 = vmatpush1.msra.mxu0 0.0
        %1765 = vmatprep.subr.mxu0 0.0
        %1766 = vmatpush1.msra.mxu0 0.0
        %1767 = vmatprep.subr.mxu0 0.0
        %1768 = vmatpush1.msra.mxu0 0.0
        %1769 = vmatprep.subr.mxu0 0.0
        %1770 = vmatpush1.msra.mxu0 0.0
        %1771 = vmatprep.subr.mxu0 0.0
        %1772 = vmatpush1.msra.mxu0 0.0
        %1773 = vmatprep.subr.mxu0 0.0
        %1774 = vmatpush1.msra.mxu0 0.0
        %1775 = vmatprep.subr.mxu0 0.0
        %1776 = vmatpush1.msra.mxu0 0.0
        %1777 = vmatprep.subr.mxu0 0.0
        %1778 = vmatpush1.msra.mxu0 0.0
        %1779 = vmatprep.subr.mxu0 0.0
        %1780 = vmatpush1.msra.mxu0 0.0
        %1781 = vmatprep.subr.mxu0 0.0
        %1782 = vmatpush1.msra.mxu0 0.0
        %1783 = vmatprep.subr.mxu0 0.0
        %1784 = vmatpush1.msra.mxu0 0.0
        %1785 = vmatprep.subr.mxu0 0.0
        %1786 = vmatpush1.msra.mxu0 %v1009
        %1787 = vmatprep.subr.mxu0 0.0
        %1788 = vmatpush1.msra.mxu0 %v1008
        %1789 = vmatprep.subr.mxu0 0.0
        %1790 = vmatpush1.msra.mxu0 %v1007
        %1791 = vmatprep.subr.mxu0 0.0
        %1792 = vmatpush1.msra.mxu0 %v1006
        %1793 = vmatprep.subr.mxu0 0.0
        %1794 = vmatpush2.msra.mxu0 0.0
        %1795 = vmatprep.subr.mxu0 0.0
        %1796 = vmatpush2.msra.mxu0 0.0
        %1797 = vmatprep.subr.mxu0 0.0
        %1798 = vmatpush2.msra.mxu0 0.0
        %1799 = vmatprep.subr.mxu0 0.0
        %1800 = vmatpush2.msra.mxu0 0.0
        %1801 = vmatprep.subr.mxu0 0.0
        %1802 = vmatpush2.msra.mxu0 0.0
        %1803 = vmatprep.subr.mxu0 0.0
        %1804 = vmatpush2.msra.mxu0 0.0
        %1805 = vmatprep.subr.mxu0 0.0
        %1806 = vmatpush2.msra.mxu0 0.0
        %1807 = vmatprep.subr.mxu0 0.0
        %1808 = vmatpush2.msra.mxu0 0.0
        %1809 = vmatprep.subr.mxu0 0.0
        %1810 = vmatpush2.msra.mxu0 0.0
        %1811 = vmatprep.subr.mxu0 0.0
        %1812 = vmatpush2.msra.mxu0 0.0
        %1813 = vmatprep.subr.mxu0 0.0
        %1814 = vmatpush2.msra.mxu0 0.0
        %1815 = vmatprep.subr.mxu0 0.0
        %1816 = vmatpush2.msra.mxu0 0.0
        %1817 = vmatprep.subr.mxu0 0.0
        %1818 = vmatpush2.msra.mxu0 0.0
        %1819 = vmatprep.subr.mxu0 0.0
        %1820 = vmatpush2.msra.mxu0 0.0
        %1821 = vmatprep.subr.mxu0 0.0
        %1822 = vmatpush2.msra.mxu0 0.0
        %1823 = vmatprep.subr.mxu0 0.0
        %1824 = vmatpush2.msra.mxu0 0.0
        %1825 = vmatprep.mubr.f32.mxu0 0.0
        %1826 = vmatmul.mubr.f32.gmra.mxu0 %v1759
        %v1827 = vpop.f32.mrf.mxu0
        %v1828 = vadd.f32 0.0, %v1827
        %v1829 = vpop.f32.mrf.mxu0
        %1830 = vdwg.mxu0
        %v1831 = vadd.f32 %v898, %v1828
        %v1832 = vxor.u32 %v1831, 2147483648
        %v1833 = vmul.f32 %v1832, 1.442695
        %v1834 = vpow.pop %v1833
        %v1835 = vadd.f32 %v1834, 1.0
        %v1836 = vrcp.pop %v1835
        %v1837 = vmul.f32 1.0, %v1836
        %v1838 = vtanh.pop %v1831
        %v1839 = vmul.f32 %v1837, %v1743
        %1841 = vrot.lane.b32.xlu0 %v1838, 32
        %v1842 = vpop.permute.xlu0 %1841
        %v1844 = vmul.f32 %v1837, %v1842
        %1846 = vrot.lane.b32.xlu0 %v1844, 32
        %v1847 = vpop.permute.xlu0 %1846
        %v1849 = vadd.f32 %v1839, %v1847
        %v1850 = vtanh.pop %v1849
        %1852 = vrot.lane.b32.xlu0 %v1850, 32
        %v1853 = vpop.permute.xlu0 %1852
        %v1855 = vmul.f32 %v1837, %v1853
        %1857 = vrot.lane.b32.xlu0 %v1005, 64
        %v1858 = vpop.permute.xlu0 %1857
        %v1860 = vmul.f32 %v1855, %v1858
        %v1861 = vadd.f32 %v1755, %v1860
        %v1862 = vld [vmem:[%s10] sm:$0xff]
        %v1863 = vld [vmem:[%s10 + $0x8] sm:$0xff]
        %v1864 = vld [vmem:[%s10 + $0x10] sm:$0xff]
        %v1865 = vld [vmem:[%s10 + $0x18] sm:$0xff]
        %v1866 = vld [vmem:[%s11] sm:$0x1]
        %v1868 = vlaneseq
        %v1869 = vshrl.u32 %v1868, 7
        %v1870 = vsub.s32 0, %v1869
        %v1871 = vrot.slane %v1866, %v1870
        %1874 = vrot.lane.b32.xlu0 %v1861, 64
        %v1875 = vpop.permute.xlu0 %1874
        %v1876 = vsel %vm711, %v1875, 0
        %1878 = vmatprep.subr.mxu0 0.0
        %1879 = vmatpush1.msra.mxu0 0.0
        %1880 = vmatprep.subr.mxu0 0.0
        %1881 = vmatpush1.msra.mxu0 0.0
        %1882 = vmatprep.subr.mxu0 0.0
        %1883 = vmatpush1.msra.mxu0 0.0
        %1884 = vmatprep.subr.mxu0 0.0
        %1885 = vmatpush1.msra.mxu0 0.0
        %1886 = vmatprep.subr.mxu0 0.0
        %1887 = vmatpush1.msra.mxu0 0.0
        %1888 = vmatprep.subr.mxu0 0.0
        %1889 = vmatpush1.msra.mxu0 0.0
        %1890 = vmatprep.subr.mxu0 0.0
        %1891 = vmatpush1.msra.mxu0 0.0
        %1892 = vmatprep.subr.mxu0 0.0
        %1893 = vmatpush1.msra.mxu0 0.0
        %1894 = vmatprep.subr.mxu0 0.0
        %1895 = vmatpush1.msra.mxu0 0.0
        %1896 = vmatprep.subr.mxu0 0.0
        %1897 = vmatpush1.msra.mxu0 0.0
        %1898 = vmatprep.subr.mxu0 0.0
        %1899 = vmatpush1.msra.mxu0 0.0
        %1900 = vmatprep.subr.mxu0 0.0
        %1901 = vmatpush1.msra.mxu0 0.0
        %1902 = vmatprep.subr.mxu0 0.0
        %1903 = vmatpush1.msra.mxu0 %v1865
        %1904 = vmatprep.subr.mxu0 0.0
        %1905 = vmatpush1.msra.mxu0 %v1864
        %1906 = vmatprep.subr.mxu0 0.0
        %1907 = vmatpush1.msra.mxu0 %v1863
        %1908 = vmatprep.subr.mxu0 0.0
        %1909 = vmatpush1.msra.mxu0 %v1862
        %1910 = vmatprep.subr.mxu0 0.0
        %1911 = vmatpush2.msra.mxu0 0.0
        %1912 = vmatprep.subr.mxu0 0.0
        %1913 = vmatpush2.msra.mxu0 0.0
        %1914 = vmatprep.subr.mxu0 0.0
        %1915 = vmatpush2.msra.mxu0 0.0
        %1916 = vmatprep.subr.mxu0 0.0
        %1917 = vmatpush2.msra.mxu0 0.0
        %1918 = vmatprep.subr.mxu0 0.0
        %1919 = vmatpush2.msra.mxu0 0.0
        %1920 = vmatprep.subr.mxu0 0.0
        %1921 = vmatpush2.msra.mxu0 0.0
        %1922 = vmatprep.subr.mxu0 0.0
        %1923 = vmatpush2.msra.mxu0 0.0
        %1924 = vmatprep.subr.mxu0 0.0
        %1925 = vmatpush2.msra.mxu0 0.0
        %1926 = vmatprep.subr.mxu0 0.0
        %1927 = vmatpush2.msra.mxu0 0.0
        %1928 = vmatprep.subr.mxu0 0.0
        %1929 = vmatpush2.msra.mxu0 0.0
        %1930 = vmatprep.subr.mxu0 0.0
        %1931 = vmatpush2.msra.mxu0 0.0
        %1932 = vmatprep.subr.mxu0 0.0
        %1933 = vmatpush2.msra.mxu0 0.0
        %1934 = vmatprep.subr.mxu0 0.0
        %1935 = vmatpush2.msra.mxu0 0.0
        %1936 = vmatprep.subr.mxu0 0.0
        %1937 = vmatpush2.msra.mxu0 0.0
        %1938 = vmatprep.subr.mxu0 0.0
        %1939 = vmatpush2.msra.mxu0 0.0
        %1940 = vmatprep.subr.mxu0 0.0
        %1941 = vmatpush2.msra.mxu0 0.0
        %1942 = vmatprep.mubr.f32.mxu0 0.0
        %1943 = vmatmul.mubr.f32.gmra.mxu0 %v1876
        %v1944 = vpop.f32.mrf.mxu0
        %v1945 = vadd.f32 %v1871, %v1944
        %v1946 = vpop.f32.mrf.mxu0
        %1947 = vdwg.mxu0
        %v1948 = vtanh.pop %v1945
        %1949 = vst [vmem:[%s674] sm:$0xff] %v1948
        %p1950 = scmp.lt.s32.totalorder %s23, 1
        %s1951 = scalar_select %p1950, %s23, 1
        %s1952 = smul.addr %s1951, 8
        %s1953 = scalar_lea.vmem %s12, %s1952
        // Predicated region
        $region183: #{bilstm_crf_forward.2} parent=169 // pred_check
          %p1954 = pneg %p318
        $region184: #{bilstm_crf_forward.2} parent=169 // pred_check_branch
          %1956 = sbr.rel (%p1954) target = $region186
        $region185: #{bilstm_crf_forward.2} parent=169 // pred_region
          _
        $region186: #{bilstm_crf_forward.2} parent=169 // pred_fallthru
          _
      $region170: #{bilstm_crf_forward.2} parent=5 // pred_fallthru
        _
      %p1957 = scmp.le.s32.totalorder 2, %s18
      // Predicated region
      $region187: #{bilstm_crf_forward.2} parent=5 // pred_check
        %p1958 = pneg %p1957
      $region188: #{bilstm_crf_forward.2} parent=5 // pred_check_branch
        %1960 = sbr.rel (%p1958) target = $region190
      $region189: #{bilstm_crf_forward.2} parent=5 // pred_region
        %s1961 = ssub.s32 %s18, 2
        // Predicated region
        $region191: #{bilstm_crf_forward.2} parent=189 // pred_check
          %p1962 = pneg %p324
        $region192: #{bilstm_crf_forward.2} parent=189 // pred_check_branch
          %1964 = sbr.rel (%p1962) target = $region194
        $region193: #{bilstm_crf_forward.2} parent=189 // pred_region
          %p1965 = scmp.lt.s32.totalorder %s24, 1
          %s1966 = scalar_select %p1965, %s24, 1
          %s1967 = smul.addr %s1966, 8
          %s1968 = scalar_lea.vmem %s12, %s1967
        $region194: #{bilstm_crf_forward.2} parent=189 // pred_fallthru
          _
      $region190: #{bilstm_crf_forward.2} parent=5 // pred_fallthru
        _
    $region6: #{bilstm_crf_forward.2} parent=1 // loop_footer
      %s22 = sadd.s32 1, %s18
    $region7: #{bilstm_crf_forward.2} parent=1 // loop_footer_branch
      %17 = sbr.rel target = $region3
    $region8: #{bilstm_crf_forward.2} parent=1 // loop_exit
      _

// kernel: bilstm_crf_forward.3
$region0: #{bilstm_crf_forward.3}
  #allocation0 [shape = 'u32[]', space=smem, size = 0x4, offset = 0x4, fixed_abs, tag = 'smem constant byte address 0x4 - core index']
  #allocation1 [shape = 'u32[144,128]{1,0:T(1,128)}', space=vmem, size = 0x12000, scoped, tag = 'internal scratch']
  %s0 = inlined_call_operand.vmem [shape: f32[6,8,128], index: 0, kind: input, shape index: {}]
  %s1 = inlined_call_operand.vmem [shape: f32[8,32], index: 1, kind: input, shape index: {}]
  %s2 = inlined_call_operand.vmem [shape: f32[8,32], index: 2, kind: input, shape index: {}]
  %s3 = inlined_call_operand.vmem [shape: bf16[128,128], index: 3, kind: input, shape index: {}]
  %s4 = inlined_call_operand.vmem [shape: f32[1,128], index: 4, kind: input, shape index: {}]
  %s5 = inlined_call_operand.vmem [shape: f32[32,128], index: 5, kind: input, shape index: {}]
  %s6 = inlined_call_operand.vmem [shape: f32[32,128], index: 6, kind: input, shape index: {}]
  %s7 = inlined_call_operand.vmem [shape: f32[32,128], index: 7, kind: input, shape index: {}]
  %s8 = inlined_call_operand.vmem [shape: f32[1,128], index: 8, kind: input, shape index: {}]
  %s9 = inlined_call_operand.vmem [shape: f32[6,8,128], index: 9, kind: output, shape index: {}]
  %s10 = sld [smem:[#allocation0]]
  $region46: #{bilstm_crf_forward.3} parent=0
    _
  %s12 = ssub.s32 1, %s10
  %s13 = scalar_select 0, %s12, %s10
  // Predicated region
  $region2: #{bilstm_crf_forward.3} parent=0 // pred_check
    _
  $region3: #{bilstm_crf_forward.3} parent=0 // pred_check_branch
    %15 = sbr.rel (0) target = $region5
  $region4: #{bilstm_crf_forward.3} parent=0 // pred_region
    _
  $region5: #{bilstm_crf_forward.3} parent=0 // pred_fallthru
    _
  // Predicated region
  $region6: #{bilstm_crf_forward.3} parent=0 // pred_check
    _
  $region7: #{bilstm_crf_forward.3} parent=0 // pred_check_branch
    %17 = sbr.rel (0) target = $region9
  $region8: #{bilstm_crf_forward.3} parent=0 // pred_region
    _
  $region9: #{bilstm_crf_forward.3} parent=0 // pred_fallthru
    _
  // Predicated region
  $region10: #{bilstm_crf_forward.3} parent=0 // pred_check
    _
  $region11: #{bilstm_crf_forward.3} parent=0 // pred_check_branch
    %19 = sbr.rel (0) target = $region13
  $region12: #{bilstm_crf_forward.3} parent=0 // pred_region
    _
  $region13: #{bilstm_crf_forward.3} parent=0 // pred_fallthru
    _
  // Predicated region
  $region14: #{bilstm_crf_forward.3} parent=0 // pred_check
    _
  $region15: #{bilstm_crf_forward.3} parent=0 // pred_check_branch
    %21 = sbr.rel (0) target = $region17
  $region16: #{bilstm_crf_forward.3} parent=0 // pred_region
    _
  $region17: #{bilstm_crf_forward.3} parent=0 // pred_fallthru
    _
  // Predicated region
  $region18: #{bilstm_crf_forward.3} parent=0 // pred_check
    _
  $region19: #{bilstm_crf_forward.3} parent=0 // pred_check_branch
    %23 = sbr.rel (0) target = $region21
  $region20: #{bilstm_crf_forward.3} parent=0 // pred_region
    _
  $region21: #{bilstm_crf_forward.3} parent=0 // pred_fallthru
    _
  // Predicated region
  $region22: #{bilstm_crf_forward.3} parent=0 // pred_check
    _
  $region23: #{bilstm_crf_forward.3} parent=0 // pred_check_branch
    %25 = sbr.rel (0) target = $region25
  $region24: #{bilstm_crf_forward.3} parent=0 // pred_region
    _
  $region25: #{bilstm_crf_forward.3} parent=0 // pred_fallthru
    _
  // Predicated region
  $region26: #{bilstm_crf_forward.3} parent=0 // pred_check
    _
  $region27: #{bilstm_crf_forward.3} parent=0 // pred_check_branch
    %27 = sbr.rel (0) target = $region29
  $region28: #{bilstm_crf_forward.3} parent=0 // pred_region
    _
  $region29: #{bilstm_crf_forward.3} parent=0 // pred_fallthru
    _
  // Predicated region
  $region30: #{bilstm_crf_forward.3} parent=0 // pred_check
    _
  $region31: #{bilstm_crf_forward.3} parent=0 // pred_check_branch
    %29 = sbr.rel (0) target = $region33
  $region32: #{bilstm_crf_forward.3} parent=0 // pred_region
    _
  $region33: #{bilstm_crf_forward.3} parent=0 // pred_fallthru
    _
  // Predicated region
  $region34: #{bilstm_crf_forward.3} parent=0 // pred_check
    _
  $region35: #{bilstm_crf_forward.3} parent=0 // pred_check_branch
    %31 = sbr.rel (0) target = $region37
  $region36: #{bilstm_crf_forward.3} parent=0 // pred_region
    _
  $region37: #{bilstm_crf_forward.3} parent=0 // pred_fallthru
    _
  %v33 = vld [vmem:[%s0] sm:$0xff]
  %v34 = vld [vmem:[%s0 + $0x8] sm:$0xff]
  %v35 = vld [vmem:[%s0 + $0x10] sm:$0xff]
  %v36 = vld [vmem:[%s0 + $0x18] sm:$0xff]
  %v37 = vld [vmem:[%s0 + $0x20] sm:$0xff]
  %v38 = vld [vmem:[%s0 + $0x28] sm:$0xff]
  %v39 = vpack.c.bf16 %v34, %v33
  %v40 = vpack.c.bf16 %v36, %v35
  %v41 = vpack.c.bf16 %v38, %v37
  %v42 = vld [vmem:[%s3] sm:$0xf]
  %v43 = vld [vmem:[%s3 + $0x4] sm:$0xf]
  %v44 = vld [vmem:[%s3 + $0x8] sm:$0xf]
  %v45 = vld [vmem:[%s3 + $0xc] sm:$0xf]
  %v46 = vld [vmem:[%s3 + $0x10] sm:$0xf]
  %v47 = vld [vmem:[%s3 + $0x14] sm:$0xf]
  %v48 = vld [vmem:[%s3 + $0x18] sm:$0xf]
  %v49 = vld [vmem:[%s3 + $0x1c] sm:$0xf]
  %v50 = vld [vmem:[%s3 + $0x20] sm:$0xf]
  %v51 = vld [vmem:[%s3 + $0x24] sm:$0xf]
  %v52 = vld [vmem:[%s3 + $0x28] sm:$0xf]
  %v53 = vld [vmem:[%s3 + $0x2c] sm:$0xf]
  %v54 = vld [vmem:[%s3 + $0x30] sm:$0xf]
  %v55 = vld [vmem:[%s3 + $0x34] sm:$0xf]
  %v56 = vld [vmem:[%s3 + $0x38] sm:$0xf]
  %v57 = vld [vmem:[%s3 + $0x3c] sm:$0xf]
  %v58 = vld [vmem:[%s4] sm:$0x1]
  %v60 = vlaneseq
  %v61 = vshrl.u32 %v60, 7
  %v62 = vsub.s32 0, %v61
  %v63 = vrot.slane %v58, %v62
  %v81 = vunpack.c.l.b16 %v42
  %v82 = vunpack.c.l.b16 %v43
  %v83 = vunpack.c.l.b16 %v44
  %v84 = vunpack.c.l.b16 %v45
  %v85 = vunpack.c.l.b16 %v46
  %v86 = vunpack.c.l.b16 %v47
  %v87 = vunpack.c.l.b16 %v48
  %v88 = vunpack.c.l.b16 %v49
  %v89 = vunpack.c.l.b16 %v50
  %v90 = vunpack.c.l.b16 %v51
  %v91 = vunpack.c.l.b16 %v52
  %v92 = vunpack.c.l.b16 %v53
  %v93 = vunpack.c.l.b16 %v54
  %v94 = vunpack.c.l.b16 %v55
  %v95 = vunpack.c.l.b16 %v56
  %v96 = vunpack.c.l.b16 %v57
  %v97 = vpack.c.b16 %v82, %v81
  %v98 = vpack.c.b16 %v84, %v83
  %v99 = vpack.c.b16 %v86, %v85
  %v100 = vpack.c.b16 %v88, %v87
  %v101 = vpack.c.b16 %v90, %v89
  %v102 = vpack.c.b16 %v92, %v91
  %v103 = vpack.c.b16 %v94, %v93
  %v104 = vpack.c.b16 %v96, %v95
  %113 = vmatprep.subr.bf16.mxu0 0
  %114 = vmatpush1.bf16.msra.mxu0 %v104
  %115 = vmatprep.subr.bf16.mxu0 0
  %116 = vmatpush1.bf16.msra.mxu0 %v103
  %117 = vmatprep.subr.bf16.mxu0 0
  %118 = vmatpush1.bf16.msra.mxu0 %v102
  %119 = vmatprep.subr.bf16.mxu0 0
  %120 = vmatpush1.bf16.msra.mxu0 %v101
  %121 = vmatprep.subr.bf16.mxu0 0
  %122 = vmatpush1.bf16.msra.mxu0 %v100
  %123 = vmatprep.subr.bf16.mxu0 0
  %124 = vmatpush1.bf16.msra.mxu0 %v99
  %125 = vmatprep.subr.bf16.mxu0 0
  %126 = vmatpush1.bf16.msra.mxu0 %v98
  %127 = vmatprep.subr.bf16.mxu0 0
  %128 = vmatpush1.bf16.msra.mxu0 %v97
  %129 = vmatprep.subr.bf16.mxu0 0
  %130 = vmatpush2.bf16.msra.mxu0 0
  %131 = vmatprep.subr.bf16.mxu0 0
  %132 = vmatpush2.bf16.msra.mxu0 0
  %133 = vmatprep.subr.bf16.mxu0 0
  %134 = vmatpush2.bf16.msra.mxu0 0
  %135 = vmatprep.subr.bf16.mxu0 0
  %136 = vmatpush2.bf16.msra.mxu0 0
  %137 = vmatprep.subr.bf16.mxu0 0
  %138 = vmatpush2.bf16.msra.mxu0 0
  %139 = vmatprep.subr.bf16.mxu0 0
  %140 = vmatpush2.bf16.msra.mxu0 0
  %141 = vmatprep.subr.bf16.mxu0 0
  %142 = vmatpush2.bf16.msra.mxu0 0
  %143 = vmatprep.subr.bf16.mxu0 0
  %144 = vmatpush2.bf16.msra.mxu0 0
  %145 = vmatprep.mubr.bf16.mxu0 0
  %146 = vmatmul.mubr.bf16.gmra.mxu0 %v39
  %v147 = vpop.f32.mrf.mxu0
  %v148 = vadd.f32 %v63, %v147
  %v149 = vpop.f32.mrf.mxu0
  %v150 = vpop.f32.mrf.mxu0
  %v151 = vadd.f32 %v63, %v150
  %v152 = vpop.f32.mrf.mxu0
  %153 = vmatprep.mubr.bf16.mxu0 0
  %154 = vmatmul.mubr.bf16.gmra.mxu0 %v40
  %v155 = vpop.f32.mrf.mxu0
  %v156 = vadd.f32 %v63, %v155
  %v157 = vpop.f32.mrf.mxu0
  %v158 = vpop.f32.mrf.mxu0
  %v159 = vadd.f32 %v63, %v158
  %v160 = vpop.f32.mrf.mxu0
  %161 = vmatprep.mubr.bf16.mxu0 0
  %162 = vmatmul.mubr.bf16.gmra.mxu0 %v41
  %v163 = vpop.f32.mrf.mxu0
  %v164 = vadd.f32 %v63, %v163
  %v165 = vpop.f32.mrf.mxu0
  %v166 = vpop.f32.mrf.mxu0
  %v167 = vadd.f32 %v63, %v166
  %v168 = vpop.f32.mrf.mxu0
  %169 = vdwg.mxu0
  %v170 = vld [vmem:[%s5] sm:$0xff]
  %v171 = vld [vmem:[%s5 + $0x8] sm:$0xff]
  %v172 = vld [vmem:[%s5 + $0x10] sm:$0xff]
  %v173 = vld [vmem:[%s5 + $0x18] sm:$0xff]
  %v174 = vld [vmem:[%s6] sm:$0xff]
  %v175 = vld [vmem:[%s6 + $0x8] sm:$0xff]
  %v176 = vld [vmem:[%s6 + $0x10] sm:$0xff]
  %v177 = vld [vmem:[%s6 + $0x18] sm:$0xff]
  %v178 = vld [vmem:[%s7] sm:$0xff]
  %v179 = vld [vmem:[%s7 + $0x8] sm:$0xff]
  %v180 = vld [vmem:[%s7 + $0x10] sm:$0xff]
  %v181 = vld [vmem:[%s7 + $0x18] sm:$0xff]
  %v182 = vld [vmem:[%s1] sm:$0xff]
  %v183 = vld [vmem:[%s2] sm:$0xff]
  %v184 = vld [vmem:[%s8] sm:$0x1]
  %v186 = vlaneseq
  %v187 = vshrl.u32 %v186, 7
  %v188 = vsub.s32 0, %v187
  %v189 = vrot.slane %v184, %v188
  %191 = vst [vmem:[%s9] sm:$0xff] %v189
  %192 = vst [vmem:[%s9 + $0x8] sm:$0xff] %v189
  %193 = vst [vmem:[%s9 + $0x10] sm:$0xff] %v189
  %194 = vst [vmem:[%s9 + $0x18] sm:$0xff] %v189
  %195 = vst [vmem:[%s9 + $0x20] sm:$0xff] %v189
  %196 = vst [vmem:[%s9 + $0x28] sm:$0xff] %v189
  %vm197 = vcmask 261120
  %v199 = vsel %vm197, %v182, 0
  %201 = vmatprep.subr.mxu0 0.0
  %202 = vmatpush1.msra.mxu0 0.0
  %203 = vmatprep.subr.mxu0 0.0
  %204 = vmatpush1.msra.mxu0 0.0
  %205 = vmatprep.subr.mxu0 0.0
  %206 = vmatpush1.msra.mxu0 0.0
  %207 = vmatprep.subr.mxu0 0.0
  %208 = vmatpush1.msra.mxu0 0.0
  %209 = vmatprep.subr.mxu0 0.0
  %210 = vmatpush1.msra.mxu0 0.0
  %211 = vmatprep.subr.mxu0 0.0
  %212 = vmatpush1.msra.mxu0 0.0
  %213 = vmatprep.subr.mxu0 0.0
  %214 = vmatpush1.msra.mxu0 0.0
  %215 = vmatprep.subr.mxu0 0.0
  %216 = vmatpush1.msra.mxu0 0.0
  %217 = vmatprep.subr.mxu0 0.0
  %218 = vmatpush1.msra.mxu0 0.0
  %219 = vmatprep.subr.mxu0 0.0
  %220 = vmatpush1.msra.mxu0 0.0
  %221 = vmatprep.subr.mxu0 0.0
  %222 = vmatpush1.msra.mxu0 0.0
  %223 = vmatprep.subr.mxu0 0.0
  %224 = vmatpush1.msra.mxu0 0.0
  %225 = vmatprep.subr.mxu0 0.0
  %226 = vmatpush1.msra.mxu0 %v173
  %227 = vmatprep.subr.mxu0 0.0
  %228 = vmatpush1.msra.mxu0 %v172
  %229 = vmatprep.subr.mxu0 0.0
  %230 = vmatpush1.msra.mxu0 %v171
  %231 = vmatprep.subr.mxu0 0.0
  %232 = vmatpush1.msra.mxu0 %v170
  %233 = vmatprep.subr.mxu0 0.0
  %234 = vmatpush2.msra.mxu0 0.0
  %235 = vmatprep.subr.mxu0 0.0
  %236 = vmatpush2.msra.mxu0 0.0
  %237 = vmatprep.subr.mxu0 0.0
  %238 = vmatpush2.msra.mxu0 0.0
  %239 = vmatprep.subr.mxu0 0.0
  %240 = vmatpush2.msra.mxu0 0.0
  %241 = vmatprep.subr.mxu0 0.0
  %242 = vmatpush2.msra.mxu0 0.0
  %243 = vmatprep.subr.mxu0 0.0
  %244 = vmatpush2.msra.mxu0 0.0
  %245 = vmatprep.subr.mxu0 0.0
  %246 = vmatpush2.msra.mxu0 0.0
  %247 = vmatprep.subr.mxu0 0.0
  %248 = vmatpush2.msra.mxu0 0.0
  %249 = vmatprep.subr.mxu0 0.0
  %250 = vmatpush2.msra.mxu0 0.0
  %251 = vmatprep.subr.mxu0 0.0
  %252 = vmatpush2.msra.mxu0 0.0
  %253 = vmatprep.subr.mxu0 0.0
  %254 = vmatpush2.msra.mxu0 0.0
  %255 = vmatprep.subr.mxu0 0.0
  %256 = vmatpush2.msra.mxu0 0.0
  %257 = vmatprep.subr.mxu0 0.0
  %258 = vmatpush2.msra.mxu0 0.0
  %259 = vmatprep.subr.mxu0 0.0
  %260 = vmatpush2.msra.mxu0 0.0
  %261 = vmatprep.subr.mxu0 0.0
  %262 = vmatpush2.msra.mxu0 0.0
  %263 = vmatprep.subr.mxu0 0.0
  %264 = vmatpush2.msra.mxu0 0.0
  %265 = vmatprep.mubr.f32.mxu0 0.0
  %266 = vmatmul.mubr.f32.gmra.mxu0 %v199
  %v267 = vpop.f32.mrf.mxu0
  %v268 = vadd.f32 0.0, %v267
  %v269 = vpop.f32.mrf.mxu0
  %270 = vdwg.mxu0
  %v271 = vadd.f32 %v148, %v268
  %v272 = vxor.u32 %v271, 2147483648
  %v273 = vmul.f32 %v272, 1.442695
  %v274 = vpow.pop %v273
  %v275 = vadd.f32 %v274, 1.0
  %v276 = vrcp.pop %v275
  %v277 = vmul.f32 1.0, %v276
  %v278 = vtanh.pop %v271
  %280 = vrot.lane.b32.xlu0 %v183, 32
  %v281 = vpop.permute.xlu0 %280
  %v283 = vmul.f32 %v277, %v281
  %285 = vrot.lane.b32.xlu0 %v278, 32
  %v286 = vpop.permute.xlu0 %285
  %v288 = vmul.f32 %v277, %v286
  %290 = vrot.lane.b32.xlu0 %v288, 32
  %v291 = vpop.permute.xlu0 %290
  %v293 = vadd.f32 %v283, %v291
  %v294 = vtanh.pop %v293
  %296 = vrot.lane.b32.xlu0 %v294, 32
  %v297 = vpop.permute.xlu0 %296
  %v299 = vmul.f32 %v277, %v297
  %v300 = vld [vmem:[%s9] sm:$0xff]
  %302 = vrot.lane.b32.xlu0 %v299, 64
  %v303 = vpop.permute.xlu0 %302
  %v304 = vsel %vm197, %v303, 0
  %306 = vmatprep.subr.mxu0 0.0
  %307 = vmatpush1.msra.mxu0 0.0
  %308 = vmatprep.subr.mxu0 0.0
  %309 = vmatpush1.msra.mxu0 0.0
  %310 = vmatprep.subr.mxu0 0.0
  %311 = vmatpush1.msra.mxu0 0.0
  %312 = vmatprep.subr.mxu0 0.0
  %313 = vmatpush1.msra.mxu0 0.0
  %314 = vmatprep.subr.mxu0 0.0
  %315 = vmatpush1.msra.mxu0 0.0
  %316 = vmatprep.subr.mxu0 0.0
  %317 = vmatpush1.msra.mxu0 0.0
  %318 = vmatprep.subr.mxu0 0.0
  %319 = vmatpush1.msra.mxu0 0.0
  %320 = vmatprep.subr.mxu0 0.0
  %321 = vmatpush1.msra.mxu0 0.0
  %322 = vmatprep.subr.mxu0 0.0
  %323 = vmatpush1.msra.mxu0 0.0
  %324 = vmatprep.subr.mxu0 0.0
  %325 = vmatpush1.msra.mxu0 0.0
  %326 = vmatprep.subr.mxu0 0.0
  %327 = vmatpush1.msra.mxu0 0.0
  %328 = vmatprep.subr.mxu0 0.0
  %329 = vmatpush1.msra.mxu0 0.0
  %330 = vmatprep.subr.mxu0 0.0
  %331 = vmatpush1.msra.mxu0 %v177
  %332 = vmatprep.subr.mxu0 0.0
  %333 = vmatpush1.msra.mxu0 %v176
  %334 = vmatprep.subr.mxu0 0.0
  %335 = vmatpush1.msra.mxu0 %v175
  %336 = vmatprep.subr.mxu0 0.0
  %337 = vmatpush1.msra.mxu0 %v174
  %338 = vmatprep.subr.mxu0 0.0
  %339 = vmatpush2.msra.mxu0 0.0
  %340 = vmatprep.subr.mxu0 0.0
  %341 = vmatpush2.msra.mxu0 0.0
  %342 = vmatprep.subr.mxu0 0.0
  %343 = vmatpush2.msra.mxu0 0.0
  %344 = vmatprep.subr.mxu0 0.0
  %345 = vmatpush2.msra.mxu0 0.0
  %346 = vmatprep.subr.mxu0 0.0
  %347 = vmatpush2.msra.mxu0 0.0
  %348 = vmatprep.subr.mxu0 0.0
  %349 = vmatpush2.msra.mxu0 0.0
  %350 = vmatprep.subr.mxu0 0.0
  %351 = vmatpush2.msra.mxu0 0.0
  %352 = vmatprep.subr.mxu0 0.0
  %353 = vmatpush2.msra.mxu0 0.0
  %354 = vmatprep.subr.mxu0 0.0
  %355 = vmatpush2.msra.mxu0 0.0
  %356 = vmatprep.subr.mxu0 0.0
  %357 = vmatpush2.msra.mxu0 0.0
  %358 = vmatprep.subr.mxu0 0.0
  %359 = vmatpush2.msra.mxu0 0.0
  %360 = vmatprep.subr.mxu0 0.0
  %361 = vmatpush2.msra.mxu0 0.0
  %362 = vmatprep.subr.mxu0 0.0
  %363 = vmatpush2.msra.mxu0 0.0
  %364 = vmatprep.subr.mxu0 0.0
  %365 = vmatpush2.msra.mxu0 0.0
  %366 = vmatprep.subr.mxu0 0.0
  %367 = vmatpush2.msra.mxu0 0.0
  %368 = vmatprep.subr.mxu0 0.0
  %369 = vmatpush2.msra.mxu0 0.0
  %370 = vmatprep.mubr.f32.mxu0 0.0
  %371 = vmatmul.mubr.f32.gmra.mxu0 %v304
  %v372 = vpop.f32.mrf.mxu0
  %v373 = vadd.f32 0.0, %v372
  %v374 = vpop.f32.mrf.mxu0
  %375 = vdwg.mxu0
  %v376 = vadd.f32 %v300, %v373
  %377 = vst [vmem:[%s9] sm:$0xff] %v376
  %s378 = scalar_lea.vmem %s9, 40
  %v379 = vld [vmem:[%s378] sm:$0xff]
  %380 = vmatprep.subr.mxu0 0.0
  %381 = vmatpush1.msra.mxu0 0.0
  %382 = vmatprep.subr.mxu0 0.0
  %383 = vmatpush1.msra.mxu0 0.0
  %384 = vmatprep.subr.mxu0 0.0
  %385 = vmatpush1.msra.mxu0 0.0
  %386 = vmatprep.subr.mxu0 0.0
  %387 = vmatpush1.msra.mxu0 0.0
  %388 = vmatprep.subr.mxu0 0.0
  %389 = vmatpush1.msra.mxu0 0.0
  %390 = vmatprep.subr.mxu0 0.0
  %391 = vmatpush1.msra.mxu0 0.0
  %392 = vmatprep.subr.mxu0 0.0
  %393 = vmatpush1.msra.mxu0 0.0
  %394 = vmatprep.subr.mxu0 0.0
  %395 = vmatpush1.msra.mxu0 0.0
  %396 = vmatprep.subr.mxu0 0.0
  %397 = vmatpush1.msra.mxu0 0.0
  %398 = vmatprep.subr.mxu0 0.0
  %399 = vmatpush1.msra.mxu0 0.0
  %400 = vmatprep.subr.mxu0 0.0
  %401 = vmatpush1.msra.mxu0 0.0
  %402 = vmatprep.subr.mxu0 0.0
  %403 = vmatpush1.msra.mxu0 0.0
  %404 = vmatprep.subr.mxu0 0.0
  %405 = vmatpush1.msra.mxu0 %v181
  %406 = vmatprep.subr.mxu0 0.0
  %407 = vmatpush1.msra.mxu0 %v180
  %408 = vmatprep.subr.mxu0 0.0
  %409 = vmatpush1.msra.mxu0 %v179
  %410 = vmatprep.subr.mxu0 0.0
  %411 = vmatpush1.msra.mxu0 %v178
  %412 = vmatprep.subr.mxu0 0.0
  %413 = vmatpush2.msra.mxu0 0.0
  %414 = vmatprep.subr.mxu0 0.0
  %415 = vmatpush2.msra.mxu0 0.0
  %416 = vmatprep.subr.mxu0 0.0
  %417 = vmatpush2.msra.mxu0 0.0
  %418 = vmatprep.subr.mxu0 0.0
  %419 = vmatpush2.msra.mxu0 0.0
  %420 = vmatprep.subr.mxu0 0.0
  %421 = vmatpush2.msra.mxu0 0.0
  %422 = vmatprep.subr.mxu0 0.0
  %423 = vmatpush2.msra.mxu0 0.0
  %424 = vmatprep.subr.mxu0 0.0
  %425 = vmatpush2.msra.mxu0 0.0
  %426 = vmatprep.subr.mxu0 0.0
  %427 = vmatpush2.msra.mxu0 0.0
  %428 = vmatprep.subr.mxu0 0.0
  %429 = vmatpush2.msra.mxu0 0.0
  %430 = vmatprep.subr.mxu0 0.0
  %431 = vmatpush2.msra.mxu0 0.0
  %432 = vmatprep.subr.mxu0 0.0
  %433 = vmatpush2.msra.mxu0 0.0
  %434 = vmatprep.subr.mxu0 0.0
  %435 = vmatpush2.msra.mxu0 0.0
  %436 = vmatprep.subr.mxu0 0.0
  %437 = vmatpush2.msra.mxu0 0.0
  %438 = vmatprep.subr.mxu0 0.0
  %439 = vmatpush2.msra.mxu0 0.0
  %440 = vmatprep.subr.mxu0 0.0
  %441 = vmatpush2.msra.mxu0 0.0
  %442 = vmatprep.subr.mxu0 0.0
  %443 = vmatpush2.msra.mxu0 0.0
  %444 = vmatprep.mubr.f32.mxu0 0.0
  %445 = vmatmul.mubr.f32.gmra.mxu0 %v304
  %v446 = vpop.f32.mrf.mxu0
  %v447 = vadd.f32 0.0, %v446
  %v448 = vpop.f32.mrf.mxu0
  %449 = vdwg.mxu0
  %v450 = vadd.f32 %v379, %v447
  %451 = vst [vmem:[%s378] sm:$0xff] %v450
  %452 = vmatprep.subr.mxu0 0.0
  %453 = vmatpush1.msra.mxu0 0.0
  %454 = vmatprep.subr.mxu0 0.0
  %455 = vmatpush1.msra.mxu0 0.0
  %456 = vmatprep.subr.mxu0 0.0
  %457 = vmatpush1.msra.mxu0 0.0
  %458 = vmatprep.subr.mxu0 0.0
  %459 = vmatpush1.msra.mxu0 0.0
  %460 = vmatprep.subr.mxu0 0.0
  %461 = vmatpush1.msra.mxu0 0.0
  %462 = vmatprep.subr.mxu0 0.0
  %463 = vmatpush1.msra.mxu0 0.0
  %464 = vmatprep.subr.mxu0 0.0
  %465 = vmatpush1.msra.mxu0 0.0
  %466 = vmatprep.subr.mxu0 0.0
  %467 = vmatpush1.msra.mxu0 0.0
  %468 = vmatprep.subr.mxu0 0.0
  %469 = vmatpush1.msra.mxu0 0.0
  %470 = vmatprep.subr.mxu0 0.0
  %471 = vmatpush1.msra.mxu0 0.0
  %472 = vmatprep.subr.mxu0 0.0
  %473 = vmatpush1.msra.mxu0 0.0
  %474 = vmatprep.subr.mxu0 0.0
  %475 = vmatpush1.msra.mxu0 0.0
  %476 = vmatprep.subr.mxu0 0.0
  %477 = vmatpush1.msra.mxu0 %v173
  %478 = vmatprep.subr.mxu0 0.0
  %479 = vmatpush1.msra.mxu0 %v172
  %480 = vmatprep.subr.mxu0 0.0
  %481 = vmatpush1.msra.mxu0 %v171
  %482 = vmatprep.subr.mxu0 0.0
  %483 = vmatpush1.msra.mxu0 %v170
  %484 = vmatprep.subr.mxu0 0.0
  %485 = vmatpush2.msra.mxu0 0.0
  %486 = vmatprep.subr.mxu0 0.0
  %487 = vmatpush2.msra.mxu0 0.0
  %488 = vmatprep.subr.mxu0 0.0
  %489 = vmatpush2.msra.mxu0 0.0
  %490 = vmatprep.subr.mxu0 0.0
  %491 = vmatpush2.msra.mxu0 0.0
  %492 = vmatprep.subr.mxu0 0.0
  %493 = vmatpush2.msra.mxu0 0.0
  %494 = vmatprep.subr.mxu0 0.0
  %495 = vmatpush2.msra.mxu0 0.0
  %496 = vmatprep.subr.mxu0 0.0
  %497 = vmatpush2.msra.mxu0 0.0
  %498 = vmatprep.subr.mxu0 0.0
  %499 = vmatpush2.msra.mxu0 0.0
  %500 = vmatprep.subr.mxu0 0.0
  %501 = vmatpush2.msra.mxu0 0.0
  %502 = vmatprep.subr.mxu0 0.0
  %503 = vmatpush2.msra.mxu0 0.0
  %504 = vmatprep.subr.mxu0 0.0
  %505 = vmatpush2.msra.mxu0 0.0
  %506 = vmatprep.subr.mxu0 0.0
  %507 = vmatpush2.msra.mxu0 0.0
  %508 = vmatprep.subr.mxu0 0.0
  %509 = vmatpush2.msra.mxu0 0.0
  %510 = vmatprep.subr.mxu0 0.0
  %511 = vmatpush2.msra.mxu0 0.0
  %512 = vmatprep.subr.mxu0 0.0
  %513 = vmatpush2.msra.mxu0 0.0
  %514 = vmatprep.subr.mxu0 0.0
  %515 = vmatpush2.msra.mxu0 0.0
  %516 = vmatprep.mubr.f32.mxu0 0.0
  %517 = vmatmul.mubr.f32.gmra.mxu0 %v304
  %v518 = vpop.f32.mrf.mxu0
  %v519 = vadd.f32 0.0, %v518
  %v520 = vpop.f32.mrf.mxu0
  %521 = vdwg.mxu0
  %v522 = vadd.f32 %v151, %v519
  %v523 = vxor.u32 %v522, 2147483648
  %v524 = vmul.f32 %v523, 1.442695
  %v525 = vpow.pop %v524
  %v526 = vadd.f32 %v525, 1.0
  %v527 = vrcp.pop %v526
  %v528 = vmul.f32 1.0, %v527
  %v529 = vtanh.pop %v522
  %v530 = vmul.f32 %v528, %v293
  %532 = vrot.lane.b32.xlu0 %v529, 32
  %v533 = vpop.permute.xlu0 %532
  %v535 = vmul.f32 %v528, %v533
  %537 = vrot.lane.b32.xlu0 %v535, 32
  %v538 = vpop.permute.xlu0 %537
  %v540 = vadd.f32 %v530, %v538
  %v541 = vtanh.pop %v540
  %543 = vrot.lane.b32.xlu0 %v541, 32
  %v544 = vpop.permute.xlu0 %543
  %v546 = vmul.f32 %v528, %v544
  %s547 = scalar_lea.vmem %s9, 8
  %v548 = vld [vmem:[%s547] sm:$0xff]
  %550 = vrot.lane.b32.xlu0 %v546, 64
  %v551 = vpop.permute.xlu0 %550
  %v552 = vsel %vm197, %v551, 0
  %554 = vmatprep.subr.mxu0 0.0
  %555 = vmatpush1.msra.mxu0 0.0
  %556 = vmatprep.subr.mxu0 0.0
  %557 = vmatpush1.msra.mxu0 0.0
  %558 = vmatprep.subr.mxu0 0.0
  %559 = vmatpush1.msra.mxu0 0.0
  %560 = vmatprep.subr.mxu0 0.0
  %561 = vmatpush1.msra.mxu0 0.0
  %562 = vmatprep.subr.mxu0 0.0
  %563 = vmatpush1.msra.mxu0 0.0
  %564 = vmatprep.subr.mxu0 0.0
  %565 = vmatpush1.msra.mxu0 0.0
  %566 = vmatprep.subr.mxu0 0.0
  %567 = vmatpush1.msra.mxu0 0.0
  %568 = vmatprep.subr.mxu0 0.0
  %569 = vmatpush1.msra.mxu0 0.0
  %570 = vmatprep.subr.mxu0 0.0
  %571 = vmatpush1.msra.mxu0 0.0
  %572 = vmatprep.subr.mxu0 0.0
  %573 = vmatpush1.msra.mxu0 0.0
  %574 = vmatprep.subr.mxu0 0.0
  %575 = vmatpush1.msra.mxu0 0.0
  %576 = vmatprep.subr.mxu0 0.0
  %577 = vmatpush1.msra.mxu0 0.0
  %578 = vmatprep.subr.mxu0 0.0
  %579 = vmatpush1.msra.mxu0 %v177
  %580 = vmatprep.subr.mxu0 0.0
  %581 = vmatpush1.msra.mxu0 %v176
  %582 = vmatprep.subr.mxu0 0.0
  %583 = vmatpush1.msra.mxu0 %v175
  %584 = vmatprep.subr.mxu0 0.0
  %585 = vmatpush1.msra.mxu0 %v174
  %586 = vmatprep.subr.mxu0 0.0
  %587 = vmatpush2.msra.mxu0 0.0
  %588 = vmatprep.subr.mxu0 0.0
  %589 = vmatpush2.msra.mxu0 0.0
  %590 = vmatprep.subr.mxu0 0.0
  %591 = vmatpush2.msra.mxu0 0.0
  %592 = vmatprep.subr.mxu0 0.0
  %593 = vmatpush2.msra.mxu0 0.0
  %594 = vmatprep.subr.mxu0 0.0
  %595 = vmatpush2.msra.mxu0 0.0
  %596 = vmatprep.subr.mxu0 0.0
  %597 = vmatpush2.msra.mxu0 0.0
  %598 = vmatprep.subr.mxu0 0.0
  %599 = vmatpush2.msra.mxu0 0.0
  %600 = vmatprep.subr.mxu0 0.0
  %601 = vmatpush2.msra.mxu0 0.0
  %602 = vmatprep.subr.mxu0 0.0
  %603 = vmatpush2.msra.mxu0 0.0
  %604 = vmatprep.subr.mxu0 0.0
  %605 = vmatpush2.msra.mxu0 0.0
  %606 = vmatprep.subr.mxu0 0.0
  %607 = vmatpush2.msra.mxu0 0.0
  %608 = vmatprep.subr.mxu0 0.0
  %609 = vmatpush2.msra.mxu0 0.0
  %610 = vmatprep.subr.mxu0 0.0
  %611 = vmatpush2.msra.mxu0 0.0
  %612 = vmatprep.subr.mxu0 0.0
  %613 = vmatpush2.msra.mxu0 0.0
  %614 = vmatprep.subr.mxu0 0.0
  %615 = vmatpush2.msra.mxu0 0.0
  %616 = vmatprep.subr.mxu0 0.0
  %617 = vmatpush2.msra.mxu0 0.0
  %618 = vmatprep.mubr.f32.mxu0 0.0
  %619 = vmatmul.mubr.f32.gmra.mxu0 %v552
  %v620 = vpop.f32.mrf.mxu0
  %v621 = vadd.f32 0.0, %v620
  %v622 = vpop.f32.mrf.mxu0
  %623 = vdwg.mxu0
  %v624 = vadd.f32 %v548, %v621
  %625 = vst [vmem:[%s547] sm:$0xff] %v624
  %s626 = scalar_lea.vmem %s9, 32
  %v627 = vld [vmem:[%s626] sm:$0xff]
  %628 = vmatprep.subr.mxu0 0.0
  %629 = vmatpush1.msra.mxu0 0.0
  %630 = vmatprep.subr.mxu0 0.0
  %631 = vmatpush1.msra.mxu0 0.0
  %632 = vmatprep.subr.mxu0 0.0
  %633 = vmatpush1.msra.mxu0 0.0
  %634 = vmatprep.subr.mxu0 0.0
  %635 = vmatpush1.msra.mxu0 0.0
  %636 = vmatprep.subr.mxu0 0.0
  %637 = vmatpush1.msra.mxu0 0.0
  %638 = vmatprep.subr.mxu0 0.0
  %639 = vmatpush1.msra.mxu0 0.0
  %640 = vmatprep.subr.mxu0 0.0
  %641 = vmatpush1.msra.mxu0 0.0
  %642 = vmatprep.subr.mxu0 0.0
  %643 = vmatpush1.msra.mxu0 0.0
  %644 = vmatprep.subr.mxu0 0.0
  %645 = vmatpush1.msra.mxu0 0.0
  %646 = vmatprep.subr.mxu0 0.0
  %647 = vmatpush1.msra.mxu0 0.0
  %648 = vmatprep.subr.mxu0 0.0
  %649 = vmatpush1.msra.mxu0 0.0
  %650 = vmatprep.subr.mxu0 0.0
  %651 = vmatpush1.msra.mxu0 0.0
  %652 = vmatprep.subr.mxu0 0.0
  %653 = vmatpush1.msra.mxu0 %v181
  %654 = vmatprep.subr.mxu0 0.0
  %655 = vmatpush1.msra.mxu0 %v180
  %656 = vmatprep.subr.mxu0 0.0
  %657 = vmatpush1.msra.mxu0 %v179
  %658 = vmatprep.subr.mxu0 0.0
  %659 = vmatpush1.msra.mxu0 %v178
  %660 = vmatprep.subr.mxu0 0.0
  %661 = vmatpush2.msra.mxu0 0.0
  %662 = vmatprep.subr.mxu0 0.0
  %663 = vmatpush2.msra.mxu0 0.0
  %664 = vmatprep.subr.mxu0 0.0
  %665 = vmatpush2.msra.mxu0 0.0
  %666 = vmatprep.subr.mxu0 0.0
  %667 = vmatpush2.msra.mxu0 0.0
  %668 = vmatprep.subr.mxu0 0.0
  %669 = vmatpush2.msra.mxu0 0.0
  %670 = vmatprep.subr.mxu0 0.0
  %671 = vmatpush2.msra.mxu0 0.0
  %672 = vmatprep.subr.mxu0 0.0
  %673 = vmatpush2.msra.mxu0 0.0
  %674 = vmatprep.subr.mxu0 0.0
  %675 = vmatpush2.msra.mxu0 0.0
  %676 = vmatprep.subr.mxu0 0.0
  %677 = vmatpush2.msra.mxu0 0.0
  %678 = vmatprep.subr.mxu0 0.0
  %679 = vmatpush2.msra.mxu0 0.0
  %680 = vmatprep.subr.mxu0 0.0
  %681 = vmatpush2.msra.mxu0 0.0
  %682 = vmatprep.subr.mxu0 0.0
  %683 = vmatpush2.msra.mxu0 0.0
  %684 = vmatprep.subr.mxu0 0.0
  %685 = vmatpush2.msra.mxu0 0.0
  %686 = vmatprep.subr.mxu0 0.0
  %687 = vmatpush2.msra.mxu0 0.0
  %688 = vmatprep.subr.mxu0 0.0
  %689 = vmatpush2.msra.mxu0 0.0
  %690 = vmatprep.subr.mxu0 0.0
  %691 = vmatpush2.msra.mxu0 0.0
  %692 = vmatprep.mubr.f32.mxu0 0.0
  %693 = vmatmul.mubr.f32.gmra.mxu0 %v552
  %v694 = vpop.f32.mrf.mxu0
  %v695 = vadd.f32 0.0, %v694
  %v696 = vpop.f32.mrf.mxu0
  %697 = vdwg.mxu0
  %v698 = vadd.f32 %v627, %v695
  %699 = vst [vmem:[%s626] sm:$0xff] %v698
  %700 = vmatprep.subr.mxu0 0.0
  %701 = vmatpush1.msra.mxu0 0.0
  %702 = vmatprep.subr.mxu0 0.0
  %703 = vmatpush1.msra.mxu0 0.0
  %704 = vmatprep.subr.mxu0 0.0
  %705 = vmatpush1.msra.mxu0 0.0
  %706 = vmatprep.subr.mxu0 0.0
  %707 = vmatpush1.msra.mxu0 0.0
  %708 = vmatprep.subr.mxu0 0.0
  %709 = vmatpush1.msra.mxu0 0.0
  %710 = vmatprep.subr.mxu0 0.0
  %711 = vmatpush1.msra.mxu0 0.0
  %712 = vmatprep.subr.mxu0 0.0
  %713 = vmatpush1.msra.mxu0 0.0
  %714 = vmatprep.subr.mxu0 0.0
  %715 = vmatpush1.msra.mxu0 0.0
  %716 = vmatprep.subr.mxu0 0.0
  %717 = vmatpush1.msra.mxu0 0.0
  %718 = vmatprep.subr.mxu0 0.0
  %719 = vmatpush1.msra.mxu0 0.0
  %720 = vmatprep.subr.mxu0 0.0
  %721 = vmatpush1.msra.mxu0 0.0
  %722 = vmatprep.subr.mxu0 0.0
  %723 = vmatpush1.msra.mxu0 0.0
  %724 = vmatprep.subr.mxu0 0.0
  %725 = vmatpush1.msra.mxu0 %v173
  %726 = vmatprep.subr.mxu0 0.0
  %727 = vmatpush1.msra.mxu0 %v172
  %728 = vmatprep.subr.mxu0 0.0
  %729 = vmatpush1.msra.mxu0 %v171
  %730 = vmatprep.subr.mxu0 0.0
  %731 = vmatpush1.msra.mxu0 %v170
  %732 = vmatprep.subr.mxu0 0.0
  %733 = vmatpush2.msra.mxu0 0.0
  %734 = vmatprep.subr.mxu0 0.0
  %735 = vmatpush2.msra.mxu0 0.0
  %736 = vmatprep.subr.mxu0 0.0
  %737 = vmatpush2.msra.mxu0 0.0
  %738 = vmatprep.subr.mxu0 0.0
  %739 = vmatpush2.msra.mxu0 0.0
  %740 = vmatprep.subr.mxu0 0.0
  %741 = vmatpush2.msra.mxu0 0.0
  %742 = vmatprep.subr.mxu0 0.0
  %743 = vmatpush2.msra.mxu0 0.0
  %744 = vmatprep.subr.mxu0 0.0
  %745 = vmatpush2.msra.mxu0 0.0
  %746 = vmatprep.subr.mxu0 0.0
  %747 = vmatpush2.msra.mxu0 0.0
  %748 = vmatprep.subr.mxu0 0.0
  %749 = vmatpush2.msra.mxu0 0.0
  %750 = vmatprep.subr.mxu0 0.0
  %751 = vmatpush2.msra.mxu0 0.0
  %752 = vmatprep.subr.mxu0 0.0
  %753 = vmatpush2.msra.mxu0 0.0
  %754 = vmatprep.subr.mxu0 0.0
  %755 = vmatpush2.msra.mxu0 0.0
  %756 = vmatprep.subr.mxu0 0.0
  %757 = vmatpush2.msra.mxu0 0.0
  %758 = vmatprep.subr.mxu0 0.0
  %759 = vmatpush2.msra.mxu0 0.0
  %760 = vmatprep.subr.mxu0 0.0
  %761 = vmatpush2.msra.mxu0 0.0
  %762 = vmatprep.subr.mxu0 0.0
  %763 = vmatpush2.msra.mxu0 0.0
  %764 = vmatprep.mubr.f32.mxu0 0.0
  %765 = vmatmul.mubr.f32.gmra.mxu0 %v552
  %v766 = vpop.f32.mrf.mxu0
  %v767 = vadd.f32 0.0, %v766
  %v768 = vpop.f32.mrf.mxu0
  %769 = vdwg.mxu0
  %v770 = vadd.f32 %v156, %v767
  %v771 = vxor.u32 %v770, 2147483648
  %v772 = vmul.f32 %v771, 1.442695
  %v773 = vpow.pop %v772
  %v774 = vadd.f32 %v773, 1.0
  %v775 = vrcp.pop %v774
  %v776 = vmul.f32 1.0, %v775
  %v777 = vtanh.pop %v770
  %v778 = vmul.f32 %v776, %v540
  %780 = vrot.lane.b32.xlu0 %v777, 32
  %v781 = vpop.permute.xlu0 %780
  %v783 = vmul.f32 %v776, %v781
  %785 = vrot.lane.b32.xlu0 %v783, 32
  %v786 = vpop.permute.xlu0 %785
  %v788 = vadd.f32 %v778, %v786
  %v789 = vtanh.pop %v788
  %791 = vrot.lane.b32.xlu0 %v789, 32
  %v792 = vpop.permute.xlu0 %791
  %v794 = vmul.f32 %v776, %v792
  %s795 = scalar_lea.vmem %s9, 16
  %v796 = vld [vmem:[%s795] sm:$0xff]
  %798 = vrot.lane.b32.xlu0 %v794, 64
  %v799 = vpop.permute.xlu0 %798
  %v800 = vsel %vm197, %v799, 0
  %802 = vmatprep.subr.mxu0 0.0
  %803 = vmatpush1.msra.mxu0 0.0
  %804 = vmatprep.subr.mxu0 0.0
  %805 = vmatpush1.msra.mxu0 0.0
  %806 = vmatprep.subr.mxu0 0.0
  %807 = vmatpush1.msra.mxu0 0.0
  %808 = vmatprep.subr.mxu0 0.0
  %809 = vmatpush1.msra.mxu0 0.0
  %810 = vmatprep.subr.mxu0 0.0
  %811 = vmatpush1.msra.mxu0 0.0
  %812 = vmatprep.subr.mxu0 0.0
  %813 = vmatpush1.msra.mxu0 0.0
  %814 = vmatprep.subr.mxu0 0.0
  %815 = vmatpush1.msra.mxu0 0.0
  %816 = vmatprep.subr.mxu0 0.0
  %817 = vmatpush1.msra.mxu0 0.0
  %818 = vmatprep.subr.mxu0 0.0
  %819 = vmatpush1.msra.mxu0 0.0
  %820 = vmatprep.subr.mxu0 0.0
  %821 = vmatpush1.msra.mxu0 0.0
  %822 = vmatprep.subr.mxu0 0.0
  %823 = vmatpush1.msra.mxu0 0.0
  %824 = vmatprep.subr.mxu0 0.0
  %825 = vmatpush1.msra.mxu0 0.0
  %826 = vmatprep.subr.mxu0 0.0
  %827 = vmatpush1.msra.mxu0 %v177
  %828 = vmatprep.subr.mxu0 0.0
  %829 = vmatpush1.msra.mxu0 %v176
  %830 = vmatprep.subr.mxu0 0.0
  %831 = vmatpush1.msra.mxu0 %v175
  %832 = vmatprep.subr.mxu0 0.0
  %833 = vmatpush1.msra.mxu0 %v174
  %834 = vmatprep.subr.mxu0 0.0
  %835 = vmatpush2.msra.mxu0 0.0
  %836 = vmatprep.subr.mxu0 0.0
  %837 = vmatpush2.msra.mxu0 0.0
  %838 = vmatprep.subr.mxu0 0.0
  %839 = vmatpush2.msra.mxu0 0.0
  %840 = vmatprep.subr.mxu0 0.0
  %841 = vmatpush2.msra.mxu0 0.0
  %842 = vmatprep.subr.mxu0 0.0
  %843 = vmatpush2.msra.mxu0 0.0
  %844 = vmatprep.subr.mxu0 0.0
  %845 = vmatpush2.msra.mxu0 0.0
  %846 = vmatprep.subr.mxu0 0.0
  %847 = vmatpush2.msra.mxu0 0.0
  %848 = vmatprep.subr.mxu0 0.0
  %849 = vmatpush2.msra.mxu0 0.0
  %850 = vmatprep.subr.mxu0 0.0
  %851 = vmatpush2.msra.mxu0 0.0
  %852 = vmatprep.subr.mxu0 0.0
  %853 = vmatpush2.msra.mxu0 0.0
  %854 = vmatprep.subr.mxu0 0.0
  %855 = vmatpush2.msra.mxu0 0.0
  %856 = vmatprep.subr.mxu0 0.0
  %857 = vmatpush2.msra.mxu0 0.0
  %858 = vmatprep.subr.mxu0 0.0
  %859 = vmatpush2.msra.mxu0 0.0
  %860 = vmatprep.subr.mxu0 0.0
  %861 = vmatpush2.msra.mxu0 0.0
  %862 = vmatprep.subr.mxu0 0.0
  %863 = vmatpush2.msra.mxu0 0.0
  %864 = vmatprep.subr.mxu0 0.0
  %865 = vmatpush2.msra.mxu0 0.0
  %866 = vmatprep.mubr.f32.mxu0 0.0
  %867 = vmatmul.mubr.f32.gmra.mxu0 %v800
  %v868 = vpop.f32.mrf.mxu0
  %v869 = vadd.f32 0.0, %v868
  %v870 = vpop.f32.mrf.mxu0
  %871 = vdwg.mxu0
  %v872 = vadd.f32 %v796, %v869
  %873 = vst [vmem:[%s795] sm:$0xff] %v872
  %s874 = scalar_lea.vmem %s9, 24
  %v875 = vld [vmem:[%s874] sm:$0xff]
  %876 = vmatprep.subr.mxu0 0.0
  %877 = vmatpush1.msra.mxu0 0.0
  %878 = vmatprep.subr.mxu0 0.0
  %879 = vmatpush1.msra.mxu0 0.0
  %880 = vmatprep.subr.mxu0 0.0
  %881 = vmatpush1.msra.mxu0 0.0
  %882 = vmatprep.subr.mxu0 0.0
  %883 = vmatpush1.msra.mxu0 0.0
  %884 = vmatprep.subr.mxu0 0.0
  %885 = vmatpush1.msra.mxu0 0.0
  %886 = vmatprep.subr.mxu0 0.0
  %887 = vmatpush1.msra.mxu0 0.0
  %888 = vmatprep.subr.mxu0 0.0
  %889 = vmatpush1.msra.mxu0 0.0
  %890 = vmatprep.subr.mxu0 0.0
  %891 = vmatpush1.msra.mxu0 0.0
  %892 = vmatprep.subr.mxu0 0.0
  %893 = vmatpush1.msra.mxu0 0.0
  %894 = vmatprep.subr.mxu0 0.0
  %895 = vmatpush1.msra.mxu0 0.0
  %896 = vmatprep.subr.mxu0 0.0
  %897 = vmatpush1.msra.mxu0 0.0
  %898 = vmatprep.subr.mxu0 0.0
  %899 = vmatpush1.msra.mxu0 0.0
  %900 = vmatprep.subr.mxu0 0.0
  %901 = vmatpush1.msra.mxu0 %v181
  %902 = vmatprep.subr.mxu0 0.0
  %903 = vmatpush1.msra.mxu0 %v180
  %904 = vmatprep.subr.mxu0 0.0
  %905 = vmatpush1.msra.mxu0 %v179
  %906 = vmatprep.subr.mxu0 0.0
  %907 = vmatpush1.msra.mxu0 %v178
  %908 = vmatprep.subr.mxu0 0.0
  %909 = vmatpush2.msra.mxu0 0.0
  %910 = vmatprep.subr.mxu0 0.0
  %911 = vmatpush2.msra.mxu0 0.0
  %912 = vmatprep.subr.mxu0 0.0
  %913 = vmatpush2.msra.mxu0 0.0
  %914 = vmatprep.subr.mxu0 0.0
  %915 = vmatpush2.msra.mxu0 0.0
  %916 = vmatprep.subr.mxu0 0.0
  %917 = vmatpush2.msra.mxu0 0.0
  %918 = vmatprep.subr.mxu0 0.0
  %919 = vmatpush2.msra.mxu0 0.0
  %920 = vmatprep.subr.mxu0 0.0
  %921 = vmatpush2.msra.mxu0 0.0
  %922 = vmatprep.subr.mxu0 0.0
  %923 = vmatpush2.msra.mxu0 0.0
  %924 = vmatprep.subr.mxu0 0.0
  %925 = vmatpush2.msra.mxu0 0.0
  %926 = vmatprep.subr.mxu0 0.0
  %927 = vmatpush2.msra.mxu0 0.0
  %928 = vmatprep.subr.mxu0 0.0
  %929 = vmatpush2.msra.mxu0 0.0
  %930 = vmatprep.subr.mxu0 0.0
  %931 = vmatpush2.msra.mxu0 0.0
  %932 = vmatprep.subr.mxu0 0.0
  %933 = vmatpush2.msra.mxu0 0.0
  %934 = vmatprep.subr.mxu0 0.0
  %935 = vmatpush2.msra.mxu0 0.0
  %936 = vmatprep.subr.mxu0 0.0
  %937 = vmatpush2.msra.mxu0 0.0
  %938 = vmatprep.subr.mxu0 0.0
  %939 = vmatpush2.msra.mxu0 0.0
  %940 = vmatprep.mubr.f32.mxu0 0.0
  %941 = vmatmul.mubr.f32.gmra.mxu0 %v800
  %v942 = vpop.f32.mrf.mxu0
  %v943 = vadd.f32 0.0, %v942
  %v944 = vpop.f32.mrf.mxu0
  %945 = vdwg.mxu0
  %v946 = vadd.f32 %v875, %v943
  %947 = vst [vmem:[%s874] sm:$0xff] %v946
  %948 = vmatprep.subr.mxu0 0.0
  %949 = vmatpush1.msra.mxu0 0.0
  %950 = vmatprep.subr.mxu0 0.0
  %951 = vmatpush1.msra.mxu0 0.0
  %952 = vmatprep.subr.mxu0 0.0
  %953 = vmatpush1.msra.mxu0 0.0
  %954 = vmatprep.subr.mxu0 0.0
  %955 = vmatpush1.msra.mxu0 0.0
  %956 = vmatprep.subr.mxu0 0.0
  %957 = vmatpush1.msra.mxu0 0.0
  %958 = vmatprep.subr.mxu0 0.0
  %959 = vmatpush1.msra.mxu0 0.0
  %960 = vmatprep.subr.mxu0 0.0
  %961 = vmatpush1.msra.mxu0 0.0
  %962 = vmatprep.subr.mxu0 0.0
  %963 = vmatpush1.msra.mxu0 0.0
  %964 = vmatprep.subr.mxu0 0.0
  %965 = vmatpush1.msra.mxu0 0.0
  %966 = vmatprep.subr.mxu0 0.0
  %967 = vmatpush1.msra.mxu0 0.0
  %968 = vmatprep.subr.mxu0 0.0
  %969 = vmatpush1.msra.mxu0 0.0
  %970 = vmatprep.subr.mxu0 0.0
  %971 = vmatpush1.msra.mxu0 0.0
  %972 = vmatprep.subr.mxu0 0.0
  %973 = vmatpush1.msra.mxu0 %v173
  %974 = vmatprep.subr.mxu0 0.0
  %975 = vmatpush1.msra.mxu0 %v172
  %976 = vmatprep.subr.mxu0 0.0
  %977 = vmatpush1.msra.mxu0 %v171
  %978 = vmatprep.subr.mxu0 0.0
  %979 = vmatpush1.msra.mxu0 %v170
  %980 = vmatprep.subr.mxu0 0.0
  %981 = vmatpush2.msra.mxu0 0.0
  %982 = vmatprep.subr.mxu0 0.0
  %983 = vmatpush2.msra.mxu0 0.0
  %984 = vmatprep.subr.mxu0 0.0
  %985 = vmatpush2.msra.mxu0 0.0
  %986 = vmatprep.subr.mxu0 0.0
  %987 = vmatpush2.msra.mxu0 0.0
  %988 = vmatprep.subr.mxu0 0.0
  %989 = vmatpush2.msra.mxu0 0.0
  %990 = vmatprep.subr.mxu0 0.0
  %991 = vmatpush2.msra.mxu0 0.0
  %992 = vmatprep.subr.mxu0 0.0
  %993 = vmatpush2.msra.mxu0 0.0
  %994 = vmatprep.subr.mxu0 0.0
  %995 = vmatpush2.msra.mxu0 0.0
  %996 = vmatprep.subr.mxu0 0.0
  %997 = vmatpush2.msra.mxu0 0.0
  %998 = vmatprep.subr.mxu0 0.0
  %999 = vmatpush2.msra.mxu0 0.0
  %1000 = vmatprep.subr.mxu0 0.0
  %1001 = vmatpush2.msra.mxu0 0.0
  %1002 = vmatprep.subr.mxu0 0.0
  %1003 = vmatpush2.msra.mxu0 0.0
  %1004 = vmatprep.subr.mxu0 0.0
  %1005 = vmatpush2.msra.mxu0 0.0
  %1006 = vmatprep.subr.mxu0 0.0
  %1007 = vmatpush2.msra.mxu0 0.0
  %1008 = vmatprep.subr.mxu0 0.0
  %1009 = vmatpush2.msra.mxu0 0.0
  %1010 = vmatprep.subr.mxu0 0.0
  %1011 = vmatpush2.msra.mxu0 0.0
  %1012 = vmatprep.mubr.f32.mxu0 0.0
  %1013 = vmatmul.mubr.f32.gmra.mxu0 %v800
  %v1014 = vpop.f32.mrf.mxu0
  %v1015 = vadd.f32 0.0, %v1014
  %v1016 = vpop.f32.mrf.mxu0
  %1017 = vdwg.mxu0
  %v1018 = vadd.f32 %v159, %v1015
  %v1019 = vxor.u32 %v1018, 2147483648
  %v1020 = vmul.f32 %v1019, 1.442695
  %v1021 = vpow.pop %v1020
  %v1022 = vadd.f32 %v1021, 1.0
  %v1023 = vrcp.pop %v1022
  %v1024 = vmul.f32 1.0, %v1023
  %v1025 = vtanh.pop %v1018
  %v1026 = vmul.f32 %v1024, %v788
  %1028 = vrot.lane.b32.xlu0 %v1025, 32
  %v1029 = vpop.permute.xlu0 %1028
  %v1031 = vmul.f32 %v1024, %v1029
  %1033 = vrot.lane.b32.xlu0 %v1031, 32
  %v1034 = vpop.permute.xlu0 %1033
  %v1036 = vadd.f32 %v1026, %v1034
  %v1037 = vtanh.pop %v1036
  %1039 = vrot.lane.b32.xlu0 %v1037, 32
  %v1040 = vpop.permute.xlu0 %1039
  %v1042 = vmul.f32 %v1024, %v1040
  %v1043 = vld [vmem:[%s874] sm:$0xff]
  %1045 = vrot.lane.b32.xlu0 %v1042, 64
  %v1046 = vpop.permute.xlu0 %1045
  %v1047 = vsel %vm197, %v1046, 0
  %1049 = vmatprep.subr.mxu0 0.0
  %1050 = vmatpush1.msra.mxu0 0.0
  %1051 = vmatprep.subr.mxu0 0.0
  %1052 = vmatpush1.msra.mxu0 0.0
  %1053 = vmatprep.subr.mxu0 0.0
  %1054 = vmatpush1.msra.mxu0 0.0
  %1055 = vmatprep.subr.mxu0 0.0
  %1056 = vmatpush1.msra.mxu0 0.0
  %1057 = vmatprep.subr.mxu0 0.0
  %1058 = vmatpush1.msra.mxu0 0.0
  %1059 = vmatprep.subr.mxu0 0.0
  %1060 = vmatpush1.msra.mxu0 0.0
  %1061 = vmatprep.subr.mxu0 0.0
  %1062 = vmatpush1.msra.mxu0 0.0
  %1063 = vmatprep.subr.mxu0 0.0
  %1064 = vmatpush1.msra.mxu0 0.0
  %1065 = vmatprep.subr.mxu0 0.0
  %1066 = vmatpush1.msra.mxu0 0.0
  %1067 = vmatprep.subr.mxu0 0.0
  %1068 = vmatpush1.msra.mxu0 0.0
  %1069 = vmatprep.subr.mxu0 0.0
  %1070 = vmatpush1.msra.mxu0 0.0
  %1071 = vmatprep.subr.mxu0 0.0
  %1072 = vmatpush1.msra.mxu0 0.0
  %1073 = vmatprep.subr.mxu0 0.0
  %1074 = vmatpush1.msra.mxu0 %v177
  %1075 = vmatprep.subr.mxu0 0.0
  %1076 = vmatpush1.msra.mxu0 %v176
  %1077 = vmatprep.subr.mxu0 0.0
  %1078 = vmatpush1.msra.mxu0 %v175
  %1079 = vmatprep.subr.mxu0 0.0
  %1080 = vmatpush1.msra.mxu0 %v174
  %1081 = vmatprep.subr.mxu0 0.0
  %1082 = vmatpush2.msra.mxu0 0.0
  %1083 = vmatprep.subr.mxu0 0.0
  %1084 = vmatpush2.msra.mxu0 0.0
  %1085 = vmatprep.subr.mxu0 0.0
  %1086 = vmatpush2.msra.mxu0 0.0
  %1087 = vmatprep.subr.mxu0 0.0
  %1088 = vmatpush2.msra.mxu0 0.0
  %1089 = vmatprep.subr.mxu0 0.0
  %1090 = vmatpush2.msra.mxu0 0.0
  %1091 = vmatprep.subr.mxu0 0.0
  %1092 = vmatpush2.msra.mxu0 0.0
  %1093 = vmatprep.subr.mxu0 0.0
  %1094 = vmatpush2.msra.mxu0 0.0
  %1095 = vmatprep.subr.mxu0 0.0
  %1096 = vmatpush2.msra.mxu0 0.0
  %1097 = vmatprep.subr.mxu0 0.0
  %1098 = vmatpush2.msra.mxu0 0.0
  %1099 = vmatprep.subr.mxu0 0.0
  %1100 = vmatpush2.msra.mxu0 0.0
  %1101 = vmatprep.subr.mxu0 0.0
  %1102 = vmatpush2.msra.mxu0 0.0
  %1103 = vmatprep.subr.mxu0 0.0
  %1104 = vmatpush2.msra.mxu0 0.0
  %1105 = vmatprep.subr.mxu0 0.0
  %1106 = vmatpush2.msra.mxu0 0.0
  %1107 = vmatprep.subr.mxu0 0.0
  %1108 = vmatpush2.msra.mxu0 0.0
  %1109 = vmatprep.subr.mxu0 0.0
  %1110 = vmatpush2.msra.mxu0 0.0
  %1111 = vmatprep.subr.mxu0 0.0
  %1112 = vmatpush2.msra.mxu0 0.0
  %1113 = vmatprep.mubr.f32.mxu0 0.0
  %1114 = vmatmul.mubr.f32.gmra.mxu0 %v1047
  %v1115 = vpop.f32.mrf.mxu0
  %v1116 = vadd.f32 0.0, %v1115
  %v1117 = vpop.f32.mrf.mxu0
  %1118 = vdwg.mxu0
  %v1119 = vadd.f32 %v1043, %v1116
  %1120 = vst [vmem:[%s874] sm:$0xff] %v1119
  %v1121 = vld [vmem:[%s795] sm:$0xff]
  %1122 = vmatprep.subr.mxu0 0.0
  %1123 = vmatpush1.msra.mxu0 0.0
  %1124 = vmatprep.subr.mxu0 0.0
  %1125 = vmatpush1.msra.mxu0 0.0
  %1126 = vmatprep.subr.mxu0 0.0
  %1127 = vmatpush1.msra.mxu0 0.0
  %1128 = vmatprep.subr.mxu0 0.0
  %1129 = vmatpush1.msra.mxu0 0.0
  %1130 = vmatprep.subr.mxu0 0.0
  %1131 = vmatpush1.msra.mxu0 0.0
  %1132 = vmatprep.subr.mxu0 0.0
  %1133 = vmatpush1.msra.mxu0 0.0
  %1134 = vmatprep.subr.mxu0 0.0
  %1135 = vmatpush1.msra.mxu0 0.0
  %1136 = vmatprep.subr.mxu0 0.0
  %1137 = vmatpush1.msra.mxu0 0.0
  %1138 = vmatprep.subr.mxu0 0.0
  %1139 = vmatpush1.msra.mxu0 0.0
  %1140 = vmatprep.subr.mxu0 0.0
  %1141 = vmatpush1.msra.mxu0 0.0
  %1142 = vmatprep.subr.mxu0 0.0
  %1143 = vmatpush1.msra.mxu0 0.0
  %1144 = vmatprep.subr.mxu0 0.0
  %1145 = vmatpush1.msra.mxu0 0.0
  %1146 = vmatprep.subr.mxu0 0.0
  %1147 = vmatpush1.msra.mxu0 %v181
  %1148 = vmatprep.subr.mxu0 0.0
  %1149 = vmatpush1.msra.mxu0 %v180
  %1150 = vmatprep.subr.mxu0 0.0
  %1151 = vmatpush1.msra.mxu0 %v179
  %1152 = vmatprep.subr.mxu0 0.0
  %1153 = vmatpush1.msra.mxu0 %v178
  %1154 = vmatprep.subr.mxu0 0.0
  %1155 = vmatpush2.msra.mxu0 0.0
  %1156 = vmatprep.subr.mxu0 0.0
  %1157 = vmatpush2.msra.mxu0 0.0
  %1158 = vmatprep.subr.mxu0 0.0
  %1159 = vmatpush2.msra.mxu0 0.0
  %1160 = vmatprep.subr.mxu0 0.0
  %1161 = vmatpush2.msra.mxu0 0.0
  %1162 = vmatprep.subr.mxu0 0.0
  %1163 = vmatpush2.msra.mxu0 0.0
  %1164 = vmatprep.subr.mxu0 0.0
  %1165 = vmatpush2.msra.mxu0 0.0
  %1166 = vmatprep.subr.mxu0 0.0
  %1167 = vmatpush2.msra.mxu0 0.0
  %1168 = vmatprep.subr.mxu0 0.0
  %1169 = vmatpush2.msra.mxu0 0.0
  %1170 = vmatprep.subr.mxu0 0.0
  %1171 = vmatpush2.msra.mxu0 0.0
  %1172 = vmatprep.subr.mxu0 0.0
  %1173 = vmatpush2.msra.mxu0 0.0
  %1174 = vmatprep.subr.mxu0 0.0
  %1175 = vmatpush2.msra.mxu0 0.0
  %1176 = vmatprep.subr.mxu0 0.0
  %1177 = vmatpush2.msra.mxu0 0.0
  %1178 = vmatprep.subr.mxu0 0.0
  %1179 = vmatpush2.msra.mxu0 0.0
  %1180 = vmatprep.subr.mxu0 0.0
  %1181 = vmatpush2.msra.mxu0 0.0
  %1182 = vmatprep.subr.mxu0 0.0
  %1183 = vmatpush2.msra.mxu0 0.0
  %1184 = vmatprep.subr.mxu0 0.0
  %1185 = vmatpush2.msra.mxu0 0.0
  %1186 = vmatprep.mubr.f32.mxu0 0.0
  %1187 = vmatmul.mubr.f32.gmra.mxu0 %v1047
  %v1188 = vpop.f32.mrf.mxu0
  %v1189 = vadd.f32 0.0, %v1188
  %v1190 = vpop.f32.mrf.mxu0
  %1191 = vdwg.mxu0
  %v1192 = vadd.f32 %v1121, %v1189
  %1193 = vst [vmem:[%s795] sm:$0xff] %v1192
  %1194 = vmatprep.subr.mxu0 0.0
  %1195 = vmatpush1.msra.mxu0 0.0
  %1196 = vmatprep.subr.mxu0 0.0
  %1197 = vmatpush1.msra.mxu0 0.0
  %1198 = vmatprep.subr.mxu0 0.0
  %1199 = vmatpush1.msra.mxu0 0.0
  %1200 = vmatprep.subr.mxu0 0.0
  %1201 = vmatpush1.msra.mxu0 0.0
  %1202 = vmatprep.subr.mxu0 0.0
  %1203 = vmatpush1.msra.mxu0 0.0
  %1204 = vmatprep.subr.mxu0 0.0
  %1205 = vmatpush1.msra.mxu0 0.0
  %1206 = vmatprep.subr.mxu0 0.0
  %1207 = vmatpush1.msra.mxu0 0.0
  %1208 = vmatprep.subr.mxu0 0.0
  %1209 = vmatpush1.msra.mxu0 0.0
  %1210 = vmatprep.subr.mxu0 0.0
  %1211 = vmatpush1.msra.mxu0 0.0
  %1212 = vmatprep.subr.mxu0 0.0
  %1213 = vmatpush1.msra.mxu0 0.0
  %1214 = vmatprep.subr.mxu0 0.0
  %1215 = vmatpush1.msra.mxu0 0.0
  %1216 = vmatprep.subr.mxu0 0.0
  %1217 = vmatpush1.msra.mxu0 0.0
  %1218 = vmatprep.subr.mxu0 0.0
  %1219 = vmatpush1.msra.mxu0 %v173
  %1220 = vmatprep.subr.mxu0 0.0
  %1221 = vmatpush1.msra.mxu0 %v172
  %1222 = vmatprep.subr.mxu0 0.0
  %1223 = vmatpush1.msra.mxu0 %v171
  %1224 = vmatprep.subr.mxu0 0.0
  %1225 = vmatpush1.msra.mxu0 %v170
  %1226 = vmatprep.subr.mxu0 0.0
  %1227 = vmatpush2.msra.mxu0 0.0
  %1228 = vmatprep.subr.mxu0 0.0
  %1229 = vmatpush2.msra.mxu0 0.0
  %1230 = vmatprep.subr.mxu0 0.0
  %1231 = vmatpush2.msra.mxu0 0.0
  %1232 = vmatprep.subr.mxu0 0.0
  %1233 = vmatpush2.msra.mxu0 0.0
  %1234 = vmatprep.subr.mxu0 0.0
  %1235 = vmatpush2.msra.mxu0 0.0
  %1236 = vmatprep.subr.mxu0 0.0
  %1237 = vmatpush2.msra.mxu0 0.0
  %1238 = vmatprep.subr.mxu0 0.0
  %1239 = vmatpush2.msra.mxu0 0.0
  %1240 = vmatprep.subr.mxu0 0.0
  %1241 = vmatpush2.msra.mxu0 0.0
  %1242 = vmatprep.subr.mxu0 0.0
  %1243 = vmatpush2.msra.mxu0 0.0
  %1244 = vmatprep.subr.mxu0 0.0
  %1245 = vmatpush2.msra.mxu0 0.0
  %1246 = vmatprep.subr.mxu0 0.0
  %1247 = vmatpush2.msra.mxu0 0.0
  %1248 = vmatprep.subr.mxu0 0.0
  %1249 = vmatpush2.msra.mxu0 0.0
  %1250 = vmatprep.subr.mxu0 0.0
  %1251 = vmatpush2.msra.mxu0 0.0
  %1252 = vmatprep.subr.mxu0 0.0
  %1253 = vmatpush2.msra.mxu0 0.0
  %1254 = vmatprep.subr.mxu0 0.0
  %1255 = vmatpush2.msra.mxu0 0.0
  %1256 = vmatprep.subr.mxu0 0.0
  %1257 = vmatpush2.msra.mxu0 0.0
  %1258 = vmatprep.mubr.f32.mxu0 0.0
  %1259 = vmatmul.mubr.f32.gmra.mxu0 %v1047
  %v1260 = vpop.f32.mrf.mxu0
  %v1261 = vadd.f32 0.0, %v1260
  %v1262 = vpop.f32.mrf.mxu0
  %1263 = vdwg.mxu0
  %v1264 = vadd.f32 %v164, %v1261
  %v1265 = vxor.u32 %v1264, 2147483648
  %v1266 = vmul.f32 %v1265, 1.442695
  %v1267 = vpow.pop %v1266
  %v1268 = vadd.f32 %v1267, 1.0
  %v1269 = vrcp.pop %v1268
  %v1270 = vmul.f32 1.0, %v1269
  %v1271 = vtanh.pop %v1264
  %v1272 = vmul.f32 %v1270, %v1036
  %1274 = vrot.lane.b32.xlu0 %v1271, 32
  %v1275 = vpop.permute.xlu0 %1274
  %v1277 = vmul.f32 %v1270, %v1275
  %1279 = vrot.lane.b32.xlu0 %v1277, 32
  %v1280 = vpop.permute.xlu0 %1279
  %v1282 = vadd.f32 %v1272, %v1280
  %v1283 = vtanh.pop %v1282
  %1285 = vrot.lane.b32.xlu0 %v1283, 32
  %v1286 = vpop.permute.xlu0 %1285
  %v1288 = vmul.f32 %v1270, %v1286
  %v1289 = vld [vmem:[%s626] sm:$0xff]
  %1291 = vrot.lane.b32.xlu0 %v1288, 64
  %v1292 = vpop.permute.xlu0 %1291
  %v1293 = vsel %vm197, %v1292, 0
  %1295 = vmatprep.subr.mxu0 0.0
  %1296 = vmatpush1.msra.mxu0 0.0
  %1297 = vmatprep.subr.mxu0 0.0
  %1298 = vmatpush1.msra.mxu0 0.0
  %1299 = vmatprep.subr.mxu0 0.0
  %1300 = vmatpush1.msra.mxu0 0.0
  %1301 = vmatprep.subr.mxu0 0.0
  %1302 = vmatpush1.msra.mxu0 0.0
  %1303 = vmatprep.subr.mxu0 0.0
  %1304 = vmatpush1.msra.mxu0 0.0
  %1305 = vmatprep.subr.mxu0 0.0
  %1306 = vmatpush1.msra.mxu0 0.0
  %1307 = vmatprep.subr.mxu0 0.0
  %1308 = vmatpush1.msra.mxu0 0.0
  %1309 = vmatprep.subr.mxu0 0.0
  %1310 = vmatpush1.msra.mxu0 0.0
  %1311 = vmatprep.subr.mxu0 0.0
  %1312 = vmatpush1.msra.mxu0 0.0
  %1313 = vmatprep.subr.mxu0 0.0
  %1314 = vmatpush1.msra.mxu0 0.0
  %1315 = vmatprep.subr.mxu0 0.0
  %1316 = vmatpush1.msra.mxu0 0.0
  %1317 = vmatprep.subr.mxu0 0.0
  %1318 = vmatpush1.msra.mxu0 0.0
  %1319 = vmatprep.subr.mxu0 0.0
  %1320 = vmatpush1.msra.mxu0 %v177
  %1321 = vmatprep.subr.mxu0 0.0
  %1322 = vmatpush1.msra.mxu0 %v176
  %1323 = vmatprep.subr.mxu0 0.0
  %1324 = vmatpush1.msra.mxu0 %v175
  %1325 = vmatprep.subr.mxu0 0.0
  %1326 = vmatpush1.msra.mxu0 %v174
  %1327 = vmatprep.subr.mxu0 0.0
  %1328 = vmatpush2.msra.mxu0 0.0
  %1329 = vmatprep.subr.mxu0 0.0
  %1330 = vmatpush2.msra.mxu0 0.0
  %1331 = vmatprep.subr.mxu0 0.0
  %1332 = vmatpush2.msra.mxu0 0.0
  %1333 = vmatprep.subr.mxu0 0.0
  %1334 = vmatpush2.msra.mxu0 0.0
  %1335 = vmatprep.subr.mxu0 0.0
  %1336 = vmatpush2.msra.mxu0 0.0
  %1337 = vmatprep.subr.mxu0 0.0
  %1338 = vmatpush2.msra.mxu0 0.0
  %1339 = vmatprep.subr.mxu0 0.0
  %1340 = vmatpush2.msra.mxu0 0.0
  %1341 = vmatprep.subr.mxu0 0.0
  %1342 = vmatpush2.msra.mxu0 0.0
  %1343 = vmatprep.subr.mxu0 0.0
  %1344 = vmatpush2.msra.mxu0 0.0
  %1345 = vmatprep.subr.mxu0 0.0
  %1346 = vmatpush2.msra.mxu0 0.0
  %1347 = vmatprep.subr.mxu0 0.0
  %1348 = vmatpush2.msra.mxu0 0.0
  %1349 = vmatprep.subr.mxu0 0.0
  %1350 = vmatpush2.msra.mxu0 0.0
  %1351 = vmatprep.subr.mxu0 0.0
  %1352 = vmatpush2.msra.mxu0 0.0
  %1353 = vmatprep.subr.mxu0 0.0
  %1354 = vmatpush2.msra.mxu0 0.0
  %1355 = vmatprep.subr.mxu0 0.0
  %1356 = vmatpush2.msra.mxu0 0.0
  %1357 = vmatprep.subr.mxu0 0.0
  %1358 = vmatpush2.msra.mxu0 0.0
  %1359 = vmatprep.mubr.f32.mxu0 0.0
  %1360 = vmatmul.mubr.f32.gmra.mxu0 %v1293
  %v1361 = vpop.f32.mrf.mxu0
  %v1362 = vadd.f32 0.0, %v1361
  %v1363 = vpop.f32.mrf.mxu0
  %1364 = vdwg.mxu0
  %v1365 = vadd.f32 %v1289, %v1362
  %1366 = vst [vmem:[%s626] sm:$0xff] %v1365
  %v1367 = vld [vmem:[%s547] sm:$0xff]
  %1368 = vmatprep.subr.mxu0 0.0
  %1369 = vmatpush1.msra.mxu0 0.0
  %1370 = vmatprep.subr.mxu0 0.0
  %1371 = vmatpush1.msra.mxu0 0.0
  %1372 = vmatprep.subr.mxu0 0.0
  %1373 = vmatpush1.msra.mxu0 0.0
  %1374 = vmatprep.subr.mxu0 0.0
  %1375 = vmatpush1.msra.mxu0 0.0
  %1376 = vmatprep.subr.mxu0 0.0
  %1377 = vmatpush1.msra.mxu0 0.0
  %1378 = vmatprep.subr.mxu0 0.0
  %1379 = vmatpush1.msra.mxu0 0.0
  %1380 = vmatprep.subr.mxu0 0.0
  %1381 = vmatpush1.msra.mxu0 0.0
  %1382 = vmatprep.subr.mxu0 0.0
  %1383 = vmatpush1.msra.mxu0 0.0
  %1384 = vmatprep.subr.mxu0 0.0
  %1385 = vmatpush1.msra.mxu0 0.0
  %1386 = vmatprep.subr.mxu0 0.0
  %1387 = vmatpush1.msra.mxu0 0.0
  %1388 = vmatprep.subr.mxu0 0.0
  %1389 = vmatpush1.msra.mxu0 0.0
  %1390 = vmatprep.subr.mxu0 0.0
  %1391 = vmatpush1.msra.mxu0 0.0
  %1392 = vmatprep.subr.mxu0 0.0
  %1393 = vmatpush1.msra.mxu0 %v181
  %1394 = vmatprep.subr.mxu0 0.0
  %1395 = vmatpush1.msra.mxu0 %v180
  %1396 = vmatprep.subr.mxu0 0.0
  %1397 = vmatpush1.msra.mxu0 %v179
  %1398 = vmatprep.subr.mxu0 0.0
  %1399 = vmatpush1.msra.mxu0 %v178
  %1400 = vmatprep.subr.mxu0 0.0
  %1401 = vmatpush2.msra.mxu0 0.0
  %1402 = vmatprep.subr.mxu0 0.0
  %1403 = vmatpush2.msra.mxu0 0.0
  %1404 = vmatprep.subr.mxu0 0.0
  %1405 = vmatpush2.msra.mxu0 0.0
  %1406 = vmatprep.subr.mxu0 0.0
  %1407 = vmatpush2.msra.mxu0 0.0
  %1408 = vmatprep.subr.mxu0 0.0
  %1409 = vmatpush2.msra.mxu0 0.0
  %1410 = vmatprep.subr.mxu0 0.0
  %1411 = vmatpush2.msra.mxu0 0.0
  %1412 = vmatprep.subr.mxu0 0.0
  %1413 = vmatpush2.msra.mxu0 0.0
  %1414 = vmatprep.subr.mxu0 0.0
  %1415 = vmatpush2.msra.mxu0 0.0
  %1416 = vmatprep.subr.mxu0 0.0
  %1417 = vmatpush2.msra.mxu0 0.0
  %1418 = vmatprep.subr.mxu0 0.0
  %1419 = vmatpush2.msra.mxu0 0.0
  %1420 = vmatprep.subr.mxu0 0.0
  %1421 = vmatpush2.msra.mxu0 0.0
  %1422 = vmatprep.subr.mxu0 0.0
  %1423 = vmatpush2.msra.mxu0 0.0
  %1424 = vmatprep.subr.mxu0 0.0
  %1425 = vmatpush2.msra.mxu0 0.0
  %1426 = vmatprep.subr.mxu0 0.0
  %1427 = vmatpush2.msra.mxu0 0.0
  %1428 = vmatprep.subr.mxu0 0.0
  %1429 = vmatpush2.msra.mxu0 0.0
  %1430 = vmatprep.subr.mxu0 0.0
  %1431 = vmatpush2.msra.mxu0 0.0
  %1432 = vmatprep.mubr.f32.mxu0 0.0
  %1433 = vmatmul.mubr.f32.gmra.mxu0 %v1293
  %v1434 = vpop.f32.mrf.mxu0
  %v1435 = vadd.f32 0.0, %v1434
  %v1436 = vpop.f32.mrf.mxu0
  %1437 = vdwg.mxu0
  %v1438 = vadd.f32 %v1367, %v1435
  %1439 = vst [vmem:[%s547] sm:$0xff] %v1438
  %1440 = vmatprep.subr.mxu0 0.0
  %1441 = vmatpush1.msra.mxu0 0.0
  %1442 = vmatprep.subr.mxu0 0.0
  %1443 = vmatpush1.msra.mxu0 0.0
  %1444 = vmatprep.subr.mxu0 0.0
  %1445 = vmatpush1.msra.mxu0 0.0
  %1446 = vmatprep.subr.mxu0 0.0
  %1447 = vmatpush1.msra.mxu0 0.0
  %1448 = vmatprep.subr.mxu0 0.0
  %1449 = vmatpush1.msra.mxu0 0.0
  %1450 = vmatprep.subr.mxu0 0.0
  %1451 = vmatpush1.msra.mxu0 0.0
  %1452 = vmatprep.subr.mxu0 0.0
  %1453 = vmatpush1.msra.mxu0 0.0
  %1454 = vmatprep.subr.mxu0 0.0
  %1455 = vmatpush1.msra.mxu0 0.0
  %1456 = vmatprep.subr.mxu0 0.0
  %1457 = vmatpush1.msra.mxu0 0.0
  %1458 = vmatprep.subr.mxu0 0.0
  %1459 = vmatpush1.msra.mxu0 0.0
  %1460 = vmatprep.subr.mxu0 0.0
  %1461 = vmatpush1.msra.mxu0 0.0
  %1462 = vmatprep.subr.mxu0 0.0
  %1463 = vmatpush1.msra.mxu0 0.0
  %1464 = vmatprep.subr.mxu0 0.0
  %1465 = vmatpush1.msra.mxu0 %v173
  %1466 = vmatprep.subr.mxu0 0.0
  %1467 = vmatpush1.msra.mxu0 %v172
  %1468 = vmatprep.subr.mxu0 0.0
  %1469 = vmatpush1.msra.mxu0 %v171
  %1470 = vmatprep.subr.mxu0 0.0
  %1471 = vmatpush1.msra.mxu0 %v170
  %1472 = vmatprep.subr.mxu0 0.0
  %1473 = vmatpush2.msra.mxu0 0.0
  %1474 = vmatprep.subr.mxu0 0.0
  %1475 = vmatpush2.msra.mxu0 0.0
  %1476 = vmatprep.subr.mxu0 0.0
  %1477 = vmatpush2.msra.mxu0 0.0
  %1478 = vmatprep.subr.mxu0 0.0
  %1479 = vmatpush2.msra.mxu0 0.0
  %1480 = vmatprep.subr.mxu0 0.0
  %1481 = vmatpush2.msra.mxu0 0.0
  %1482 = vmatprep.subr.mxu0 0.0
  %1483 = vmatpush2.msra.mxu0 0.0
  %1484 = vmatprep.subr.mxu0 0.0
  %1485 = vmatpush2.msra.mxu0 0.0
  %1486 = vmatprep.subr.mxu0 0.0
  %1487 = vmatpush2.msra.mxu0 0.0
  %1488 = vmatprep.subr.mxu0 0.0
  %1489 = vmatpush2.msra.mxu0 0.0
  %1490 = vmatprep.subr.mxu0 0.0
  %1491 = vmatpush2.msra.mxu0 0.0
  %1492 = vmatprep.subr.mxu0 0.0
  %1493 = vmatpush2.msra.mxu0 0.0
  %1494 = vmatprep.subr.mxu0 0.0
  %1495 = vmatpush2.msra.mxu0 0.0
  %1496 = vmatprep.subr.mxu0 0.0
  %1497 = vmatpush2.msra.mxu0 0.0
  %1498 = vmatprep.subr.mxu0 0.0
  %1499 = vmatpush2.msra.mxu0 0.0
  %1500 = vmatprep.subr.mxu0 0.0
  %1501 = vmatpush2.msra.mxu0 0.0
  %1502 = vmatprep.subr.mxu0 0.0
  %1503 = vmatpush2.msra.mxu0 0.0
  %1504 = vmatprep.mubr.f32.mxu0 0.0
  %1505 = vmatmul.mubr.f32.gmra.mxu0 %v1293
  %v1506 = vpop.f32.mrf.mxu0
  %v1507 = vadd.f32 0.0, %v1506
  %v1508 = vpop.f32.mrf.mxu0
  %1509 = vdwg.mxu0
  %v1510 = vadd.f32 %v167, %v1507
  %v1511 = vxor.u32 %v1510, 2147483648
  %v1512 = vmul.f32 %v1511, 1.442695
  %v1513 = vpow.pop %v1512
  %v1514 = vadd.f32 %v1513, 1.0
  %v1515 = vrcp.pop %v1514
  %v1516 = vmul.f32 1.0, %v1515
  %v1517 = vtanh.pop %v1510
  %v1518 = vmul.f32 %v1516, %v1282
  %1520 = vrot.lane.b32.xlu0 %v1517, 32
  %v1521 = vpop.permute.xlu0 %1520
  %v1523 = vmul.f32 %v1516, %v1521
  %1525 = vrot.lane.b32.xlu0 %v1523, 32
  %v1526 = vpop.permute.xlu0 %1525
  %v1528 = vadd.f32 %v1518, %v1526
  %v1529 = vtanh.pop %v1528
  %1531 = vrot.lane.b32.xlu0 %v1529, 32
  %v1532 = vpop.permute.xlu0 %1531
  %v1534 = vmul.f32 %v1516, %v1532
  %v1535 = vld [vmem:[%s378] sm:$0xff]
  %1537 = vrot.lane.b32.xlu0 %v1534, 64
  %v1538 = vpop.permute.xlu0 %1537
  %v1539 = vsel %vm197, %v1538, 0
  %1541 = vmatprep.subr.mxu0 0.0
  %1542 = vmatpush1.msra.mxu0 0.0
  %1543 = vmatprep.subr.mxu0 0.0
  %1544 = vmatpush1.msra.mxu0 0.0
  %1545 = vmatprep.subr.mxu0 0.0
  %1546 = vmatpush1.msra.mxu0 0.0
  %1547 = vmatprep.subr.mxu0 0.0
  %1548 = vmatpush1.msra.mxu0 0.0
  %1549 = vmatprep.subr.mxu0 0.0
  %1550 = vmatpush1.msra.mxu0 0.0
  %1551 = vmatprep.subr.mxu0 0.0
  %1552 = vmatpush1.msra.mxu0 0.0
  %1553 = vmatprep.subr.mxu0 0.0
  %1554 = vmatpush1.msra.mxu0 0.0
  %1555 = vmatprep.subr.mxu0 0.0
  %1556 = vmatpush1.msra.mxu0 0.0
  %1557 = vmatprep.subr.mxu0 0.0
  %1558 = vmatpush1.msra.mxu0 0.0
  %1559 = vmatprep.subr.mxu0 0.0
  %1560 = vmatpush1.msra.mxu0 0.0
  %1561 = vmatprep.subr.mxu0 0.0
  %1562 = vmatpush1.msra.mxu0 0.0
  %1563 = vmatprep.subr.mxu0 0.0
  %1564 = vmatpush1.msra.mxu0 0.0
  %1565 = vmatprep.subr.mxu0 0.0
  %1566 = vmatpush1.msra.mxu0 %v177
  %1567 = vmatprep.subr.mxu0 0.0
  %1568 = vmatpush1.msra.mxu0 %v176
  %1569 = vmatprep.subr.mxu0 0.0
  %1570 = vmatpush1.msra.mxu0 %v175
  %1571 = vmatprep.subr.mxu0 0.0
  %1572 = vmatpush1.msra.mxu0 %v174
  %1573 = vmatprep.subr.mxu0 0.0
  %1574 = vmatpush2.msra.mxu0 0.0
  %1575 = vmatprep.subr.mxu0 0.0
  %1576 = vmatpush2.msra.mxu0 0.0
  %1577 = vmatprep.subr.mxu0 0.0
  %1578 = vmatpush2.msra.mxu0 0.0
  %1579 = vmatprep.subr.mxu0 0.0
  %1580 = vmatpush2.msra.mxu0 0.0
  %1581 = vmatprep.subr.mxu0 0.0
  %1582 = vmatpush2.msra.mxu0 0.0
  %1583 = vmatprep.subr.mxu0 0.0
  %1584 = vmatpush2.msra.mxu0 0.0
  %1585 = vmatprep.subr.mxu0 0.0
  %1586 = vmatpush2.msra.mxu0 0.0
  %1587 = vmatprep.subr.mxu0 0.0
  %1588 = vmatpush2.msra.mxu0 0.0
  %1589 = vmatprep.subr.mxu0 0.0
  %1590 = vmatpush2.msra.mxu0 0.0
  %1591 = vmatprep.subr.mxu0 0.0
  %1592 = vmatpush2.msra.mxu0 0.0
  %1593 = vmatprep.subr.mxu0 0.0
  %1594 = vmatpush2.msra.mxu0 0.0
  %1595 = vmatprep.subr.mxu0 0.0
  %1596 = vmatpush2.msra.mxu0 0.0
  %1597 = vmatprep.subr.mxu0 0.0
  %1598 = vmatpush2.msra.mxu0 0.0
  %1599 = vmatprep.subr.mxu0 0.0
  %1600 = vmatpush2.msra.mxu0 0.0
  %1601 = vmatprep.subr.mxu0 0.0
  %1602 = vmatpush2.msra.mxu0 0.0
  %1603 = vmatprep.subr.mxu0 0.0
  %1604 = vmatpush2.msra.mxu0 0.0
  %1605 = vmatprep.mubr.f32.mxu0 0.0
  %1606 = vmatmul.mubr.f32.gmra.mxu0 %v1539
  %v1607 = vpop.f32.mrf.mxu0
  %v1608 = vadd.f32 0.0, %v1607
  %v1609 = vpop.f32.mrf.mxu0
  %1610 = vdwg.mxu0
  %v1611 = vadd.f32 %v1535, %v1608
  %1612 = vst [vmem:[%s378] sm:$0xff] %v1611
  %v1613 = vld [vmem:[%s9] sm:$0xff]
  %1614 = vmatprep.subr.mxu0 0.0
  %1615 = vmatpush1.msra.mxu0 0.0
  %1616 = vmatprep.subr.mxu0 0.0
  %1617 = vmatpush1.msra.mxu0 0.0
  %1618 = vmatprep.subr.mxu0 0.0
  %1619 = vmatpush1.msra.mxu0 0.0
  %1620 = vmatprep.subr.mxu0 0.0
  %1621 = vmatpush1.msra.mxu0 0.0
  %1622 = vmatprep.subr.mxu0 0.0
  %1623 = vmatpush1.msra.mxu0 0.0
  %1624 = vmatprep.subr.mxu0 0.0
  %1625 = vmatpush1.msra.mxu0 0.0
  %1626 = vmatprep.subr.mxu0 0.0
  %1627 = vmatpush1.msra.mxu0 0.0
  %1628 = vmatprep.subr.mxu0 0.0
  %1629 = vmatpush1.msra.mxu0 0.0
  %1630 = vmatprep.subr.mxu0 0.0
  %1631 = vmatpush1.msra.mxu0 0.0
  %1632 = vmatprep.subr.mxu0 0.0
  %1633 = vmatpush1.msra.mxu0 0.0
  %1634 = vmatprep.subr.mxu0 0.0
  %1635 = vmatpush1.msra.mxu0 0.0
  %1636 = vmatprep.subr.mxu0 0.0
  %1637 = vmatpush1.msra.mxu0 0.0
  %1638 = vmatprep.subr.mxu0 0.0
  %1639 = vmatpush1.msra.mxu0 %v181
  %1640 = vmatprep.subr.mxu0 0.0
  %1641 = vmatpush1.msra.mxu0 %v180
  %1642 = vmatprep.subr.mxu0 0.0
  %1643 = vmatpush1.msra.mxu0 %v179
  %1644 = vmatprep.subr.mxu0 0.0
  %1645 = vmatpush1.msra.mxu0 %v178
  %1646 = vmatprep.subr.mxu0 0.0
  %1647 = vmatpush2.msra.mxu0 0.0
  %1648 = vmatprep.subr.mxu0 0.0
  %1649 = vmatpush2.msra.mxu0 0.0
  %1650 = vmatprep.subr.mxu0 0.0
  %1651 = vmatpush2.msra.mxu0 0.0
  %1652 = vmatprep.subr.mxu0 0.0
  %1653 = vmatpush2.msra.mxu0 0.0
  %1654 = vmatprep.subr.mxu0 0.0
  %1655 = vmatpush2.msra.mxu0 0.0
  %1656 = vmatprep.subr.mxu0 0.0
  %1657 = vmatpush2.msra.mxu0 0.0
  %1658 = vmatprep.subr.mxu0 0.0
  %1659 = vmatpush2.msra.mxu0 0.0
  %1660 = vmatprep.subr.mxu0 0.0
  %1661 = vmatpush2.msra.mxu0 0.0
  %1662 = vmatprep.subr.mxu0 0.0
  %1663 = vmatpush2.msra.mxu0 0.0
  %1664 = vmatprep.subr.mxu0 0.0
  %1665 = vmatpush2.msra.mxu0 0.0
  %1666 = vmatprep.subr.mxu0 0.0
  %1667 = vmatpush2.msra.mxu0 0.0
  %1668 = vmatprep.subr.mxu0 0.0
  %1669 = vmatpush2.msra.mxu0 0.0
  %1670 = vmatprep.subr.mxu0 0.0
  %1671 = vmatpush2.msra.mxu0 0.0
  %1672 = vmatprep.subr.mxu0 0.0
  %1673 = vmatpush2.msra.mxu0 0.0
  %1674 = vmatprep.subr.mxu0 0.0
  %1675 = vmatpush2.msra.mxu0 0.0
  %1676 = vmatprep.subr.mxu0 0.0
  %1677 = vmatpush2.msra.mxu0 0.0
  %1678 = vmatprep.mubr.f32.mxu0 0.0
  %1679 = vmatmul.mubr.f32.gmra.mxu0 %v1539
  %v1680 = vpop.f32.mrf.mxu0
  %v1681 = vadd.f32 0.0, %v1680
  %v1682 = vpop.f32.mrf.mxu0
  %1683 = vdwg.mxu0
  %v1684 = vadd.f32 %v1613, %v1681
  %1685 = vst [vmem:[%s9] sm:$0xff] %v1684
  // Predicated region
  $region38: #{bilstm_crf_forward.3} parent=0 // pred_check
    _
  $region39: #{bilstm_crf_forward.3} parent=0 // pred_check_branch
    %1687 = sbr.rel (0) target = $region41
  $region40: #{bilstm_crf_forward.3} parent=0 // pred_region
    _
  $region41: #{bilstm_crf_forward.3} parent=0 // pred_fallthru
    _
  // Predicated region
  $region42: #{bilstm_crf_forward.3} parent=0 // pred_check
    _
  $region43: #{bilstm_crf_forward.3} parent=0 // pred_check_branch
    %1689 = sbr.rel (0) target = $region45
  $region44: #{bilstm_crf_forward.3} parent=0 // pred_region
    _
  $region45: #{bilstm_crf_forward.3} parent=0 // pred_fallthru
    _

</llo_original>
